<compile_context>
chip_gen: v6e
topology: v6e:2x2x1
jax: 0.10.0
libtpu: 0.0.40
codegen_flags: <defaults>
</compile_context>

<pallas_src>
import functools

import jax
import jax.numpy as jnp
from jax import lax
from jax.experimental import pallas as pl
from jax.experimental.pallas import tpu as pltpu

LRELU_SLOPE = 0.2
BN_EPS = 1e-5
VMEM_LIMIT = 32 * 1024 * 1024   # explicit scoped-VMEM budget (fits v5e/v6e/v7x)
MAX_TILE_M = 512                # 512 keeps per-step VMEM small on v7x (64 MiB)
MAX_TILE_K = 2048               # tile K only when it is large (deep layers)


def _round_up(x, m):
    return ((x + m - 1) // m) * m


# ----------------------------- Pallas kernels ------------------------------ #
def _conv_kernel(p_ref, w_ref, b_ref, o_ref, *rest, act, with_stats):
    """Tiled  out = act(patches @ W + b); optionally emits per-tile BN stats.

    grid = (M_tiles, K_tiles);  K is the reduction ("arbitrary") axis.
    """
    if with_stats:
        stats_ref, acc_ref = rest
    else:
        (acc_ref,) = rest
        stats_ref = None

    k = pl.program_id(1)
    nk = pl.num_programs(1)

    @pl.when(k == 0)
    def _init():
        acc_ref[...] = jnp.zeros_like(acc_ref)

    # bf16 x bf16 -> f32 accumulation on the MXU.
    acc_ref[...] += jnp.dot(p_ref[...], w_ref[...],
                            preferred_element_type=jnp.float32)

    @pl.when(k == nk - 1)
    def _finalize():
        y = acc_ref[...] + b_ref[...]                       # bias (1, Cp)
        if with_stats:
            # Per-M-tile channel sum / sum-of-squares (reduced outside the
            # kernel to full-batch statistics; per-tile stats are NOT used
            # as BN statistics directly).
            ssum = jnp.sum(y, axis=0, keepdims=True)        # (1, Cp)
            ssq = jnp.sum(y * y, axis=0, keepdims=True)     # (1, Cp)
            stats_ref[...] = jnp.concatenate([ssum, ssq], axis=0)[None]
        if act == "leaky":
            y = jnp.where(y > 0, y, LRELU_SLOPE * y)
        elif act == "sigmoid":
            # exp + approximate reciprocal both run on the EUP slot.
            y = pl.reciprocal(1.0 + jnp.exp(-y), approx=True)
        o_ref[...] = y.astype(o_ref.dtype)


def _bn_lrelu_kernel(y_ref, scale_ref, shift_ref, o_ref):
    """Elementwise BN-apply + LeakyReLU (second pass of two-pass BN)."""
    x = y_ref[...] * scale_ref[...] + shift_ref[...]
    o_ref[...] = jnp.where(x > 0, x, LRELU_SLOPE * x)


# ------------------------------ pallas_call wrappers ----------------------- #
def _conv_matmul(patches, wmat, bias, *, act, with_stats, tile_m, tile_k):
    m_pad, k_pad = patches.shape
    cp = wmat.shape[1]
    grid_m, grid_k = m_pad // tile_m, k_pad // tile_k

    out_shape = [jax.ShapeDtypeStruct((m_pad, cp), jnp.float32)]
    out_specs = [pl.BlockSpec((tile_m, cp), lambda i, k: (i, 0))]
    if with_stats:
        out_shape.append(jax.ShapeDtypeStruct((grid_m, 2, cp), jnp.float32))
        out_specs.append(pl.BlockSpec((1, 2, cp), lambda i, k: (i, 0, 0)))

    kern = functools.partial(_conv_kernel, act=act, with_stats=with_stats)
    return pl.pallas_call(
        kern,
        out_shape=tuple(out_shape),
        grid_spec=pltpu.PrefetchScalarGridSpec(
            num_scalar_prefetch=0,
            grid=(grid_m, grid_k),
            in_specs=[
                pl.BlockSpec((tile_m, tile_k), lambda i, k: (i, k)),
                pl.BlockSpec((tile_k, cp), lambda i, k: (k, 0)),
                pl.BlockSpec((1, cp), lambda i, k: (0, 0)),
            ],
            out_specs=out_specs,
            scratch_shapes=[pltpu.VMEM((tile_m, cp), jnp.float32)],
        ),
        compiler_params=pltpu.CompilerParams(
            dimension_semantics=("parallel", "arbitrary"),
            vmem_limit_bytes=VMEM_LIMIT),
    )(patches, wmat, bias)


def _bn_lrelu(y, scale, shift, *, tile_m):
    m_pad, cp = y.shape
    return pl.pallas_call(
        _bn_lrelu_kernel,
        out_shape=jax.ShapeDtypeStruct((m_pad, cp), jnp.float32),
        grid_spec=pltpu.PrefetchScalarGridSpec(
            num_scalar_prefetch=0,
            grid=(m_pad // tile_m,),
            in_specs=[
                pl.BlockSpec((tile_m, cp), lambda i: (i, 0)),
                pl.BlockSpec((1, cp), lambda i: (0, 0)),
                pl.BlockSpec((1, cp), lambda i: (0, 0)),
            ],
            out_specs=pl.BlockSpec((tile_m, cp), lambda i: (i, 0)),
        ),
        compiler_params=pltpu.CompilerParams(
            dimension_semantics=("parallel",),
            vmem_limit_bytes=VMEM_LIMIT),
    )(y, scale, shift)


# ------------------------------ JAX glue ----------------------------------- #
def _im2col(x, kh, kw, stride, pad):
    """x: (N,H,W,C) -> patches (N*Ho*Wo, kh*kw*C) with (kh,kw,c) ordering."""
    n, h, w, c = x.shape
    xp = jnp.pad(x, ((0, 0), (pad, pad), (pad, pad), (0, 0)))
    ho = (h + 2 * pad - kh) // stride + 1
    wo = (w + 2 * pad - kw) // stride + 1
    cols = [xp[:, i:i + stride * ho:stride, j:j + stride * wo:stride, :]
            for i in range(kh) for j in range(kw)]
    patches = jnp.concatenate(cols, axis=-1)                # (N,Ho,Wo,kh*kw*C)
    return patches.reshape(n * ho * wo, kh * kw * c), n, ho, wo


def conv_layer(x, w_oihw, b, gamma=None, beta=None, *, stride, pad,
               use_bn, act):
    """Conv2d (+ optional train-mode BN) (+ activation), NHWC in / NHWC out."""
    cout, cin, kh, kw = w_oihw.shape
    # bf16 inputs for the MXU; accumulation stays f32 in the kernel.
    patches, n, ho, wo = _im2col(x.astype(jnp.bfloat16), kh, kw, stride, pad)
    m, k = patches.shape
    # torch OIHW -> (KH,KW,Cin,Cout) -> (KH*KW*Cin, Cout); matches im2col order.
    wmat = jnp.transpose(w_oihw, (2, 3, 1, 0)).reshape(kh * kw * cin, cout)
    wmat = wmat.astype(jnp.bfloat16)

    # Lane-dense / tileable padding.
    cout_pad = _round_up(cout, 128)
    tile_m = min(MAX_TILE_M, _round_up(m, 8))
    m_pad = _round_up(m, tile_m)
    tile_k = MAX_TILE_K if k > MAX_TILE_K else _round_up(k, 128)
    k_pad = _round_up(k, tile_k)

    patches = jnp.pad(patches, ((0, m_pad - m), (0, k_pad - k)))
    wmat = jnp.pad(wmat, ((0, k_pad - k), (0, cout_pad - cout)))
    b_pad = jnp.pad(b.astype(jnp.float32), (0, cout_pad - cout))

    outs = _conv_matmul(patches, wmat, b_pad.reshape(1, cout_pad),
                        act=("none" if use_bn else act),
                        with_stats=use_bn, tile_m=tile_m, tile_k=tile_k)
    y = outs[0]                                            # (m_pad, cout_pad)

    if use_bn:
        assert act == "leaky"
        stats = outs[1]                                    # (grid_m, 2, cout_pad)
        # Padded patch rows are exactly zero, so they contribute exactly the
        # bias to the sums; correct analytically before forming batch stats.
        n_pad_rows = m_pad - m
        ssum = jnp.sum(stats[:, 0, :], axis=0) - n_pad_rows * b_pad
        ssq = jnp.sum(stats[:, 1, :], axis=0) - n_pad_rows * b_pad * b_pad
        mean = ssum / m
        var = ssq / m - mean * mean                        # biased (training) var
        gamma_pad = jnp.pad(gamma.astype(jnp.float32), (0, cout_pad - cout),
                            constant_values=1.0)
        beta_pad = jnp.pad(beta.astype(jnp.float32), (0, cout_pad - cout))
        scale = gamma_pad * lax.rsqrt(var + BN_EPS)
        shift = beta_pad - mean * scale
        y = _bn_lrelu(y, scale.reshape(1, cout_pad), shift.reshape(1, cout_pad),
                      tile_m=tile_m)

    out = y[:m, :cout]
    return out.reshape(n, ho, wo, cout)


def _fused_conv1(x, y, p1x, p1y):
    """conv1_x and conv1_y fused into one call via a block-diagonal weight."""
    w1x, b1x, _, _ = p1x
    w1y, b1y, _, _ = p1y
    half, nch = w1x.shape[0], w1x.shape[1]
    ncls = w1y.shape[1]
    w = jnp.zeros((2 * half, nch + ncls, 4, 4), jnp.float32)
    w = w.at[:half, :nch].set(w1x)
    w = w.at[half:, nch:].set(w1y)
    b = jnp.concatenate([b1x, b1y])
    xy = jnp.concatenate([x, y], axis=-1)                  # cat on channels
    return conv_layer(xy, w, b, stride=2, pad=1, use_bn=False, act="leaky")


# --------------------------- Discriminator --------------------------------- #
def init_params(key, ndf, nch, ncls):
    def conv_p(k, cout, cin, ksz):
        w = jax.random.normal(k, (cout, cin, ksz, ksz), jnp.float32) * 0.02
        b = jnp.zeros((cout,), jnp.float32)                # normal_init zeroes bias
        gamma = jnp.ones((cout,), jnp.float32)             # BN default affine
        beta = jnp.zeros((cout,), jnp.float32)
        return (w, b, gamma, beta)

    ks = jax.random.split(key, 6)
    return {
        "conv1_x": conv_p(ks[0], ndf // 2, nch, 4),
        "conv1_y": conv_p(ks[1], ndf // 2, ncls, 4),
        "conv2":   conv_p(ks[2], ndf * 2, ndf, 4),
        "conv3":   conv_p(ks[3], ndf * 4, ndf * 2, 4),
        "conv4":   conv_p(ks[4], ndf * 8, ndf * 4, 4),
        "conv5":   conv_p(ks[5], 1, ndf * 8, 4),
    }


def discriminator_forward(params, x_nchw, y_nchw):
    x = jnp.transpose(x_nchw, (0, 2, 3, 1)).astype(jnp.float32)   # NCHW -> NHWC
    y = jnp.transpose(y_nchw, (0, 2, 3, 1)).astype(jnp.float32)

    h = _fused_conv1(x, y, params["conv1_x"], params["conv1_y"])
    h = conv_layer(h, *params["conv2"], stride=2, pad=1, use_bn=True, act="leaky")
    h = conv_layer(h, *params["conv3"], stride=2, pad=1, use_bn=True, act="leaky")
    h = conv_layer(h, *params["conv4"], stride=2, pad=1, use_bn=True, act="leaky")
    out = conv_layer(h, *params["conv5"], stride=1, pad=0, use_bn=False,
                     act="sigmoid")
    return jnp.squeeze(out)                                # (N,1,1,1) -> (N,)


# ---------------------------- pure-JAX reference --------------------------- #
def _ref_conv(x, w_oihw, b, gamma=None, beta=None, *, stride, pad, use_bn, act):
    y = lax.conv_general_dilated(
        x.astype(jnp.bfloat16),
        jnp.transpose(w_oihw, (2, 3, 1, 0)).astype(jnp.bfloat16),
        window_strides=(stride, stride),
        padding=[(pad, pad), (pad, pad)],
        dimension_numbers=("NHWC", "HWIO", "NHWC"),
        preferred_element_type=jnp.float32)
    y = y + b
    if use_bn:
        mean = jnp.mean(y, axis=(0, 1, 2))
        var = jnp.mean(y * y, axis=(0, 1, 2)) - mean * mean
        scale = gamma * lax.rsqrt(var + BN_EPS)
        y = y * scale + (beta - mean * scale)
    if act == "leaky":
        y = jnp.where(y > 0, y, LRELU_SLOPE * y)
    elif act == "sigmoid":
        y = jax.nn.sigmoid(y)
    return y


def reference_forward(params, x_nchw, y_nchw):
    x = jnp.transpose(x_nchw, (0, 2, 3, 1)).astype(jnp.float32)
    y = jnp.transpose(y_nchw, (0, 2, 3, 1)).astype(jnp.float32)
    xo = _ref_conv(x, *params["conv1_x"], stride=2, pad=1, use_bn=False, act="leaky")
    yo = _ref_conv(y, *params["conv1_y"], stride=2, pad=1, use_bn=False, act="leaky")
    h = jnp.concatenate([xo, yo], axis=-1)
    h = _ref_conv(h, *params["conv2"], stride=2, pad=1, use_bn=True, act="leaky")
    h = _ref_conv(h, *params["conv3"], stride=2, pad=1, use_bn=True, act="leaky")
    h = _ref_conv(h, *params["conv4"], stride=2, pad=1, use_bn=True, act="leaky")
    out = _ref_conv(h, *params["conv5"], stride=1, pad=0, use_bn=False, act="sigmoid")
    return jnp.squeeze(out)


# --------------------------------- main ------------------------------------ #
if __name__ == "__main__":
    # 64x64 inputs so conv5 (k=4, s=1, p=0) lands on a 1x1 map, exactly as the
    # celebA cDCGAN discriminator expects; small batch / ndf for the demo.
    N, NCH, NCLS, NDF, HW = 2, 3, 4, 8, 64

    key = jax.random.PRNGKey(0)
    kx, ky, kp = jax.random.split(key, 3)
    x = jax.random.normal(kx, (N, NCH, HW, HW), jnp.float32)   # images (NCHW)
    y = jax.random.normal(ky, (N, NCLS, HW, HW), jnp.float32)  # label maps (NCHW)
    params = init_params(kp, NDF, NCH, NCLS)

    fwd = jax.jit(discriminator_forward)
    out = jax.block_until_ready(fwd(params, x, y))
    ref = jax.block_until_ready(reference_forward(params, x, y))

    assert out.shape == (N,), out.shape
    assert bool(jnp.all(jnp.isfinite(out)))
    assert bool(jnp.allclose(out, ref, rtol=2e-2, atol=2e-2)), (out, ref)
    print("KERNEL_OK")
</pallas_src>

<mosaic_0001>
module attributes {stable_mosaic.version = 11 : i64} {
  func.func @_conv_kernel(%arg0: i32, %arg1: i32, %arg2: memref<512x128xbf16, #tpu.memory_space<vmem>>, %arg3: memref<128x128xbf16, #tpu.memory_space<vmem>>, %arg4: memref<1x128xf32, #tpu.memory_space<vmem>>, %arg5: memref<512x128xf32, #tpu.memory_space<vmem>>, %arg6: memref<512x128xf32, #tpu.memory_space<vmem>>) attributes {dimension_semantics = [#tpu.dimension_semantics<parallel>, #tpu.dimension_semantics<arbitrary>], iteration_bounds = array<i64: 4, 1>, scalar_prefetch = 0 : i64, scratch_operands = 1 : i64, tpu.core_type = #tpu.core_type<tc>, window_params = [{transform_indices = @transform_0, window_bounds = array<i64: 512, 128>}, {transform_indices = @transform_1, window_bounds = array<i64: 128, 128>}, {pipeline_mode = #tpu.pipeline_mode<synchronous>, transform_indices = @transform_2, window_bounds = array<i64: 1, 128>}, {transform_indices = @transform_3, window_bounds = array<i64: 512, 128>}]} {
    %c0_i32 = arith.constant 0 : i32
    %0 = arith.cmpi eq, %arg1, %c0_i32 : i32
    %1 = arith.extui %0 : i1 to i32
    %c0_i32_0 = arith.constant 0 : i32
    %2 = arith.cmpi ne, %1, %c0_i32_0 : i32
    scf.if %2 {
      %cst_10 = arith.constant 0.000000e+00 : f32
      %12 = vector.broadcast %cst_10 : f32 to vector<512x128xf32>
      %c0_11 = arith.constant 0 : index
      %c0_12 = arith.constant 0 : index
      %13 = vector.load %arg6[%c0_11, %c0_12] : memref<512x128xf32, #tpu.memory_space<vmem>>, vector<512x128xf32>
      tpu.vector_store %arg6[%c0_11, %c0_12], %12 {strides = array<i32>} : memref<512x128xf32, #tpu.memory_space<vmem>>, vector<512x128xf32>,
    } else {
    }
    %c0 = arith.constant 0 : index
    %c0_1 = arith.constant 0 : index
    %3 = vector.load %arg6[%c0, %c0_1] : memref<512x128xf32, #tpu.memory_space<vmem>>, vector<512x128xf32>
    %c0_2 = arith.constant 0 : index
    %c0_3 = arith.constant 0 : index
    %4 = vector.load %arg2[%c0_2, %c0_3] : memref<512x128xbf16, #tpu.memory_space<vmem>>, vector<512x128xbf16>
    %c0_4 = arith.constant 0 : index
    %c0_5 = arith.constant 0 : index
    %5 = vector.load %arg3[%c0_4, %c0_5] : memref<128x128xbf16, #tpu.memory_space<vmem>>, vector<128x128xbf16>
    %cst = arith.constant dense<0.000000e+00> : vector<512x128xf32>
    %6 = tpu.matmul %4, %5, %cst {dimension_numbers = #tpu.dot_dimension_numbers<[1], [0], [0], [1], [0, 0, 1, 1], [], []>} : vector<512x128xbf16>, vector<128x128xbf16>, vector<512x128xf32> -> vector<512x128xf32>
    %7 = arith.addf %3, %6 : vector<512x128xf32>
    %c0_6 = arith.constant 0 : index
    %c0_7 = arith.constant 0 : index
    %8 = vector.load %arg6[%c0_6, %c0_7] : memref<512x128xf32, #tpu.memory_space<vmem>>, vector<512x128xf32>
    tpu.vector_store %arg6[%c0_6, %c0_7], %7 {strides = array<i32>} : memref<512x128xf32, #tpu.memory_space<vmem>>, vector<512x128xf32>,
    %c0_i32_8 = arith.constant 0 : i32
    %9 = arith.cmpi eq, %arg1, %c0_i32_8 : i32
    %10 = arith.extui %9 : i1 to i32
    %c0_i32_9 = arith.constant 0 : i32
    %11 = arith.cmpi ne, %10, %c0_i32_9 : i32
    scf.if %11 {
      %c0_10 = arith.constant 0 : index
      %c0_11 = arith.constant 0 : index
      %12 = vector.load %arg6[%c0_10, %c0_11] : memref<512x128xf32, #tpu.memory_space<vmem>>, vector<512x128xf32>
      %c0_12 = arith.constant 0 : index
      %c0_13 = arith.constant 0 : index
      %13 = vector.load %arg4[%c0_12, %c0_13] : memref<1x128xf32, #tpu.memory_space<vmem>>, vector<1x128xf32>
      %14 = vector.broadcast %13 : vector<1x128xf32> to vector<512x128xf32>
      %15 = arith.addf %12, %14 : vector<512x128xf32>
      %cst_14 = arith.constant 0.000000e+00 : f32
      %16 = vector.broadcast %cst_14 : f32 to vector<512x128xf32>
      %17 = arith.cmpf ogt, %15, %16 : vector<512x128xf32>
      %cst_15 = arith.constant 2.000000e-01 : f32
      %18 = vector.broadcast %cst_15 : f32 to vector<512x128xf32>
      %19 = arith.mulf %18, %15 : vector<512x128xf32>
      %20 = arith.select %17, %15, %19 : vector<512x128xi1>, vector<512x128xf32>
      %c0_16 = arith.constant 0 : index
      %c0_17 = arith.constant 0 : index
      %21 = vector.load %arg5[%c0_16, %c0_17] : memref<512x128xf32, #tpu.memory_space<vmem>>, vector<512x128xf32>
      tpu.vector_store %arg5[%c0_16, %c0_17], %20 {strides = array<i32>} : memref<512x128xf32, #tpu.memory_space<vmem>>, vector<512x128xf32>,
    } else {
    }
    return
  }
  func.func @transform_0(%arg0: i32, %arg1: i32) -> (i32, i32) {
    %c0_i32 = arith.constant 0 : i32
    return %arg0, %arg1 : i32, i32
  }
  func.func @transform_1(%arg0: i32, %arg1: i32) -> (i32, i32) {
    %c0_i32 = arith.constant 0 : i32
    %c0_i32_0 = arith.constant 0 : i32
    return %arg1, %c0_i32 : i32, i32
  }
  func.func @transform_2(%arg0: i32, %arg1: i32) -> (i32, i32) {
    %c0_i32 = arith.constant 0 : i32
    %c0_i32_0 = arith.constant 0 : i32
    %c0_i32_1 = arith.constant 0 : i32
    return %c0_i32, %c0_i32_0 : i32, i32
  }
  func.func @transform_3(%arg0: i32, %arg1: i32) -> (i32, i32) {
    %c0_i32 = arith.constant 0 : i32
    %c0_i32_0 = arith.constant 0 : i32
    return %arg0, %c0_i32 : i32, i32
  }
}

module attributes {stable_mosaic.version = 11 : i64} {
  func.func @_conv_kernel(%arg0: i32, %arg1: i32, %arg2: memref<512x128xbf16, #tpu.memory_space<vmem>>, %arg3: memref<128x128xbf16, #tpu.memory_space<vmem>>, %arg4: memref<1x128xf32, #tpu.memory_space<vmem>>, %arg5: memref<512x128xf32, #tpu.memory_space<vmem>>, %arg6: memref<1x2x128xf32, #tpu.memory_space<vmem>>, %arg7: memref<512x128xf32, #tpu.memory_space<vmem>>) attributes {dimension_semantics = [#tpu.dimension_semantics<parallel>, #tpu.dimension_semantics<arbitrary>], iteration_bounds = array<i64: 1, 1>, scalar_prefetch = 0 : i64, scratch_operands = 1 : i64, tpu.core_type = #tpu.core_type<tc>, window_params = [{transform_indices = @transform_0, window_bounds = array<i64: 512, 128>}, {transform_indices = @transform_1, window_bounds = array<i64: 128, 128>}, {pipeline_mode = #tpu.pipeline_mode<synchronous>, transform_indices = @transform_2, window_bounds = array<i64: 1, 128>}, {transform_indices = @transform_3, window_bounds = array<i64: 512, 128>}, {transform_indices = @transform_4, window_bounds = array<i64: 1, 2, 128>}]} {
    %c0_i32 = arith.constant 0 : i32
    %0 = arith.cmpi eq, %arg1, %c0_i32 : i32
    %1 = arith.extui %0 : i1 to i32
    %c0_i32_0 = arith.constant 0 : i32
    %2 = arith.cmpi ne, %1, %c0_i32_0 : i32
    scf.if %2 {
      %cst_10 = arith.constant 0.000000e+00 : f32
      %12 = vector.broadcast %cst_10 : f32 to vector<512x128xf32>
      %c0_11 = arith.constant 0 : index
      %c0_12 = arith.constant 0 : index
      %13 = vector.load %arg7[%c0_11, %c0_12] : memref<512x128xf32, #tpu.memory_space<vmem>>, vector<512x128xf32>
      tpu.vector_store %arg7[%c0_11, %c0_12], %12 {strides = array<i32>} : memref<512x128xf32, #tpu.memory_space<vmem>>, vector<512x128xf32>,
    } else {
    }
    %c0 = arith.constant 0 : index
    %c0_1 = arith.constant 0 : index
    %3 = vector.load %arg7[%c0, %c0_1] : memref<512x128xf32, #tpu.memory_space<vmem>>, vector<512x128xf32>
    %c0_2 = arith.constant 0 : index
    %c0_3 = arith.constant 0 : index
    %4 = vector.load %arg2[%c0_2, %c0_3] : memref<512x128xbf16, #tpu.memory_space<vmem>>, vector<512x128xbf16>
    %c0_4 = arith.constant 0 : index
    %c0_5 = arith.constant 0 : index
    %5 = vector.load %arg3[%c0_4, %c0_5] : memref<128x128xbf16, #tpu.memory_space<vmem>>, vector<128x128xbf16>
    %cst = arith.constant dense<0.000000e+00> : vector<512x128xf32>
    %6 = tpu.matmul %4, %5, %cst {dimension_numbers = #tpu.dot_dimension_numbers<[1], [0], [0], [1], [0, 0, 1, 1], [], []>} : vector<512x128xbf16>, vector<128x128xbf16>, vector<512x128xf32> -> vector<512x128xf32>
    %7 = arith.addf %3, %6 : vector<512x128xf32>
    %c0_6 = arith.constant 0 : index
    %c0_7 = arith.constant 0 : index
    %8 = vector.load %arg7[%c0_6, %c0_7] : memref<512x128xf32, #tpu.memory_space<vmem>>, vector<512x128xf32>
    tpu.vector_store %arg7[%c0_6, %c0_7], %7 {strides = array<i32>} : memref<512x128xf32, #tpu.memory_space<vmem>>, vector<512x128xf32>,
    %c0_i32_8 = arith.constant 0 : i32
    %9 = arith.cmpi eq, %arg1, %c0_i32_8 : i32
    %10 = arith.extui %9 : i1 to i32
    %c0_i32_9 = arith.constant 0 : i32
    %11 = arith.cmpi ne, %10, %c0_i32_9 : i32
    scf.if %11 {
      %c0_10 = arith.constant 0 : index
      %c0_11 = arith.constant 0 : index
      %12 = vector.load %arg7[%c0_10, %c0_11] : memref<512x128xf32, #tpu.memory_space<vmem>>, vector<512x128xf32>
      %c0_12 = arith.constant 0 : index
      %c0_13 = arith.constant 0 : index
      %13 = vector.load %arg4[%c0_12, %c0_13] : memref<1x128xf32, #tpu.memory_space<vmem>>, vector<1x128xf32>
      %14 = vector.broadcast %13 : vector<1x128xf32> to vector<512x128xf32>
      %15 = arith.addf %12, %14 : vector<512x128xf32>
      %cst_14 = arith.constant dense<0.000000e+00> : vector<128xf32>
      %16 = vector.multi_reduction <add>, %15, %cst_14 [0] : vector<512x128xf32> to vector<128xf32>
      %17 = vector.shape_cast %16 : vector<128xf32> to vector<1x128xf32>
      %18 = arith.mulf %15, %15 : vector<512x128xf32>
      %cst_15 = arith.constant dense<0.000000e+00> : vector<128xf32>
      %19 = vector.multi_reduction <add>, %18, %cst_15 [0] : vector<512x128xf32> to vector<128xf32>
      %20 = vector.shape_cast %19 : vector<128xf32> to vector<1x128xf32>
      %21 = tpu.concatenate %17, %20 in 0 : vector<1x128xf32>, vector<1x128xf32> -> vector<2x128xf32>
      %22 = vector.shape_cast %21 : vector<2x128xf32> to vector<1x2x128xf32>
      %c0_16 = arith.constant 0 : index
      %c0_17 = arith.constant 0 : index
      %c0_18 = arith.constant 0 : index
      %23 = vector.load %arg6[%c0_16, %c0_17, %c0_18] : memref<1x2x128xf32, #tpu.memory_space<vmem>>, vector<1x2x128xf32>
      tpu.vector_store %arg6[%c0_16, %c0_17, %c0_18], %22 {strides = array<i32>} : memref<1x2x128xf32, #tpu.memory_space<vmem>>, vector<1x2x128xf32>,
      %c0_19 = arith.constant 0 : index
      %c0_20 = arith.constant 0 : index
      %24 = vector.load %arg5[%c0_19, %c0_20] : memref<512x128xf32, #tpu.memory_space<vmem>>, vector<512x128xf32>
      tpu.vector_store %arg5[%c0_19, %c0_20], %15 {strides = array<i32>} : memref<512x128xf32, #tpu.memory_space<vmem>>, vector<512x128xf32>,
    } else {
    }
    return
  }
  func.func @transform_0(%arg0: i32, %arg1: i32) -> (i32, i32) {
    %c0_i32 = arith.constant 0 : i32
    return %arg0, %arg1 : i32, i32
  }
  func.func @transform_1(%arg0: i32, %arg1: i32) -> (i32, i32) {
    %c0_i32 = arith.constant 0 : i32
    %c0_i32_0 = arith.constant 0 : i32
    return %arg1, %c0_i32 : i32, i32
  }
  func.func @transform_2(%arg0: i32, %arg1: i32) -> (i32, i32) {
    %c0_i32 = arith.constant 0 : i32
    %c0_i32_0 = arith.constant 0 : i32
    %c0_i32_1 = arith.constant 0 : i32
    return %c0_i32, %c0_i32_0 : i32, i32
  }
  func.func @transform_3(%arg0: i32, %arg1: i32) -> (i32, i32) {
    %c0_i32 = arith.constant 0 : i32
    %c0_i32_0 = arith.constant 0 : i32
    return %arg0, %c0_i32 : i32, i32
  }
  func.func @transform_4(%arg0: i32, %arg1: i32) -> (i32, i32, i32) {
    %c0_i32 = arith.constant 0 : i32
    %c0_i32_0 = arith.constant 0 : i32
    %c0_i32_1 = arith.constant 0 : i32
    return %arg0, %c0_i32, %c0_i32_0 : i32, i32, i32
  }
}

module attributes {stable_mosaic.version = 11 : i64} {
  func.func @_bn_lrelu_kernel(%arg0: i32, %arg1: memref<512x128xf32, #tpu.memory_space<vmem>>, %arg2: memref<1x128xf32, #tpu.memory_space<vmem>>, %arg3: memref<1x128xf32, #tpu.memory_space<vmem>>, %arg4: memref<512x128xf32, #tpu.memory_space<vmem>>) attributes {dimension_semantics = [#tpu.dimension_semantics<parallel>], iteration_bounds = array<i64: 1>, scalar_prefetch = 0 : i64, scratch_operands = 0 : i64, tpu.core_type = #tpu.core_type<tc>, window_params = [{transform_indices = @transform_0, window_bounds = array<i64: 512, 128>}, {pipeline_mode = #tpu.pipeline_mode<synchronous>, transform_indices = @transform_1, window_bounds = array<i64: 1, 128>}, {pipeline_mode = #tpu.pipeline_mode<synchronous>, transform_indices = @transform_2, window_bounds = array<i64: 1, 128>}, {transform_indices = @transform_3, window_bounds = array<i64: 512, 128>}]} {
    %c0 = arith.constant 0 : index
    %c0_0 = arith.constant 0 : index
    %0 = vector.load %arg1[%c0, %c0_0] : memref<512x128xf32, #tpu.memory_space<vmem>>, vector<512x128xf32>
    %c0_1 = arith.constant 0 : index
    %c0_2 = arith.constant 0 : index
    %1 = vector.load %arg2[%c0_1, %c0_2] : memref<1x128xf32, #tpu.memory_space<vmem>>, vector<1x128xf32>
    %2 = vector.broadcast %1 : vector<1x128xf32> to vector<512x128xf32>
    %3 = arith.mulf %0, %2 : vector<512x128xf32>
    %c0_3 = arith.constant 0 : index
    %c0_4 = arith.constant 0 : index
    %4 = vector.load %arg3[%c0_3, %c0_4] : memref<1x128xf32, #tpu.memory_space<vmem>>, vector<1x128xf32>
    %5 = vector.broadcast %4 : vector<1x128xf32> to vector<512x128xf32>
    %6 = arith.addf %3, %5 : vector<512x128xf32>
    %cst = arith.constant 0.000000e+00 : f32
    %7 = vector.broadcast %cst : f32 to vector<512x128xf32>
    %8 = arith.cmpf ogt, %6, %7 : vector<512x128xf32>
    %cst_5 = arith.constant 2.000000e-01 : f32
    %9 = vector.broadcast %cst_5 : f32 to vector<512x128xf32>
    %10 = arith.mulf %9, %6 : vector<512x128xf32>
    %11 = arith.select %8, %6, %10 : vector<512x128xi1>, vector<512x128xf32>
    %c0_6 = arith.constant 0 : index
    %c0_7 = arith.constant 0 : index
    %12 = vector.load %arg4[%c0_6, %c0_7] : memref<512x128xf32, #tpu.memory_space<vmem>>, vector<512x128xf32>
    tpu.vector_store %arg4[%c0_6, %c0_7], %11 {strides = array<i32>} : memref<512x128xf32, #tpu.memory_space<vmem>>, vector<512x128xf32>,
    return
  }
  func.func @transform_0(%arg0: i32) -> (i32, i32) {
    %c0_i32 = arith.constant 0 : i32
    %c0_i32_0 = arith.constant 0 : i32
    return %arg0, %c0_i32 : i32, i32
  }
  func.func @transform_1(%arg0: i32) -> (i32, i32) {
    %c0_i32 = arith.constant 0 : i32
    %c0_i32_0 = arith.constant 0 : i32
    %c0_i32_1 = arith.constant 0 : i32
    return %c0_i32, %c0_i32_0 : i32, i32
  }
  func.func @transform_2(%arg0: i32) -> (i32, i32) {
    %c0_i32 = arith.constant 0 : i32
    %c0_i32_0 = arith.constant 0 : i32
    %c0_i32_1 = arith.constant 0 : i32
    return %c0_i32, %c0_i32_0 : i32, i32
  }
  func.func @transform_3(%arg0: i32) -> (i32, i32) {
    %c0_i32 = arith.constant 0 : i32
    %c0_i32_0 = arith.constant 0 : i32
    return %arg0, %c0_i32 : i32, i32
  }
}

module attributes {stable_mosaic.version = 11 : i64} {
  func.func @_conv_kernel(%arg0: i32, %arg1: i32, %arg2: memref<128x256xbf16, #tpu.memory_space<vmem>>, %arg3: memref<256x128xbf16, #tpu.memory_space<vmem>>, %arg4: memref<1x128xf32, #tpu.memory_space<vmem>>, %arg5: memref<128x128xf32, #tpu.memory_space<vmem>>, %arg6: memref<1x2x128xf32, #tpu.memory_space<vmem>>, %arg7: memref<128x128xf32, #tpu.memory_space<vmem>>) attributes {dimension_semantics = [#tpu.dimension_semantics<parallel>, #tpu.dimension_semantics<arbitrary>], iteration_bounds = array<i64: 1, 1>, scalar_prefetch = 0 : i64, scratch_operands = 1 : i64, tpu.core_type = #tpu.core_type<tc>, window_params = [{transform_indices = @transform_0, window_bounds = array<i64: 128, 256>}, {transform_indices = @transform_1, window_bounds = array<i64: 256, 128>}, {pipeline_mode = #tpu.pipeline_mode<synchronous>, transform_indices = @transform_2, window_bounds = array<i64: 1, 128>}, {transform_indices = @transform_3, window_bounds = array<i64: 128, 128>}, {transform_indices = @transform_4, window_bounds = array<i64: 1, 2, 128>}]} {
    %c0_i32 = arith.constant 0 : i32
    %0 = arith.cmpi eq, %arg1, %c0_i32 : i32
    %1 = arith.extui %0 : i1 to i32
    %c0_i32_0 = arith.constant 0 : i32
    %2 = arith.cmpi ne, %1, %c0_i32_0 : i32
    scf.if %2 {
      %cst_10 = arith.constant 0.000000e+00 : f32
      %12 = vector.broadcast %cst_10 : f32 to vector<128x128xf32>
      %c0_11 = arith.constant 0 : index
      %c0_12 = arith.constant 0 : index
      %13 = vector.load %arg7[%c0_11, %c0_12] : memref<128x128xf32, #tpu.memory_space<vmem>>, vector<128x128xf32>
      tpu.vector_store %arg7[%c0_11, %c0_12], %12 {strides = array<i32>} : memref<128x128xf32, #tpu.memory_space<vmem>>, vector<128x128xf32>,
    } else {
    }
    %c0 = arith.constant 0 : index
    %c0_1 = arith.constant 0 : index
    %3 = vector.load %arg7[%c0, %c0_1] : memref<128x128xf32, #tpu.memory_space<vmem>>, vector<128x128xf32>
    %c0_2 = arith.constant 0 : index
    %c0_3 = arith.constant 0 : index
    %4 = vector.load %arg2[%c0_2, %c0_3] : memref<128x256xbf16, #tpu.memory_space<vmem>>, vector<128x256xbf16>
    %c0_4 = arith.constant 0 : index
    %c0_5 = arith.constant 0 : index
    %5 = vector.load %arg3[%c0_4, %c0_5] : memref<256x128xbf16, #tpu.memory_space<vmem>>, vector<256x128xbf16>
    %cst = arith.constant dense<0.000000e+00> : vector<128x128xf32>
    %6 = tpu.matmul %4, %5, %cst {dimension_numbers = #tpu.dot_dimension_numbers<[1], [0], [0], [1], [0, 0, 1, 1], [], []>} : vector<128x256xbf16>, vector<256x128xbf16>, vector<128x128xf32> -> vector<128x128xf32>
    %7 = arith.addf %3, %6 : vector<128x128xf32>
    %c0_6 = arith.constant 0 : index
    %c0_7 = arith.constant 0 : index
    %8 = vector.load %arg7[%c0_6, %c0_7] : memref<128x128xf32, #tpu.memory_space<vmem>>, vector<128x128xf32>
    tpu.vector_store %arg7[%c0_6, %c0_7], %7 {strides = array<i32>} : memref<128x128xf32, #tpu.memory_space<vmem>>, vector<128x128xf32>,
    %c0_i32_8 = arith.constant 0 : i32
    %9 = arith.cmpi eq, %arg1, %c0_i32_8 : i32
    %10 = arith.extui %9 : i1 to i32
    %c0_i32_9 = arith.constant 0 : i32
    %11 = arith.cmpi ne, %10, %c0_i32_9 : i32
    scf.if %11 {
      %c0_10 = arith.constant 0 : index
      %c0_11 = arith.constant 0 : index
      %12 = vector.load %arg7[%c0_10, %c0_11] : memref<128x128xf32, #tpu.memory_space<vmem>>, vector<128x128xf32>
      %c0_12 = arith.constant 0 : index
      %c0_13 = arith.constant 0 : index
      %13 = vector.load %arg4[%c0_12, %c0_13] : memref<1x128xf32, #tpu.memory_space<vmem>>, vector<1x128xf32>
      %14 = vector.broadcast %13 : vector<1x128xf32> to vector<128x128xf32>
      %15 = arith.addf %12, %14 : vector<128x128xf32>
      %cst_14 = arith.constant dense<0.000000e+00> : vector<128xf32>
      %16 = vector.multi_reduction <add>, %15, %cst_14 [0] : vector<128x128xf32> to vector<128xf32>
      %17 = vector.shape_cast %16 : vector<128xf32> to vector<1x128xf32>
      %18 = arith.mulf %15, %15 : vector<128x128xf32>
      %cst_15 = arith.constant dense<0.000000e+00> : vector<128xf32>
      %19 = vector.multi_reduction <add>, %18, %cst_15 [0] : vector<128x128xf32> to vector<128xf32>
      %20 = vector.shape_cast %19 : vector<128xf32> to vector<1x128xf32>
      %21 = tpu.concatenate %17, %20 in 0 : vector<1x128xf32>, vector<1x128xf32> -> vector<2x128xf32>
      %22 = vector.shape_cast %21 : vector<2x128xf32> to vector<1x2x128xf32>
      %c0_16 = arith.constant 0 : index
      %c0_17 = arith.constant 0 : index
      %c0_18 = arith.constant 0 : index
      %23 = vector.load %arg6[%c0_16, %c0_17, %c0_18] : memref<1x2x128xf32, #tpu.memory_space<vmem>>, vector<1x2x128xf32>
      tpu.vector_store %arg6[%c0_16, %c0_17, %c0_18], %22 {strides = array<i32>} : memref<1x2x128xf32, #tpu.memory_space<vmem>>, vector<1x2x128xf32>,
      %c0_19 = arith.constant 0 : index
      %c0_20 = arith.constant 0 : index
      %24 = vector.load %arg5[%c0_19, %c0_20] : memref<128x128xf32, #tpu.memory_space<vmem>>, vector<128x128xf32>
      tpu.vector_store %arg5[%c0_19, %c0_20], %15 {strides = array<i32>} : memref<128x128xf32, #tpu.memory_space<vmem>>, vector<128x128xf32>,
    } else {
    }
    return
  }
  func.func @transform_0(%arg0: i32, %arg1: i32) -> (i32, i32) {
    %c0_i32 = arith.constant 0 : i32
    return %arg0, %arg1 : i32, i32
  }
  func.func @transform_1(%arg0: i32, %arg1: i32) -> (i32, i32) {
    %c0_i32 = arith.constant 0 : i32
    %c0_i32_0 = arith.constant 0 : i32
    return %arg1, %c0_i32 : i32, i32
  }
  func.func @transform_2(%arg0: i32, %arg1: i32) -> (i32, i32) {
    %c0_i32 = arith.constant 0 : i32
    %c0_i32_0 = arith.constant 0 : i32
    %c0_i32_1 = arith.constant 0 : i32
    return %c0_i32, %c0_i32_0 : i32, i32
  }
  func.func @transform_3(%arg0: i32, %arg1: i32) -> (i32, i32) {
    %c0_i32 = arith.constant 0 : i32
    %c0_i32_0 = arith.constant 0 : i32
    return %arg0, %c0_i32 : i32, i32
  }
  func.func @transform_4(%arg0: i32, %arg1: i32) -> (i32, i32, i32) {
    %c0_i32 = arith.constant 0 : i32
    %c0_i32_0 = arith.constant 0 : i32
    %c0_i32_1 = arith.constant 0 : i32
    return %arg0, %c0_i32, %c0_i32_0 : i32, i32, i32
  }
}

module attributes {stable_mosaic.version = 11 : i64} {
  func.func @_bn_lrelu_kernel(%arg0: i32, %arg1: memref<128x128xf32, #tpu.memory_space<vmem>>, %arg2: memref<1x128xf32, #tpu.memory_space<vmem>>, %arg3: memref<1x128xf32, #tpu.memory_space<vmem>>, %arg4: memref<128x128xf32, #tpu.memory_space<vmem>>) attributes {dimension_semantics = [#tpu.dimension_semantics<parallel>], iteration_bounds = array<i64: 1>, scalar_prefetch = 0 : i64, scratch_operands = 0 : i64, tpu.core_type = #tpu.core_type<tc>, window_params = [{transform_indices = @transform_0, window_bounds = array<i64: 128, 128>}, {pipeline_mode = #tpu.pipeline_mode<synchronous>, transform_indices = @transform_1, window_bounds = array<i64: 1, 128>}, {pipeline_mode = #tpu.pipeline_mode<synchronous>, transform_indices = @transform_2, window_bounds = array<i64: 1, 128>}, {transform_indices = @transform_3, window_bounds = array<i64: 128, 128>}]} {
    %c0 = arith.constant 0 : index
    %c0_0 = arith.constant 0 : index
    %0 = vector.load %arg1[%c0, %c0_0] : memref<128x128xf32, #tpu.memory_space<vmem>>, vector<128x128xf32>
    %c0_1 = arith.constant 0 : index
    %c0_2 = arith.constant 0 : index
    %1 = vector.load %arg2[%c0_1, %c0_2] : memref<1x128xf32, #tpu.memory_space<vmem>>, vector<1x128xf32>
    %2 = vector.broadcast %1 : vector<1x128xf32> to vector<128x128xf32>
    %3 = arith.mulf %0, %2 : vector<128x128xf32>
    %c0_3 = arith.constant 0 : index
    %c0_4 = arith.constant 0 : index
    %4 = vector.load %arg3[%c0_3, %c0_4] : memref<1x128xf32, #tpu.memory_space<vmem>>, vector<1x128xf32>
    %5 = vector.broadcast %4 : vector<1x128xf32> to vector<128x128xf32>
    %6 = arith.addf %3, %5 : vector<128x128xf32>
    %cst = arith.constant 0.000000e+00 : f32
    %7 = vector.broadcast %cst : f32 to vector<128x128xf32>
    %8 = arith.cmpf ogt, %6, %7 : vector<128x128xf32>
    %cst_5 = arith.constant 2.000000e-01 : f32
    %9 = vector.broadcast %cst_5 : f32 to vector<128x128xf32>
    %10 = arith.mulf %9, %6 : vector<128x128xf32>
    %11 = arith.select %8, %6, %10 : vector<128x128xi1>, vector<128x128xf32>
    %c0_6 = arith.constant 0 : index
    %c0_7 = arith.constant 0 : index
    %12 = vector.load %arg4[%c0_6, %c0_7] : memref<128x128xf32, #tpu.memory_space<vmem>>, vector<128x128xf32>
    tpu.vector_store %arg4[%c0_6, %c0_7], %11 {strides = array<i32>} : memref<128x128xf32, #tpu.memory_space<vmem>>, vector<128x128xf32>,
    return
  }
  func.func @transform_0(%arg0: i32) -> (i32, i32) {
    %c0_i32 = arith.constant 0 : i32
    %c0_i32_0 = arith.constant 0 : i32
    return %arg0, %c0_i32 : i32, i32
  }
  func.func @transform_1(%arg0: i32) -> (i32, i32) {
    %c0_i32 = arith.constant 0 : i32
    %c0_i32_0 = arith.constant 0 : i32
    %c0_i32_1 = arith.constant 0 : i32
    return %c0_i32, %c0_i32_0 : i32, i32
  }
  func.func @transform_2(%arg0: i32) -> (i32, i32) {
    %c0_i32 = arith.constant 0 : i32
    %c0_i32_0 = arith.constant 0 : i32
    %c0_i32_1 = arith.constant 0 : i32
    return %c0_i32, %c0_i32_0 : i32, i32
  }
  func.func @transform_3(%arg0: i32) -> (i32, i32) {
    %c0_i32 = arith.constant 0 : i32
    %c0_i32_0 = arith.constant 0 : i32
    return %arg0, %c0_i32 : i32, i32
  }
}

module attributes {stable_mosaic.version = 11 : i64} {
  func.func @_conv_kernel(%arg0: i32, %arg1: i32, %arg2: memref<32x512xbf16, #tpu.memory_space<vmem>>, %arg3: memref<512x128xbf16, #tpu.memory_space<vmem>>, %arg4: memref<1x128xf32, #tpu.memory_space<vmem>>, %arg5: memref<32x128xf32, #tpu.memory_space<vmem>>, %arg6: memref<1x2x128xf32, #tpu.memory_space<vmem>>, %arg7: memref<32x128xf32, #tpu.memory_space<vmem>>) attributes {dimension_semantics = [#tpu.dimension_semantics<parallel>, #tpu.dimension_semantics<arbitrary>], iteration_bounds = array<i64: 1, 1>, scalar_prefetch = 0 : i64, scratch_operands = 1 : i64, tpu.core_type = #tpu.core_type<tc>, window_params = [{transform_indices = @transform_0, window_bounds = array<i64: 32, 512>}, {transform_indices = @transform_1, window_bounds = array<i64: 512, 128>}, {pipeline_mode = #tpu.pipeline_mode<synchronous>, transform_indices = @transform_2, window_bounds = array<i64: 1, 128>}, {transform_indices = @transform_3, window_bounds = array<i64: 32, 128>}, {transform_indices = @transform_4, window_bounds = array<i64: 1, 2, 128>}]} {
    %c0_i32 = arith.constant 0 : i32
    %0 = arith.cmpi eq, %arg1, %c0_i32 : i32
    %1 = arith.extui %0 : i1 to i32
    %c0_i32_0 = arith.constant 0 : i32
    %2 = arith.cmpi ne, %1, %c0_i32_0 : i32
    scf.if %2 {
      %cst_10 = arith.constant 0.000000e+00 : f32
      %12 = vector.broadcast %cst_10 : f32 to vector<32x128xf32>
      %c0_11 = arith.constant 0 : index
      %c0_12 = arith.constant 0 : index
      %13 = vector.load %arg7[%c0_11, %c0_12] : memref<32x128xf32, #tpu.memory_space<vmem>>, vector<32x128xf32>
      tpu.vector_store %arg7[%c0_11, %c0_12], %12 {strides = array<i32>} : memref<32x128xf32, #tpu.memory_space<vmem>>, vector<32x128xf32>,
    } else {
    }
    %c0 = arith.constant 0 : index
    %c0_1 = arith.constant 0 : index
    %3 = vector.load %arg7[%c0, %c0_1] : memref<32x128xf32, #tpu.memory_space<vmem>>, vector<32x128xf32>
    %c0_2 = arith.constant 0 : index
    %c0_3 = arith.constant 0 : index
    %4 = vector.load %arg2[%c0_2, %c0_3] : memref<32x512xbf16, #tpu.memory_space<vmem>>, vector<32x512xbf16>
    %c0_4 = arith.constant 0 : index
    %c0_5 = arith.constant 0 : index
    %5 = vector.load %arg3[%c0_4, %c0_5] : memref<512x128xbf16, #tpu.memory_space<vmem>>, vector<512x128xbf16>
    %cst = arith.constant dense<0.000000e+00> : vector<32x128xf32>
    %6 = tpu.matmul %4, %5, %cst {dimension_numbers = #tpu.dot_dimension_numbers<[1], [0], [0], [1], [0, 0, 1, 1], [], []>} : vector<32x512xbf16>, vector<512x128xbf16>, vector<32x128xf32> -> vector<32x128xf32>
    %7 = arith.addf %3, %6 : vector<32x128xf32>
    %c0_6 = arith.constant 0 : index
    %c0_7 = arith.constant 0 : index
    %8 = vector.load %arg7[%c0_6, %c0_7] : memref<32x128xf32, #tpu.memory_space<vmem>>, vector<32x128xf32>
    tpu.vector_store %arg7[%c0_6, %c0_7], %7 {strides = array<i32>} : memref<32x128xf32, #tpu.memory_space<vmem>>, vector<32x128xf32>,
    %c0_i32_8 = arith.constant 0 : i32
    %9 = arith.cmpi eq, %arg1, %c0_i32_8 : i32
    %10 = arith.extui %9 : i1 to i32
    %c0_i32_9 = arith.constant 0 : i32
    %11 = arith.cmpi ne, %10, %c0_i32_9 : i32
    scf.if %11 {
      %c0_10 = arith.constant 0 : index
      %c0_11 = arith.constant 0 : index
      %12 = vector.load %arg7[%c0_10, %c0_11] : memref<32x128xf32, #tpu.memory_space<vmem>>, vector<32x128xf32>
      %c0_12 = arith.constant 0 : index
      %c0_13 = arith.constant 0 : index
      %13 = vector.load %arg4[%c0_12, %c0_13] : memref<1x128xf32, #tpu.memory_space<vmem>>, vector<1x128xf32>
      %14 = vector.broadcast %13 : vector<1x128xf32> to vector<32x128xf32>
      %15 = arith.addf %12, %14 : vector<32x128xf32>
      %cst_14 = arith.constant dense<0.000000e+00> : vector<128xf32>
      %16 = vector.multi_reduction <add>, %15, %cst_14 [0] : vector<32x128xf32> to vector<128xf32>
      %17 = vector.shape_cast %16 : vector<128xf32> to vector<1x128xf32>
      %18 = arith.mulf %15, %15 : vector<32x128xf32>
      %cst_15 = arith.constant dense<0.000000e+00> : vector<128xf32>
      %19 = vector.multi_reduction <add>, %18, %cst_15 [0] : vector<32x128xf32> to vector<128xf32>
      %20 = vector.shape_cast %19 : vector<128xf32> to vector<1x128xf32>
      %21 = tpu.concatenate %17, %20 in 0 : vector<1x128xf32>, vector<1x128xf32> -> vector<2x128xf32>
      %22 = vector.shape_cast %21 : vector<2x128xf32> to vector<1x2x128xf32>
      %c0_16 = arith.constant 0 : index
      %c0_17 = arith.constant 0 : index
      %c0_18 = arith.constant 0 : index
      %23 = vector.load %arg6[%c0_16, %c0_17, %c0_18] : memref<1x2x128xf32, #tpu.memory_space<vmem>>, vector<1x2x128xf32>
      tpu.vector_store %arg6[%c0_16, %c0_17, %c0_18], %22 {strides = array<i32>} : memref<1x2x128xf32, #tpu.memory_space<vmem>>, vector<1x2x128xf32>,
      %c0_19 = arith.constant 0 : index
      %c0_20 = arith.constant 0 : index
      %24 = vector.load %arg5[%c0_19, %c0_20] : memref<32x128xf32, #tpu.memory_space<vmem>>, vector<32x128xf32>
      tpu.vector_store %arg5[%c0_19, %c0_20], %15 {strides = array<i32>} : memref<32x128xf32, #tpu.memory_space<vmem>>, vector<32x128xf32>,
    } else {
    }
    return
  }
  func.func @transform_0(%arg0: i32, %arg1: i32) -> (i32, i32) {
    %c0_i32 = arith.constant 0 : i32
    return %arg0, %arg1 : i32, i32
  }
  func.func @transform_1(%arg0: i32, %arg1: i32) -> (i32, i32) {
    %c0_i32 = arith.constant 0 : i32
    %c0_i32_0 = arith.constant 0 : i32
    return %arg1, %c0_i32 : i32, i32
  }
  func.func @transform_2(%arg0: i32, %arg1: i32) -> (i32, i32) {
    %c0_i32 = arith.constant 0 : i32
    %c0_i32_0 = arith.constant 0 : i32
    %c0_i32_1 = arith.constant 0 : i32
    return %c0_i32, %c0_i32_0 : i32, i32
  }
  func.func @transform_3(%arg0: i32, %arg1: i32) -> (i32, i32) {
    %c0_i32 = arith.constant 0 : i32
    %c0_i32_0 = arith.constant 0 : i32
    return %arg0, %c0_i32 : i32, i32
  }
  func.func @transform_4(%arg0: i32, %arg1: i32) -> (i32, i32, i32) {
    %c0_i32 = arith.constant 0 : i32
    %c0_i32_0 = arith.constant 0 : i32
    %c0_i32_1 = arith.constant 0 : i32
    return %arg0, %c0_i32, %c0_i32_0 : i32, i32, i32
  }
}

module attributes {stable_mosaic.version = 11 : i64} {
  func.func @_bn_lrelu_kernel(%arg0: i32, %arg1: memref<32x128xf32, #tpu.memory_space<vmem>>, %arg2: memref<1x128xf32, #tpu.memory_space<vmem>>, %arg3: memref<1x128xf32, #tpu.memory_space<vmem>>, %arg4: memref<32x128xf32, #tpu.memory_space<vmem>>) attributes {dimension_semantics = [#tpu.dimension_semantics<parallel>], iteration_bounds = array<i64: 1>, scalar_prefetch = 0 : i64, scratch_operands = 0 : i64, tpu.core_type = #tpu.core_type<tc>, window_params = [{transform_indices = @transform_0, window_bounds = array<i64: 32, 128>}, {pipeline_mode = #tpu.pipeline_mode<synchronous>, transform_indices = @transform_1, window_bounds = array<i64: 1, 128>}, {pipeline_mode = #tpu.pipeline_mode<synchronous>, transform_indices = @transform_2, window_bounds = array<i64: 1, 128>}, {transform_indices = @transform_3, window_bounds = array<i64: 32, 128>}]} {
    %c0 = arith.constant 0 : index
    %c0_0 = arith.constant 0 : index
    %0 = vector.load %arg1[%c0, %c0_0] : memref<32x128xf32, #tpu.memory_space<vmem>>, vector<32x128xf32>
    %c0_1 = arith.constant 0 : index
    %c0_2 = arith.constant 0 : index
    %1 = vector.load %arg2[%c0_1, %c0_2] : memref<1x128xf32, #tpu.memory_space<vmem>>, vector<1x128xf32>
    %2 = vector.broadcast %1 : vector<1x128xf32> to vector<32x128xf32>
    %3 = arith.mulf %0, %2 : vector<32x128xf32>
    %c0_3 = arith.constant 0 : index
    %c0_4 = arith.constant 0 : index
    %4 = vector.load %arg3[%c0_3, %c0_4] : memref<1x128xf32, #tpu.memory_space<vmem>>, vector<1x128xf32>
    %5 = vector.broadcast %4 : vector<1x128xf32> to vector<32x128xf32>
    %6 = arith.addf %3, %5 : vector<32x128xf32>
    %cst = arith.constant 0.000000e+00 : f32
    %7 = vector.broadcast %cst : f32 to vector<32x128xf32>
    %8 = arith.cmpf ogt, %6, %7 : vector<32x128xf32>
    %cst_5 = arith.constant 2.000000e-01 : f32
    %9 = vector.broadcast %cst_5 : f32 to vector<32x128xf32>
    %10 = arith.mulf %9, %6 : vector<32x128xf32>
    %11 = arith.select %8, %6, %10 : vector<32x128xi1>, vector<32x128xf32>
    %c0_6 = arith.constant 0 : index
    %c0_7 = arith.constant 0 : index
    %12 = vector.load %arg4[%c0_6, %c0_7] : memref<32x128xf32, #tpu.memory_space<vmem>>, vector<32x128xf32>
    tpu.vector_store %arg4[%c0_6, %c0_7], %11 {strides = array<i32>} : memref<32x128xf32, #tpu.memory_space<vmem>>, vector<32x128xf32>,
    return
  }
  func.func @transform_0(%arg0: i32) -> (i32, i32) {
    %c0_i32 = arith.constant 0 : i32
    %c0_i32_0 = arith.constant 0 : i32
    return %arg0, %c0_i32 : i32, i32
  }
  func.func @transform_1(%arg0: i32) -> (i32, i32) {
    %c0_i32 = arith.constant 0 : i32
    %c0_i32_0 = arith.constant 0 : i32
    %c0_i32_1 = arith.constant 0 : i32
    return %c0_i32, %c0_i32_0 : i32, i32
  }
  func.func @transform_2(%arg0: i32) -> (i32, i32) {
    %c0_i32 = arith.constant 0 : i32
    %c0_i32_0 = arith.constant 0 : i32
    %c0_i32_1 = arith.constant 0 : i32
    return %c0_i32, %c0_i32_0 : i32, i32
  }
  func.func @transform_3(%arg0: i32) -> (i32, i32) {
    %c0_i32 = arith.constant 0 : i32
    %c0_i32_0 = arith.constant 0 : i32
    return %arg0, %c0_i32 : i32, i32
  }
}

module attributes {stable_mosaic.version = 11 : i64} {
  func.func @_conv_kernel(%arg0: i32, %arg1: i32, %arg2: memref<8x1024xbf16, #tpu.memory_space<vmem>>, %arg3: memref<1024x128xbf16, #tpu.memory_space<vmem>>, %arg4: memref<1x128xf32, #tpu.memory_space<vmem>>, %arg5: memref<8x128xf32, #tpu.memory_space<vmem>>, %arg6: memref<8x128xf32, #tpu.memory_space<vmem>>) attributes {dimension_semantics = [#tpu.dimension_semantics<parallel>, #tpu.dimension_semantics<arbitrary>], iteration_bounds = array<i64: 1, 1>, scalar_prefetch = 0 : i64, scratch_operands = 1 : i64, tpu.core_type = #tpu.core_type<tc>, window_params = [{transform_indices = @transform_0, window_bounds = array<i64: 8, 1024>}, {transform_indices = @transform_1, window_bounds = array<i64: 1024, 128>}, {pipeline_mode = #tpu.pipeline_mode<synchronous>, transform_indices = @transform_2, window_bounds = array<i64: 1, 128>}, {transform_indices = @transform_3, window_bounds = array<i64: 8, 128>}]} {
    %c0_i32 = arith.constant 0 : i32
    %0 = arith.cmpi eq, %arg1, %c0_i32 : i32
    %1 = arith.extui %0 : i1 to i32
    %c0_i32_0 = arith.constant 0 : i32
    %2 = arith.cmpi ne, %1, %c0_i32_0 : i32
    scf.if %2 {
      %cst_10 = arith.constant 0.000000e+00 : f32
      %12 = vector.broadcast %cst_10 : f32 to vector<8x128xf32>
      %c0_11 = arith.constant 0 : index
      %c0_12 = arith.constant 0 : index
      %13 = vector.load %arg6[%c0_11, %c0_12] : memref<8x128xf32, #tpu.memory_space<vmem>>, vector<8x128xf32>
      tpu.vector_store %arg6[%c0_11, %c0_12], %12 {strides = array<i32>} : memref<8x128xf32, #tpu.memory_space<vmem>>, vector<8x128xf32>,
    } else {
    }
    %c0 = arith.constant 0 : index
    %c0_1 = arith.constant 0 : index
    %3 = vector.load %arg6[%c0, %c0_1] : memref<8x128xf32, #tpu.memory_space<vmem>>, vector<8x128xf32>
    %c0_2 = arith.constant 0 : index
    %c0_3 = arith.constant 0 : index
    %4 = vector.load %arg2[%c0_2, %c0_3] : memref<8x1024xbf16, #tpu.memory_space<vmem>>, vector<8x1024xbf16>
    %c0_4 = arith.constant 0 : index
    %c0_5 = arith.constant 0 : index
    %5 = vector.load %arg3[%c0_4, %c0_5] : memref<1024x128xbf16, #tpu.memory_space<vmem>>, vector<1024x128xbf16>
    %cst = arith.constant dense<0.000000e+00> : vector<8x128xf32>
    %6 = tpu.matmul %4, %5, %cst {dimension_numbers = #tpu.dot_dimension_numbers<[1], [0], [0], [1], [0, 0, 1, 1], [], []>} : vector<8x1024xbf16>, vector<1024x128xbf16>, vector<8x128xf32> -> vector<8x128xf32>
    %7 = arith.addf %3, %6 : vector<8x128xf32>
    %c0_6 = arith.constant 0 : index
    %c0_7 = arith.constant 0 : index
    %8 = vector.load %arg6[%c0_6, %c0_7] : memref<8x128xf32, #tpu.memory_space<vmem>>, vector<8x128xf32>
    tpu.vector_store %arg6[%c0_6, %c0_7], %7 {strides = array<i32>} : memref<8x128xf32, #tpu.memory_space<vmem>>, vector<8x128xf32>,
    %c0_i32_8 = arith.constant 0 : i32
    %9 = arith.cmpi eq, %arg1, %c0_i32_8 : i32
    %10 = arith.extui %9 : i1 to i32
    %c0_i32_9 = arith.constant 0 : i32
    %11 = arith.cmpi ne, %10, %c0_i32_9 : i32
    scf.if %11 {
      %c0_10 = arith.constant 0 : index
      %c0_11 = arith.constant 0 : index
      %12 = vector.load %arg6[%c0_10, %c0_11] : memref<8x128xf32, #tpu.memory_space<vmem>>, vector<8x128xf32>
      %c0_12 = arith.constant 0 : index
      %c0_13 = arith.constant 0 : index
      %13 = vector.load %arg4[%c0_12, %c0_13] : memref<1x128xf32, #tpu.memory_space<vmem>>, vector<1x128xf32>
      %14 = vector.broadcast %13 : vector<1x128xf32> to vector<8x128xf32>
      %15 = arith.addf %12, %14 : vector<8x128xf32>
      %cst_14 = arith.constant 0.000000e+00 : f32
      %16 = vector.broadcast %cst_14 : f32 to vector<8x128xf32>
      %17 = arith.subf %16, %15 : vector<8x128xf32>
      %18 = math.exp %17 : vector<8x128xf32>
      %cst_15 = arith.constant 1.000000e+00 : f32
      %19 = vector.broadcast %cst_15 : f32 to vector<8x128xf32>
      %20 = arith.addf %19, %18 : vector<8x128xf32>
      %21 = tpu.reciprocal %20 {approx = true} : vector<8x128xf32> -> vector<8x128xf32>
      %c0_16 = arith.constant 0 : index
      %c0_17 = arith.constant 0 : index
      %22 = vector.load %arg5[%c0_16, %c0_17] : memref<8x128xf32, #tpu.memory_space<vmem>>, vector<8x128xf32>
      tpu.vector_store %arg5[%c0_16, %c0_17], %21 {strides = array<i32>} : memref<8x128xf32, #tpu.memory_space<vmem>>, vector<8x128xf32>,
    } else {
    }
    return
  }
  func.func @transform_0(%arg0: i32, %arg1: i32) -> (i32, i32) {
    %c0_i32 = arith.constant 0 : i32
    return %arg0, %arg1 : i32, i32
  }
  func.func @transform_1(%arg0: i32, %arg1: i32) -> (i32, i32) {
    %c0_i32 = arith.constant 0 : i32
    %c0_i32_0 = arith.constant 0 : i32
    return %arg1, %c0_i32 : i32, i32
  }
  func.func @transform_2(%arg0: i32, %arg1: i32) -> (i32, i32) {
    %c0_i32 = arith.constant 0 : i32
    %c0_i32_0 = arith.constant 0 : i32
    %c0_i32_1 = arith.constant 0 : i32
    return %c0_i32, %c0_i32_0 : i32, i32
  }
  func.func @transform_3(%arg0: i32, %arg1: i32) -> (i32, i32) {
    %c0_i32 = arith.constant 0 : i32
    %c0_i32_0 = arith.constant 0 : i32
    return %arg0, %c0_i32 : i32, i32
  }
}

</mosaic_0001>

<llo_original>
// kernel: discriminator_forward.8
$region0: #{discriminator_forward.8}
  #allocation0 [shape = 'u32[]', space=smem, size = 0x4, offset = 0x4, fixed_abs, tag = 'smem constant byte address 0x4 - core index']
  #allocation1 [shape = 'u32[144,128]{1,0:T(1,128)}', space=vmem, size = 0x12000, scoped, tag = 'internal scratch']
  #allocation2 [shape = 'f32[512,128]{1,0:T(8,128)}', space=vmem, size = 0x40000, scoped, tag = 'scratch operand']
  %s0 = inlined_call_operand.vmem [shape: bf16[2048,128], index: 0, kind: input, shape index: {}]
  %s1 = inlined_call_operand.vmem [shape: bf16[128,128], index: 1, kind: input, shape index: {}]
  %s2 = inlined_call_operand.vmem [shape: f32[1,128], index: 2, kind: input, shape index: {}]
  %s3 = inlined_call_operand.vmem [shape: f32[2048,128], index: 3, kind: output, shape index: {}]
  %s4 = sld [smem:[#allocation0]]
  $region53: #{discriminator_forward.8} parent=0
    _
  %s6 = ssub.s32 1, %s4
  %s7 = scalar_select 0, %s6, %s4
  loop: start=0, step=1, limit=6
  $region2: #{discriminator_forward.8} parent=0 // loop_pre_header
    _
  $region3: #{discriminator_forward.8} parent=0 // loop_header
    %s9 = sphi 0, %s13
    %p10 = scmp.ge.s32.totalorder %s9, 6
    %s16 = sphi 0, %s28
    %s17 = sphi 0, %s24
    %s18 = sphi 0, %s16
    %s19 = sphi 0, %s17
    %s20 = sphi 0, %s18
    %s21 = sphi 0, %s19
    %s33 = sphi 0, %s35
    %s36 = sphi 0, %s33
    %s37 = sphi 0, %s36
    %s53 = sphi 0, %s37
    %s59 = sphi 0, %s61
    %s62 = sphi 0, %s59
    %s63 = sphi 0, %s62
    %s79 = sphi 0, %s63
    %s83 = sphi 0, %s83
    %s85 = sphi 0, %s83
    %s86 = sphi 0, %s85
    %s100 = sphi 0, %s86
    %s106 = sphi 0, %s108
    %s109 = sphi 0, %s106
    %s110 = sphi 0, %s109
    %s126 = sphi 0, %s110
  $region4: #{discriminator_forward.8} parent=0 // loop_header_branch
    %12 = sbr.rel (%p10) target = $region8
  $region5: #{discriminator_forward.8} parent=0 // loop_body
    %s14 = ssub.s32 %s9, 1
    %s15 = ssub.s32 %s9, 2
    %s22 = sadd.s32 1, %s17
    %p23 = scmp.ge.s32.totalorder %s22, 1
    %s24 = scalar_select %p23, 0, %s22
    %s25 = sadd.s32 1, %s16
    %s26 = scalar_select %p23, %s25, %s16
    %p27 = scmp.ge.s32.totalorder %s26, 4
    %s28 = scalar_select %p27, 0, %s26
    %s29 = ssub.s32 %s16, %s28
    %s30 = ssub.s32 %s17, %s24
    %s31 = sor.u32 %s29, %s30
    %p32 = scmp.eq.s32.totalorder %s31, 0
    %s34 = sadd.s32 %s33, 1
    %s35 = scalar_select %p32, %s33, %s34
    %p38 = pneg %p32
    %p39 = scmp.eq.s32.totalorder %s9, 3
    %p40 = por %p38, %p39
    %p41 = scmp.ne.s32.totalorder %s33, %s36
    %p42 = scmp.eq.s32.totalorder %s9, 0
    %p43 = por %p41, %p42
    %p44 = scmp.ne.s32.totalorder %s33, %s36
    %p45 = scmp.eq.s32.totalorder %s14, 3
    %p46 = por %p44, %p45
    %p47 = scmp.ne.s32.totalorder %s36, %s37
    %p48 = scmp.eq.s32.totalorder %s14, 0
    %p49 = por %p47, %p48
    %p50 = scmp.ne.s32.totalorder %s36, %s37
    %p51 = scmp.eq.s32.totalorder %s15, 3
    %p52 = por %p50, %p51
    %p54 = scmp.ne.s32.totalorder %s37, %s53
    %p55 = scmp.eq.s32.totalorder %s15, 0
    %p56 = por %p54, %p55
    %s57 = ssub.s32 %s17, %s24
    %p58 = scmp.eq.s32.totalorder %s57, 0
    %s60 = sadd.s32 %s59, 1
    %s61 = scalar_select %p58, %s59, %s60
    %p64 = pneg %p58
    %p65 = scmp.eq.s32.totalorder %s9, 3
    %p66 = por %p64, %p65
    %p67 = scmp.ne.s32.totalorder %s59, %s62
    %p68 = scmp.eq.s32.totalorder %s9, 0
    %p69 = por %p67, %p68
    %p70 = scmp.ne.s32.totalorder %s59, %s62
    %p71 = scmp.eq.s32.totalorder %s14, 3
    %p72 = por %p70, %p71
    %p73 = scmp.ne.s32.totalorder %s62, %s63
    %p74 = scmp.eq.s32.totalorder %s14, 0
    %p75 = por %p73, %p74
    %p76 = scmp.ne.s32.totalorder %s62, %s63
    %p77 = scmp.eq.s32.totalorder %s15, 3
    %p78 = por %p76, %p77
    %p80 = scmp.ne.s32.totalorder %s63, %s79
    %p81 = scmp.eq.s32.totalorder %s15, 0
    %p82 = por %p80, %p81
    %s84 = sadd.s32 %s83, 1
    %p87 = scmp.eq.s32.totalorder %s9, 3
    %p88 = scmp.ne.s32.totalorder %s83, %s85
    %p89 = scmp.eq.s32.totalorder %s9, 0
    %p90 = por %p88, %p89
    %p91 = scmp.ne.s32.totalorder %s83, %s85
    %p92 = scmp.eq.s32.totalorder %s14, 3
    %p93 = por %p91, %p92
    %p94 = scmp.ne.s32.totalorder %s85, %s86
    %p95 = scmp.eq.s32.totalorder %s14, 0
    %p96 = por %p94, %p95
    %p97 = scmp.ne.s32.totalorder %s85, %s86
    %p98 = scmp.eq.s32.totalorder %s15, 3
    %p99 = por %p97, %p98
    %p101 = scmp.ne.s32.totalorder %s86, %s100
    %p102 = scmp.eq.s32.totalorder %s15, 0
    %p103 = por %p101, %p102
    %s104 = ssub.s32 %s16, %s28
    %p105 = scmp.eq.s32.totalorder %s104, 0
    %s107 = sadd.s32 %s106, 1
    %s108 = scalar_select %p105, %s106, %s107
    %p111 = pneg %p105
    %p112 = scmp.eq.s32.totalorder %s9, 3
    %p113 = por %p111, %p112
    %p114 = scmp.ne.s32.totalorder %s106, %s109
    %p115 = scmp.eq.s32.totalorder %s9, 0
    %p116 = por %p114, %p115
    %p117 = scmp.ne.s32.totalorder %s106, %s109
    %p118 = scmp.eq.s32.totalorder %s14, 3
    %p119 = por %p117, %p118
    %p120 = scmp.ne.s32.totalorder %s109, %s110
    %p121 = scmp.eq.s32.totalorder %s14, 0
    %p122 = por %p120, %p121
    %p123 = scmp.ne.s32.totalorder %s109, %s110
    %p124 = scmp.eq.s32.totalorder %s15, 3
    %p125 = por %p123, %p124
    %p127 = scmp.ne.s32.totalorder %s110, %s126
    %p128 = scmp.eq.s32.totalorder %s15, 0
    %p129 = por %p127, %p128
    %p130 = scmp.le.s32.totalorder 1, %s9
    %p131 = scmp.lt.s32.totalorder %s9, 5
    %p132 = pnand %p130, %p131
    %p133 = pneg %p132
    // Predicated region
    $region9: #{discriminator_forward.8} parent=5 // pred_check
      _
    $region10: #{discriminator_forward.8} parent=5 // pred_check_branch
      %135 = sbr.rel (%p132) target = $region12
    $region11: #{discriminator_forward.8} parent=5 // pred_region
      %s136 = ssub.s32 %s9, 1
      // Predicated region
      $region13: #{discriminator_forward.8} parent=11 // pred_check
        %p137 = pneg %p75
      $region14: #{discriminator_forward.8} parent=11 // pred_check_branch
        %139 = sbr.rel (%p137) target = $region16
      $region15: #{discriminator_forward.8} parent=11 // pred_region
        %s140 = smul.u32 16, %s19
        %p141 = scmp.lt.s32.totalorder %s140, 15
        %s142 = scalar_select %p141, %s140, 15
        %s143 = smul.addr %s142, 4
        %s144 = scalar_lea.vmem %s1, %s143
        %s145 = smul.u32 16, %s19
      $region16: #{discriminator_forward.8} parent=11 // pred_fallthru
        _
      // Predicated region
      $region17: #{discriminator_forward.8} parent=11 // pred_check
        %p146 = pneg %p96
      $region18: #{discriminator_forward.8} parent=11 // pred_check_branch
        %148 = sbr.rel (%p146) target = $region20
      $region19: #{discriminator_forward.8} parent=11 // pred_region
        _
      $region20: #{discriminator_forward.8} parent=11 // pred_fallthru
        _
    $region12: #{discriminator_forward.8} parent=5 // pred_fallthru
      _
    %p149 = scmp.lt.s32.totalorder %s9, 4
    // Predicated region
    $region21: #{discriminator_forward.8} parent=5 // pred_check
      %p150 = pneg %p149
    $region22: #{discriminator_forward.8} parent=5 // pred_check_branch
      %152 = sbr.rel (%p150) target = $region24
    $region23: #{discriminator_forward.8} parent=5 // pred_region
      // Predicated region
      $region25: #{discriminator_forward.8} parent=23 // pred_check
        %p153 = pneg %p43
      $region26: #{discriminator_forward.8} parent=23 // pred_check_branch
        %155 = sbr.rel (%p153) target = $region28
      $region27: #{discriminator_forward.8} parent=23 // pred_region
        %s156 = smul.u32 64, %s16
        %p157 = scmp.lt.s32.totalorder %s156, 255
        %s158 = scalar_select %p157, %s156, 255
        %p159 = scmp.lt.s32.totalorder %s17, 0
        %s160 = scalar_select %p159, %s17, 0
        %s161 = sadd.s32 %s160, %s158
        %s162 = smul.addr %s161, 4
        %s163 = scalar_lea.vmem %s0, %s162
        %s164 = smul.u32 64, %s16
      $region28: #{discriminator_forward.8} parent=23 // pred_fallthru
        _
    $region24: #{discriminator_forward.8} parent=5 // pred_fallthru
      _
    %p165 = scmp.le.s32.totalorder 1, %s9
    %p166 = scmp.lt.s32.totalorder %s9, 5
    %p167 = pnand %p165, %p166
    %p168 = pneg %p167
    // Predicated region
    $region29: #{discriminator_forward.8} parent=5 // pred_check
      _
    $region30: #{discriminator_forward.8} parent=5 // pred_check_branch
      %170 = sbr.rel (%p167) target = $region32
    $region31: #{discriminator_forward.8} parent=5 // pred_region
      %s171 = ssub.s32 %s9, 1
      %s172 = smul.u32 64, %s18
      %p173 = scmp.lt.s32.totalorder %s172, 255
      %s174 = scalar_select %p173, %s172, 255
      %p175 = scmp.lt.s32.totalorder %s19, 0
      %s176 = scalar_select %p175, %s19, 0
      %s177 = sadd.s32 %s176, %s174
      %s178 = smul.addr %s177, 4
      %s179 = scalar_lea.vmem %s0, %s178
      %p180 = pneg %p49
      %p181 = pneg %p46
      %s182 = smul.u32 16, %s19
      %p183 = scmp.lt.s32.totalorder %s182, 15
      %s184 = scalar_select %p183, %s182, 15
      %s185 = smul.addr %s184, 4
      %s186 = scalar_lea.vmem %s1, %s185
      %p187 = pneg %p75
      %p188 = pneg %p72
      %p189 = pneg %p96
      %p190 = pneg %p93
      %p191 = pneg %p122
      %p192 = pneg %p119
      %s193 = smul.u32 64, %s18
      %p194 = scmp.lt.s32.totalorder %s193, 255
      %s195 = scalar_select %p194, %s193, 255
      %s196 = smul.addr %s195, 8
      %s197 = scalar_lea.vmem %s3, %s196
      %s198 = smul.u32 64, %s18
      %p199 = scmp.lt.s32.totalorder %s198, 255
      %s200 = scalar_select %p199, %s198, 255
      %p201 = scmp.lt.s32.totalorder %s19, 0
      %s202 = scalar_select %p201, %s19, 0
      %s203 = sadd.s32 %s202, %s200
      %s204 = smul.addr %s203, 4
      %s205 = scalar_lea.vmem %s0, %s204
      %s206 = smul.u32 64, %s18
      %s207 = smul.u32 16, %s19
      %p208 = scmp.lt.s32.totalorder %s207, 15
      %s209 = scalar_select %p208, %s207, 15
      %s210 = smul.addr %s209, 4
      %s211 = scalar_lea.vmem %s1, %s210
      %s212 = smul.u32 16, %s19
      %s213 = smul.u32 64, %s18
      %p214 = scmp.lt.s32.totalorder %s213, 255
      %s215 = scalar_select %p214, %s213, 255
      %s216 = smul.addr %s215, 8
      %s217 = scalar_lea.vmem %s3, %s216
      %s218 = smul.u32 64, %s18
      %p220 = scmp.eq.s32.totalorder %s19, 0
      // Predicated region
      $region33: #{discriminator_forward.8} parent=31 // pred_check
        %p221 = pneg %p220
      $region34: #{discriminator_forward.8} parent=31 // pred_check_branch
        %223 = sbr.rel (%p221) target = $region36
      $region35: #{discriminator_forward.8} parent=31 // pred_region
        %224 = vst [vmem:[#allocation2] sm:$0xff] 0.0
        %225 = vst [vmem:[#allocation2 + $0x8] sm:$0xff] 0.0
        %226 = vst [vmem:[#allocation2 + $0x10] sm:$0xff] 0.0
        %227 = vst [vmem:[#allocation2 + $0x18] sm:$0xff] 0.0
        %228 = vst [vmem:[#allocation2 + $0x20] sm:$0xff] 0.0
        %229 = vst [vmem:[#allocation2 + $0x28] sm:$0xff] 0.0
        %230 = vst [vmem:[#allocation2 + $0x30] sm:$0xff] 0.0
        %231 = vst [vmem:[#allocation2 + $0x38] sm:$0xff] 0.0
        %232 = vst [vmem:[#allocation2 + $0x40] sm:$0xff] 0.0
        %233 = vst [vmem:[#allocation2 + $0x48] sm:$0xff] 0.0
        %234 = vst [vmem:[#allocation2 + $0x50] sm:$0xff] 0.0
        %235 = vst [vmem:[#allocation2 + $0x58] sm:$0xff] 0.0
        %236 = vst [vmem:[#allocation2 + $0x60] sm:$0xff] 0.0
        %237 = vst [vmem:[#allocation2 + $0x68] sm:$0xff] 0.0
        %238 = vst [vmem:[#allocation2 + $0x70] sm:$0xff] 0.0
        %239 = vst [vmem:[#allocation2 + $0x78] sm:$0xff] 0.0
        %240 = vst [vmem:[#allocation2 + $0x80] sm:$0xff] 0.0
        %241 = vst [vmem:[#allocation2 + $0x88] sm:$0xff] 0.0
        %242 = vst [vmem:[#allocation2 + $0x90] sm:$0xff] 0.0
        %243 = vst [vmem:[#allocation2 + $0x98] sm:$0xff] 0.0
        %244 = vst [vmem:[#allocation2 + $0xa0] sm:$0xff] 0.0
        %245 = vst [vmem:[#allocation2 + $0xa8] sm:$0xff] 0.0
        %246 = vst [vmem:[#allocation2 + $0xb0] sm:$0xff] 0.0
        %247 = vst [vmem:[#allocation2 + $0xb8] sm:$0xff] 0.0
        %248 = vst [vmem:[#allocation2 + $0xc0] sm:$0xff] 0.0
        %249 = vst [vmem:[#allocation2 + $0xc8] sm:$0xff] 0.0
        %250 = vst [vmem:[#allocation2 + $0xd0] sm:$0xff] 0.0
        %251 = vst [vmem:[#allocation2 + $0xd8] sm:$0xff] 0.0
        %252 = vst [vmem:[#allocation2 + $0xe0] sm:$0xff] 0.0
        %253 = vst [vmem:[#allocation2 + $0xe8] sm:$0xff] 0.0
        %254 = vst [vmem:[#allocation2 + $0xf0] sm:$0xff] 0.0
        %255 = vst [vmem:[#allocation2 + $0xf8] sm:$0xff] 0.0
        %256 = vst [vmem:[#allocation2 + $0x100] sm:$0xff] 0.0
        %257 = vst [vmem:[#allocation2 + $0x108] sm:$0xff] 0.0
        %258 = vst [vmem:[#allocation2 + $0x110] sm:$0xff] 0.0
        %259 = vst [vmem:[#allocation2 + $0x118] sm:$0xff] 0.0
        %260 = vst [vmem:[#allocation2 + $0x120] sm:$0xff] 0.0
        %261 = vst [vmem:[#allocation2 + $0x128] sm:$0xff] 0.0
        %262 = vst [vmem:[#allocation2 + $0x130] sm:$0xff] 0.0
        %263 = vst [vmem:[#allocation2 + $0x138] sm:$0xff] 0.0
        %264 = vst [vmem:[#allocation2 + $0x140] sm:$0xff] 0.0
        %265 = vst [vmem:[#allocation2 + $0x148] sm:$0xff] 0.0
        %266 = vst [vmem:[#allocation2 + $0x150] sm:$0xff] 0.0
        %267 = vst [vmem:[#allocation2 + $0x158] sm:$0xff] 0.0
        %268 = vst [vmem:[#allocation2 + $0x160] sm:$0xff] 0.0
        %269 = vst [vmem:[#allocation2 + $0x168] sm:$0xff] 0.0
        %270 = vst [vmem:[#allocation2 + $0x170] sm:$0xff] 0.0
        %271 = vst [vmem:[#allocation2 + $0x178] sm:$0xff] 0.0
        %272 = vst [vmem:[#allocation2 + $0x180] sm:$0xff] 0.0
        %273 = vst [vmem:[#allocation2 + $0x188] sm:$0xff] 0.0
        %274 = vst [vmem:[#allocation2 + $0x190] sm:$0xff] 0.0
        %275 = vst [vmem:[#allocation2 + $0x198] sm:$0xff] 0.0
        %276 = vst [vmem:[#allocation2 + $0x1a0] sm:$0xff] 0.0
        %277 = vst [vmem:[#allocation2 + $0x1a8] sm:$0xff] 0.0
        %278 = vst [vmem:[#allocation2 + $0x1b0] sm:$0xff] 0.0
        %279 = vst [vmem:[#allocation2 + $0x1b8] sm:$0xff] 0.0
        %280 = vst [vmem:[#allocation2 + $0x1c0] sm:$0xff] 0.0
        %281 = vst [vmem:[#allocation2 + $0x1c8] sm:$0xff] 0.0
        %282 = vst [vmem:[#allocation2 + $0x1d0] sm:$0xff] 0.0
        %283 = vst [vmem:[#allocation2 + $0x1d8] sm:$0xff] 0.0
        %284 = vst [vmem:[#allocation2 + $0x1e0] sm:$0xff] 0.0
        %285 = vst [vmem:[#allocation2 + $0x1e8] sm:$0xff] 0.0
        %286 = vst [vmem:[#allocation2 + $0x1f0] sm:$0xff] 0.0
        %287 = vst [vmem:[#allocation2 + $0x1f8] sm:$0xff] 0.0
      $region36: #{discriminator_forward.8} parent=31 // pred_fallthru
        _
      %v288 = vld [vmem:[#allocation2] sm:$0xff]
      %v289 = vld [vmem:[#allocation2 + $0x8] sm:$0xff]
      %v290 = vld [vmem:[#allocation2 + $0x10] sm:$0xff]
      %v291 = vld [vmem:[#allocation2 + $0x18] sm:$0xff]
      %v292 = vld [vmem:[#allocation2 + $0x20] sm:$0xff]
      %v293 = vld [vmem:[#allocation2 + $0x28] sm:$0xff]
      %v294 = vld [vmem:[#allocation2 + $0x30] sm:$0xff]
      %v295 = vld [vmem:[#allocation2 + $0x38] sm:$0xff]
      %v296 = vld [vmem:[#allocation2 + $0x40] sm:$0xff]
      %v297 = vld [vmem:[#allocation2 + $0x48] sm:$0xff]
      %v298 = vld [vmem:[#allocation2 + $0x50] sm:$0xff]
      %v299 = vld [vmem:[#allocation2 + $0x58] sm:$0xff]
      %v300 = vld [vmem:[#allocation2 + $0x60] sm:$0xff]
      %v301 = vld [vmem:[#allocation2 + $0x68] sm:$0xff]
      %v302 = vld [vmem:[#allocation2 + $0x70] sm:$0xff]
      %v303 = vld [vmem:[#allocation2 + $0x78] sm:$0xff]
      %v304 = vld [vmem:[#allocation2 + $0x80] sm:$0xff]
      %v305 = vld [vmem:[#allocation2 + $0x88] sm:$0xff]
      %v306 = vld [vmem:[#allocation2 + $0x90] sm:$0xff]
      %v307 = vld [vmem:[#allocation2 + $0x98] sm:$0xff]
      %v308 = vld [vmem:[#allocation2 + $0xa0] sm:$0xff]
      %v309 = vld [vmem:[#allocation2 + $0xa8] sm:$0xff]
      %v310 = vld [vmem:[#allocation2 + $0xb0] sm:$0xff]
      %v311 = vld [vmem:[#allocation2 + $0xb8] sm:$0xff]
      %v312 = vld [vmem:[#allocation2 + $0xc0] sm:$0xff]
      %v313 = vld [vmem:[#allocation2 + $0xc8] sm:$0xff]
      %v314 = vld [vmem:[#allocation2 + $0xd0] sm:$0xff]
      %v315 = vld [vmem:[#allocation2 + $0xd8] sm:$0xff]
      %v316 = vld [vmem:[#allocation2 + $0xe0] sm:$0xff]
      %v317 = vld [vmem:[#allocation2 + $0xe8] sm:$0xff]
      %v318 = vld [vmem:[#allocation2 + $0xf0] sm:$0xff]
      %v319 = vld [vmem:[#allocation2 + $0xf8] sm:$0xff]
      %v320 = vld [vmem:[#allocation2 + $0x100] sm:$0xff]
      %v321 = vld [vmem:[#allocation2 + $0x108] sm:$0xff]
      %v322 = vld [vmem:[#allocation2 + $0x110] sm:$0xff]
      %v323 = vld [vmem:[#allocation2 + $0x118] sm:$0xff]
      %v324 = vld [vmem:[#allocation2 + $0x120] sm:$0xff]
      %v325 = vld [vmem:[#allocation2 + $0x128] sm:$0xff]
      %v326 = vld [vmem:[#allocation2 + $0x130] sm:$0xff]
      %v327 = vld [vmem:[#allocation2 + $0x138] sm:$0xff]
      %v328 = vld [vmem:[#allocation2 + $0x140] sm:$0xff]
      %v329 = vld [vmem:[#allocation2 + $0x148] sm:$0xff]
      %v330 = vld [vmem:[#allocation2 + $0x150] sm:$0xff]
      %v331 = vld [vmem:[#allocation2 + $0x158] sm:$0xff]
      %v332 = vld [vmem:[#allocation2 + $0x160] sm:$0xff]
      %v333 = vld [vmem:[#allocation2 + $0x168] sm:$0xff]
      %v334 = vld [vmem:[#allocation2 + $0x170] sm:$0xff]
      %v335 = vld [vmem:[#allocation2 + $0x178] sm:$0xff]
      %v336 = vld [vmem:[#allocation2 + $0x180] sm:$0xff]
      %v337 = vld [vmem:[#allocation2 + $0x188] sm:$0xff]
      %v338 = vld [vmem:[#allocation2 + $0x190] sm:$0xff]
      %v339 = vld [vmem:[#allocation2 + $0x198] sm:$0xff]
      %v340 = vld [vmem:[#allocation2 + $0x1a0] sm:$0xff]
      %v341 = vld [vmem:[#allocation2 + $0x1a8] sm:$0xff]
      %v342 = vld [vmem:[#allocation2 + $0x1b0] sm:$0xff]
      %v343 = vld [vmem:[#allocation2 + $0x1b8] sm:$0xff]
      %v344 = vld [vmem:[#allocation2 + $0x1c0] sm:$0xff]
      %v345 = vld [vmem:[#allocation2 + $0x1c8] sm:$0xff]
      %v346 = vld [vmem:[#allocation2 + $0x1d0] sm:$0xff]
      %v347 = vld [vmem:[#allocation2 + $0x1d8] sm:$0xff]
      %v348 = vld [vmem:[#allocation2 + $0x1e0] sm:$0xff]
      %v349 = vld [vmem:[#allocation2 + $0x1e8] sm:$0xff]
      %v350 = vld [vmem:[#allocation2 + $0x1f0] sm:$0xff]
      %v351 = vld [vmem:[#allocation2 + $0x1f8] sm:$0xff]
      %v352 = vld [vmem:[%s205] sm:$0xf]
      %v353 = vld [vmem:[%s205 + $0x4] sm:$0xf]
      %v354 = vld [vmem:[%s205 + $0x8] sm:$0xf]
      %v355 = vld [vmem:[%s205 + $0xc] sm:$0xf]
      %v356 = vld [vmem:[%s205 + $0x10] sm:$0xf]
      %v357 = vld [vmem:[%s205 + $0x14] sm:$0xf]
      %v358 = vld [vmem:[%s205 + $0x18] sm:$0xf]
      %v359 = vld [vmem:[%s205 + $0x1c] sm:$0xf]
      %v360 = vld [vmem:[%s205 + $0x20] sm:$0xf]
      %v361 = vld [vmem:[%s205 + $0x24] sm:$0xf]
      %v362 = vld [vmem:[%s205 + $0x28] sm:$0xf]
      %v363 = vld [vmem:[%s205 + $0x2c] sm:$0xf]
      %v364 = vld [vmem:[%s205 + $0x30] sm:$0xf]
      %v365 = vld [vmem:[%s205 + $0x34] sm:$0xf]
      %v366 = vld [vmem:[%s205 + $0x38] sm:$0xf]
      %v367 = vld [vmem:[%s205 + $0x3c] sm:$0xf]
      %v368 = vld [vmem:[%s205 + $0x40] sm:$0xf]
      %v369 = vld [vmem:[%s205 + $0x44] sm:$0xf]
      %v370 = vld [vmem:[%s205 + $0x48] sm:$0xf]
      %v371 = vld [vmem:[%s205 + $0x4c] sm:$0xf]
      %v372 = vld [vmem:[%s205 + $0x50] sm:$0xf]
      %v373 = vld [vmem:[%s205 + $0x54] sm:$0xf]
      %v374 = vld [vmem:[%s205 + $0x58] sm:$0xf]
      %v375 = vld [vmem:[%s205 + $0x5c] sm:$0xf]
      %v376 = vld [vmem:[%s205 + $0x60] sm:$0xf]
      %v377 = vld [vmem:[%s205 + $0x64] sm:$0xf]
      %v378 = vld [vmem:[%s205 + $0x68] sm:$0xf]
      %v379 = vld [vmem:[%s205 + $0x6c] sm:$0xf]
      %v380 = vld [vmem:[%s205 + $0x70] sm:$0xf]
      %v381 = vld [vmem:[%s205 + $0x74] sm:$0xf]
      %v382 = vld [vmem:[%s205 + $0x78] sm:$0xf]
      %v383 = vld [vmem:[%s205 + $0x7c] sm:$0xf]
      %v384 = vld [vmem:[%s205 + $0x80] sm:$0xf]
      %v385 = vld [vmem:[%s205 + $0x84] sm:$0xf]
      %v386 = vld [vmem:[%s205 + $0x88] sm:$0xf]
      %v387 = vld [vmem:[%s205 + $0x8c] sm:$0xf]
      %v388 = vld [vmem:[%s205 + $0x90] sm:$0xf]
      %v389 = vld [vmem:[%s205 + $0x94] sm:$0xf]
      %v390 = vld [vmem:[%s205 + $0x98] sm:$0xf]
      %v391 = vld [vmem:[%s205 + $0x9c] sm:$0xf]
      %v392 = vld [vmem:[%s205 + $0xa0] sm:$0xf]
      %v393 = vld [vmem:[%s205 + $0xa4] sm:$0xf]
      %v394 = vld [vmem:[%s205 + $0xa8] sm:$0xf]
      %v395 = vld [vmem:[%s205 + $0xac] sm:$0xf]
      %v396 = vld [vmem:[%s205 + $0xb0] sm:$0xf]
      %v397 = vld [vmem:[%s205 + $0xb4] sm:$0xf]
      %v398 = vld [vmem:[%s205 + $0xb8] sm:$0xf]
      %v399 = vld [vmem:[%s205 + $0xbc] sm:$0xf]
      %v400 = vld [vmem:[%s205 + $0xc0] sm:$0xf]
      %v401 = vld [vmem:[%s205 + $0xc4] sm:$0xf]
      %v402 = vld [vmem:[%s205 + $0xc8] sm:$0xf]
      %v403 = vld [vmem:[%s205 + $0xcc] sm:$0xf]
      %v404 = vld [vmem:[%s205 + $0xd0] sm:$0xf]
      %v405 = vld [vmem:[%s205 + $0xd4] sm:$0xf]
      %v406 = vld [vmem:[%s205 + $0xd8] sm:$0xf]
      %v407 = vld [vmem:[%s205 + $0xdc] sm:$0xf]
      %v408 = vld [vmem:[%s205 + $0xe0] sm:$0xf]
      %v409 = vld [vmem:[%s205 + $0xe4] sm:$0xf]
      %v410 = vld [vmem:[%s205 + $0xe8] sm:$0xf]
      %v411 = vld [vmem:[%s205 + $0xec] sm:$0xf]
      %v412 = vld [vmem:[%s205 + $0xf0] sm:$0xf]
      %v413 = vld [vmem:[%s205 + $0xf4] sm:$0xf]
      %v414 = vld [vmem:[%s205 + $0xf8] sm:$0xf]
      %v415 = vld [vmem:[%s205 + $0xfc] sm:$0xf]
      %v416 = vld [vmem:[%s211] sm:$0xf]
      %v417 = vld [vmem:[%s211 + $0x4] sm:$0xf]
      %v418 = vld [vmem:[%s211 + $0x8] sm:$0xf]
      %v419 = vld [vmem:[%s211 + $0xc] sm:$0xf]
      %v420 = vld [vmem:[%s211 + $0x10] sm:$0xf]
      %v421 = vld [vmem:[%s211 + $0x14] sm:$0xf]
      %v422 = vld [vmem:[%s211 + $0x18] sm:$0xf]
      %v423 = vld [vmem:[%s211 + $0x1c] sm:$0xf]
      %v424 = vld [vmem:[%s211 + $0x20] sm:$0xf]
      %v425 = vld [vmem:[%s211 + $0x24] sm:$0xf]
      %v426 = vld [vmem:[%s211 + $0x28] sm:$0xf]
      %v427 = vld [vmem:[%s211 + $0x2c] sm:$0xf]
      %v428 = vld [vmem:[%s211 + $0x30] sm:$0xf]
      %v429 = vld [vmem:[%s211 + $0x34] sm:$0xf]
      %v430 = vld [vmem:[%s211 + $0x38] sm:$0xf]
      %v431 = vld [vmem:[%s211 + $0x3c] sm:$0xf]
      %v496 = vunpack.c.l.b16 %v352
      %v497 = vunpack.c.l.b16 %v353
      %v498 = vunpack.c.l.b16 %v354
      %v499 = vunpack.c.l.b16 %v355
      %v500 = vunpack.c.l.b16 %v356
      %v501 = vunpack.c.l.b16 %v357
      %v502 = vunpack.c.l.b16 %v358
      %v503 = vunpack.c.l.b16 %v359
      %v504 = vunpack.c.l.b16 %v360
      %v505 = vunpack.c.l.b16 %v361
      %v506 = vunpack.c.l.b16 %v362
      %v507 = vunpack.c.l.b16 %v363
      %v508 = vunpack.c.l.b16 %v364
      %v509 = vunpack.c.l.b16 %v365
      %v510 = vunpack.c.l.b16 %v366
      %v511 = vunpack.c.l.b16 %v367
      %v512 = vunpack.c.l.b16 %v368
      %v513 = vunpack.c.l.b16 %v369
      %v514 = vunpack.c.l.b16 %v370
      %v515 = vunpack.c.l.b16 %v371
      %v516 = vunpack.c.l.b16 %v372
      %v517 = vunpack.c.l.b16 %v373
      %v518 = vunpack.c.l.b16 %v374
      %v519 = vunpack.c.l.b16 %v375
      %v520 = vunpack.c.l.b16 %v376
      %v521 = vunpack.c.l.b16 %v377
      %v522 = vunpack.c.l.b16 %v378
      %v523 = vunpack.c.l.b16 %v379
      %v524 = vunpack.c.l.b16 %v380
      %v525 = vunpack.c.l.b16 %v381
      %v526 = vunpack.c.l.b16 %v382
      %v527 = vunpack.c.l.b16 %v383
      %v528 = vunpack.c.l.b16 %v384
      %v529 = vunpack.c.l.b16 %v385
      %v530 = vunpack.c.l.b16 %v386
      %v531 = vunpack.c.l.b16 %v387
      %v532 = vunpack.c.l.b16 %v388
      %v533 = vunpack.c.l.b16 %v389
      %v534 = vunpack.c.l.b16 %v390
      %v535 = vunpack.c.l.b16 %v391
      %v536 = vunpack.c.l.b16 %v392
      %v537 = vunpack.c.l.b16 %v393
      %v538 = vunpack.c.l.b16 %v394
      %v539 = vunpack.c.l.b16 %v395
      %v540 = vunpack.c.l.b16 %v396
      %v541 = vunpack.c.l.b16 %v397
      %v542 = vunpack.c.l.b16 %v398
      %v543 = vunpack.c.l.b16 %v399
      %v544 = vunpack.c.l.b16 %v400
      %v545 = vunpack.c.l.b16 %v401
      %v546 = vunpack.c.l.b16 %v402
      %v547 = vunpack.c.l.b16 %v403
      %v548 = vunpack.c.l.b16 %v404
      %v549 = vunpack.c.l.b16 %v405
      %v550 = vunpack.c.l.b16 %v406
      %v551 = vunpack.c.l.b16 %v407
      %v552 = vunpack.c.l.b16 %v408
      %v553 = vunpack.c.l.b16 %v409
      %v554 = vunpack.c.l.b16 %v410
      %v555 = vunpack.c.l.b16 %v411
      %v556 = vunpack.c.l.b16 %v412
      %v557 = vunpack.c.l.b16 %v413
      %v558 = vunpack.c.l.b16 %v414
      %v559 = vunpack.c.l.b16 %v415
      %v560 = vpack.c.b16 %v497, %v496
      %v561 = vpack.c.b16 %v499, %v498
      %v562 = vpack.c.b16 %v501, %v500
      %v563 = vpack.c.b16 %v503, %v502
      %v564 = vpack.c.b16 %v505, %v504
      %v565 = vpack.c.b16 %v507, %v506
      %v566 = vpack.c.b16 %v509, %v508
      %v567 = vpack.c.b16 %v511, %v510
      %v568 = vpack.c.b16 %v513, %v512
      %v569 = vpack.c.b16 %v515, %v514
      %v570 = vpack.c.b16 %v517, %v516
      %v571 = vpack.c.b16 %v519, %v518
      %v572 = vpack.c.b16 %v521, %v520
      %v573 = vpack.c.b16 %v523, %v522
      %v574 = vpack.c.b16 %v525, %v524
      %v575 = vpack.c.b16 %v527, %v526
      %v576 = vpack.c.b16 %v529, %v528
      %v577 = vpack.c.b16 %v531, %v530
      %v578 = vpack.c.b16 %v533, %v532
      %v579 = vpack.c.b16 %v535, %v534
      %v580 = vpack.c.b16 %v537, %v536
      %v581 = vpack.c.b16 %v539, %v538
      %v582 = vpack.c.b16 %v541, %v540
      %v583 = vpack.c.b16 %v543, %v542
      %v584 = vpack.c.b16 %v545, %v544
      %v585 = vpack.c.b16 %v547, %v546
      %v586 = vpack.c.b16 %v549, %v548
      %v587 = vpack.c.b16 %v551, %v550
      %v588 = vpack.c.b16 %v553, %v552
      %v589 = vpack.c.b16 %v555, %v554
      %v590 = vpack.c.b16 %v557, %v556
      %v591 = vpack.c.b16 %v559, %v558
      %v640 = vunpack.c.l.b16 %v416
      %v641 = vunpack.c.l.b16 %v417
      %v642 = vunpack.c.l.b16 %v418
      %v643 = vunpack.c.l.b16 %v419
      %v644 = vunpack.c.l.b16 %v420
      %v645 = vunpack.c.l.b16 %v421
      %v646 = vunpack.c.l.b16 %v422
      %v647 = vunpack.c.l.b16 %v423
      %v648 = vunpack.c.l.b16 %v424
      %v649 = vunpack.c.l.b16 %v425
      %v650 = vunpack.c.l.b16 %v426
      %v651 = vunpack.c.l.b16 %v427
      %v652 = vunpack.c.l.b16 %v428
      %v653 = vunpack.c.l.b16 %v429
      %v654 = vunpack.c.l.b16 %v430
      %v655 = vunpack.c.l.b16 %v431
      %v656 = vpack.c.b16 %v641, %v640
      %v657 = vpack.c.b16 %v643, %v642
      %v658 = vpack.c.b16 %v645, %v644
      %v659 = vpack.c.b16 %v647, %v646
      %v660 = vpack.c.b16 %v649, %v648
      %v661 = vpack.c.b16 %v651, %v650
      %v662 = vpack.c.b16 %v653, %v652
      %v663 = vpack.c.b16 %v655, %v654
      %672 = vmatprep.subr.bf16.mxu0 0
      %673 = vmatpush1.bf16.msra.mxu0 %v663
      %674 = vmatprep.subr.bf16.mxu0 0
      %675 = vmatpush1.bf16.msra.mxu0 %v662
      %676 = vmatprep.subr.bf16.mxu0 0
      %677 = vmatpush1.bf16.msra.mxu0 %v661
      %678 = vmatprep.subr.bf16.mxu0 0
      %679 = vmatpush1.bf16.msra.mxu0 %v660
      %680 = vmatprep.subr.bf16.mxu0 0
      %681 = vmatpush1.bf16.msra.mxu0 %v659
      %682 = vmatprep.subr.bf16.mxu0 0
      %683 = vmatpush1.bf16.msra.mxu0 %v658
      %684 = vmatprep.subr.bf16.mxu0 0
      %685 = vmatpush1.bf16.msra.mxu0 %v657
      %686 = vmatprep.subr.bf16.mxu0 0
      %687 = vmatpush1.bf16.msra.mxu0 %v656
      %688 = vmatprep.subr.bf16.mxu0 0
      %689 = vmatpush2.bf16.msra.mxu0 0
      %690 = vmatprep.subr.bf16.mxu0 0
      %691 = vmatpush2.bf16.msra.mxu0 0
      %692 = vmatprep.subr.bf16.mxu0 0
      %693 = vmatpush2.bf16.msra.mxu0 0
      %694 = vmatprep.subr.bf16.mxu0 0
      %695 = vmatpush2.bf16.msra.mxu0 0
      %696 = vmatprep.subr.bf16.mxu0 0
      %697 = vmatpush2.bf16.msra.mxu0 0
      %698 = vmatprep.subr.bf16.mxu0 0
      %699 = vmatpush2.bf16.msra.mxu0 0
      %700 = vmatprep.subr.bf16.mxu0 0
      %701 = vmatpush2.bf16.msra.mxu0 0
      %702 = vmatprep.subr.bf16.mxu0 0
      %703 = vmatpush2.bf16.msra.mxu0 0
      %704 = vmatprep.mubr.bf16.mxu0 0
      %705 = vmatmul.mubr.bf16.gmra.mxu0 %v560
      %v706 = vpop.f32.mrf.mxu0
      %v707 = vadd.f32 0.0, %v706
      %v708 = vpop.f32.mrf.mxu0
      %v709 = vpop.f32.mrf.mxu0
      %v710 = vadd.f32 0.0, %v709
      %v711 = vpop.f32.mrf.mxu0
      %712 = vmatprep.mubr.bf16.mxu0 0
      %713 = vmatmul.mubr.bf16.gmra.mxu0 %v561
      %v714 = vpop.f32.mrf.mxu0
      %v715 = vadd.f32 0.0, %v714
      %v716 = vpop.f32.mrf.mxu0
      %v717 = vpop.f32.mrf.mxu0
      %v718 = vadd.f32 0.0, %v717
      %v719 = vpop.f32.mrf.mxu0
      %720 = vmatprep.mubr.bf16.mxu0 0
      %721 = vmatmul.mubr.bf16.gmra.mxu0 %v562
      %v722 = vpop.f32.mrf.mxu0
      %v723 = vadd.f32 0.0, %v722
      %v724 = vpop.f32.mrf.mxu0
      %v725 = vpop.f32.mrf.mxu0
      %v726 = vadd.f32 0.0, %v725
      %v727 = vpop.f32.mrf.mxu0
      %728 = vmatprep.mubr.bf16.mxu0 0
      %729 = vmatmul.mubr.bf16.gmra.mxu0 %v563
      %v730 = vpop.f32.mrf.mxu0
      %v731 = vadd.f32 0.0, %v730
      %v732 = vpop.f32.mrf.mxu0
      %v733 = vpop.f32.mrf.mxu0
      %v734 = vadd.f32 0.0, %v733
      %v735 = vpop.f32.mrf.mxu0
      %736 = vmatprep.mubr.bf16.mxu0 0
      %737 = vmatmul.mubr.bf16.gmra.mxu0 %v564
      %v738 = vpop.f32.mrf.mxu0
      %v739 = vadd.f32 0.0, %v738
      %v740 = vpop.f32.mrf.mxu0
      %v741 = vpop.f32.mrf.mxu0
      %v742 = vadd.f32 0.0, %v741
      %v743 = vpop.f32.mrf.mxu0
      %744 = vmatprep.mubr.bf16.mxu0 0
      %745 = vmatmul.mubr.bf16.gmra.mxu0 %v565
      %v746 = vpop.f32.mrf.mxu0
      %v747 = vadd.f32 0.0, %v746
      %v748 = vpop.f32.mrf.mxu0
      %v749 = vpop.f32.mrf.mxu0
      %v750 = vadd.f32 0.0, %v749
      %v751 = vpop.f32.mrf.mxu0
      %752 = vmatprep.mubr.bf16.mxu0 0
      %753 = vmatmul.mubr.bf16.gmra.mxu0 %v566
      %v754 = vpop.f32.mrf.mxu0
      %v755 = vadd.f32 0.0, %v754
      %v756 = vpop.f32.mrf.mxu0
      %v757 = vpop.f32.mrf.mxu0
      %v758 = vadd.f32 0.0, %v757
      %v759 = vpop.f32.mrf.mxu0
      %760 = vmatprep.mubr.bf16.mxu0 0
      %761 = vmatmul.mubr.bf16.gmra.mxu0 %v567
      %v762 = vpop.f32.mrf.mxu0
      %v763 = vadd.f32 0.0, %v762
      %v764 = vpop.f32.mrf.mxu0
      %v765 = vpop.f32.mrf.mxu0
      %v766 = vadd.f32 0.0, %v765
      %v767 = vpop.f32.mrf.mxu0
      %768 = vmatprep.mubr.bf16.mxu0 0
      %769 = vmatmul.mubr.bf16.gmra.mxu0 %v568
      %v770 = vpop.f32.mrf.mxu0
      %v771 = vadd.f32 0.0, %v770
      %v772 = vpop.f32.mrf.mxu0
      %v773 = vpop.f32.mrf.mxu0
      %v774 = vadd.f32 0.0, %v773
      %v775 = vpop.f32.mrf.mxu0
      %776 = vmatprep.mubr.bf16.mxu0 0
      %777 = vmatmul.mubr.bf16.gmra.mxu0 %v569
      %v778 = vpop.f32.mrf.mxu0
      %v779 = vadd.f32 0.0, %v778
      %v780 = vpop.f32.mrf.mxu0
      %v781 = vpop.f32.mrf.mxu0
      %v782 = vadd.f32 0.0, %v781
      %v783 = vpop.f32.mrf.mxu0
      %784 = vmatprep.mubr.bf16.mxu0 0
      %785 = vmatmul.mubr.bf16.gmra.mxu0 %v570
      %v786 = vpop.f32.mrf.mxu0
      %v787 = vadd.f32 0.0, %v786
      %v788 = vpop.f32.mrf.mxu0
      %v789 = vpop.f32.mrf.mxu0
      %v790 = vadd.f32 0.0, %v789
      %v791 = vpop.f32.mrf.mxu0
      %792 = vmatprep.mubr.bf16.mxu0 0
      %793 = vmatmul.mubr.bf16.gmra.mxu0 %v571
      %v794 = vpop.f32.mrf.mxu0
      %v795 = vadd.f32 0.0, %v794
      %v796 = vpop.f32.mrf.mxu0
      %v797 = vpop.f32.mrf.mxu0
      %v798 = vadd.f32 0.0, %v797
      %v799 = vpop.f32.mrf.mxu0
      %800 = vmatprep.mubr.bf16.mxu0 0
      %801 = vmatmul.mubr.bf16.gmra.mxu0 %v572
      %v802 = vpop.f32.mrf.mxu0
      %v803 = vadd.f32 0.0, %v802
      %v804 = vpop.f32.mrf.mxu0
      %v805 = vpop.f32.mrf.mxu0
      %v806 = vadd.f32 0.0, %v805
      %v807 = vpop.f32.mrf.mxu0
      %808 = vmatprep.mubr.bf16.mxu0 0
      %809 = vmatmul.mubr.bf16.gmra.mxu0 %v573
      %v810 = vpop.f32.mrf.mxu0
      %v811 = vadd.f32 0.0, %v810
      %v812 = vpop.f32.mrf.mxu0
      %v813 = vpop.f32.mrf.mxu0
      %v814 = vadd.f32 0.0, %v813
      %v815 = vpop.f32.mrf.mxu0
      %816 = vmatprep.mubr.bf16.mxu0 0
      %817 = vmatmul.mubr.bf16.gmra.mxu0 %v574
      %v818 = vpop.f32.mrf.mxu0
      %v819 = vadd.f32 0.0, %v818
      %v820 = vpop.f32.mrf.mxu0
      %v821 = vpop.f32.mrf.mxu0
      %v822 = vadd.f32 0.0, %v821
      %v823 = vpop.f32.mrf.mxu0
      %824 = vmatprep.mubr.bf16.mxu0 0
      %825 = vmatmul.mubr.bf16.gmra.mxu0 %v575
      %v826 = vpop.f32.mrf.mxu0
      %v827 = vadd.f32 0.0, %v826
      %v828 = vpop.f32.mrf.mxu0
      %v829 = vpop.f32.mrf.mxu0
      %v830 = vadd.f32 0.0, %v829
      %v831 = vpop.f32.mrf.mxu0
      %832 = vmatprep.mubr.bf16.mxu0 0
      %833 = vmatmul.mubr.bf16.gmra.mxu0 %v576
      %v834 = vpop.f32.mrf.mxu0
      %v835 = vadd.f32 0.0, %v834
      %v836 = vpop.f32.mrf.mxu0
      %v837 = vpop.f32.mrf.mxu0
      %v838 = vadd.f32 0.0, %v837
      %v839 = vpop.f32.mrf.mxu0
      %840 = vmatprep.mubr.bf16.mxu0 0
      %841 = vmatmul.mubr.bf16.gmra.mxu0 %v577
      %v842 = vpop.f32.mrf.mxu0
      %v843 = vadd.f32 0.0, %v842
      %v844 = vpop.f32.mrf.mxu0
      %v845 = vpop.f32.mrf.mxu0
      %v846 = vadd.f32 0.0, %v845
      %v847 = vpop.f32.mrf.mxu0
      %848 = vmatprep.mubr.bf16.mxu0 0
      %849 = vmatmul.mubr.bf16.gmra.mxu0 %v578
      %v850 = vpop.f32.mrf.mxu0
      %v851 = vadd.f32 0.0, %v850
      %v852 = vpop.f32.mrf.mxu0
      %v853 = vpop.f32.mrf.mxu0
      %v854 = vadd.f32 0.0, %v853
      %v855 = vpop.f32.mrf.mxu0
      %856 = vmatprep.mubr.bf16.mxu0 0
      %857 = vmatmul.mubr.bf16.gmra.mxu0 %v579
      %v858 = vpop.f32.mrf.mxu0
      %v859 = vadd.f32 0.0, %v858
      %v860 = vpop.f32.mrf.mxu0
      %v861 = vpop.f32.mrf.mxu0
      %v862 = vadd.f32 0.0, %v861
      %v863 = vpop.f32.mrf.mxu0
      %864 = vmatprep.mubr.bf16.mxu0 0
      %865 = vmatmul.mubr.bf16.gmra.mxu0 %v580
      %v866 = vpop.f32.mrf.mxu0
      %v867 = vadd.f32 0.0, %v866
      %v868 = vpop.f32.mrf.mxu0
      %v869 = vpop.f32.mrf.mxu0
      %v870 = vadd.f32 0.0, %v869
      %v871 = vpop.f32.mrf.mxu0
      %872 = vmatprep.mubr.bf16.mxu0 0
      %873 = vmatmul.mubr.bf16.gmra.mxu0 %v581
      %v874 = vpop.f32.mrf.mxu0
      %v875 = vadd.f32 0.0, %v874
      %v876 = vpop.f32.mrf.mxu0
      %v877 = vpop.f32.mrf.mxu0
      %v878 = vadd.f32 0.0, %v877
      %v879 = vpop.f32.mrf.mxu0
      %880 = vmatprep.mubr.bf16.mxu0 0
      %881 = vmatmul.mubr.bf16.gmra.mxu0 %v582
      %v882 = vpop.f32.mrf.mxu0
      %v883 = vadd.f32 0.0, %v882
      %v884 = vpop.f32.mrf.mxu0
      %v885 = vpop.f32.mrf.mxu0
      %v886 = vadd.f32 0.0, %v885
      %v887 = vpop.f32.mrf.mxu0
      %888 = vmatprep.mubr.bf16.mxu0 0
      %889 = vmatmul.mubr.bf16.gmra.mxu0 %v583
      %v890 = vpop.f32.mrf.mxu0
      %v891 = vadd.f32 0.0, %v890
      %v892 = vpop.f32.mrf.mxu0
      %v893 = vpop.f32.mrf.mxu0
      %v894 = vadd.f32 0.0, %v893
      %v895 = vpop.f32.mrf.mxu0
      %896 = vmatprep.mubr.bf16.mxu0 0
      %897 = vmatmul.mubr.bf16.gmra.mxu0 %v584
      %v898 = vpop.f32.mrf.mxu0
      %v899 = vadd.f32 0.0, %v898
      %v900 = vpop.f32.mrf.mxu0
      %v901 = vpop.f32.mrf.mxu0
      %v902 = vadd.f32 0.0, %v901
      %v903 = vpop.f32.mrf.mxu0
      %904 = vmatprep.mubr.bf16.mxu0 0
      %905 = vmatmul.mubr.bf16.gmra.mxu0 %v585
      %v906 = vpop.f32.mrf.mxu0
      %v907 = vadd.f32 0.0, %v906
      %v908 = vpop.f32.mrf.mxu0
      %v909 = vpop.f32.mrf.mxu0
      %v910 = vadd.f32 0.0, %v909
      %v911 = vpop.f32.mrf.mxu0
      %912 = vmatprep.mubr.bf16.mxu0 0
      %913 = vmatmul.mubr.bf16.gmra.mxu0 %v586
      %v914 = vpop.f32.mrf.mxu0
      %v915 = vadd.f32 0.0, %v914
      %v916 = vpop.f32.mrf.mxu0
      %v917 = vpop.f32.mrf.mxu0
      %v918 = vadd.f32 0.0, %v917
      %v919 = vpop.f32.mrf.mxu0
      %920 = vmatprep.mubr.bf16.mxu0 0
      %921 = vmatmul.mubr.bf16.gmra.mxu0 %v587
      %v922 = vpop.f32.mrf.mxu0
      %v923 = vadd.f32 0.0, %v922
      %v924 = vpop.f32.mrf.mxu0
      %v925 = vpop.f32.mrf.mxu0
      %v926 = vadd.f32 0.0, %v925
      %v927 = vpop.f32.mrf.mxu0
      %928 = vmatprep.mubr.bf16.mxu0 0
      %929 = vmatmul.mubr.bf16.gmra.mxu0 %v588
      %v930 = vpop.f32.mrf.mxu0
      %v931 = vadd.f32 0.0, %v930
      %v932 = vpop.f32.mrf.mxu0
      %v933 = vpop.f32.mrf.mxu0
      %v934 = vadd.f32 0.0, %v933
      %v935 = vpop.f32.mrf.mxu0
      %936 = vmatprep.mubr.bf16.mxu0 0
      %937 = vmatmul.mubr.bf16.gmra.mxu0 %v589
      %v938 = vpop.f32.mrf.mxu0
      %v939 = vadd.f32 0.0, %v938
      %v940 = vpop.f32.mrf.mxu0
      %v941 = vpop.f32.mrf.mxu0
      %v942 = vadd.f32 0.0, %v941
      %v943 = vpop.f32.mrf.mxu0
      %944 = vmatprep.mubr.bf16.mxu0 0
      %945 = vmatmul.mubr.bf16.gmra.mxu0 %v590
      %v946 = vpop.f32.mrf.mxu0
      %v947 = vadd.f32 0.0, %v946
      %v948 = vpop.f32.mrf.mxu0
      %v949 = vpop.f32.mrf.mxu0
      %v950 = vadd.f32 0.0, %v949
      %v951 = vpop.f32.mrf.mxu0
      %952 = vmatprep.mubr.bf16.mxu0 0
      %953 = vmatmul.mubr.bf16.gmra.mxu0 %v591
      %v954 = vpop.f32.mrf.mxu0
      %v955 = vadd.f32 0.0, %v954
      %v956 = vpop.f32.mrf.mxu0
      %v957 = vpop.f32.mrf.mxu0
      %v958 = vadd.f32 0.0, %v957
      %v959 = vpop.f32.mrf.mxu0
      %960 = vdwg.mxu0
      %v961 = vadd.f32 %v288, %v707
      %v962 = vadd.f32 %v289, %v710
      %v963 = vadd.f32 %v290, %v715
      %v964 = vadd.f32 %v291, %v718
      %v965 = vadd.f32 %v292, %v723
      %v966 = vadd.f32 %v293, %v726
      %v967 = vadd.f32 %v294, %v731
      %v968 = vadd.f32 %v295, %v734
      %v969 = vadd.f32 %v296, %v739
      %v970 = vadd.f32 %v297, %v742
      %v971 = vadd.f32 %v298, %v747
      %v972 = vadd.f32 %v299, %v750
      %v973 = vadd.f32 %v300, %v755
      %v974 = vadd.f32 %v301, %v758
      %v975 = vadd.f32 %v302, %v763
      %v976 = vadd.f32 %v303, %v766
      %v977 = vadd.f32 %v304, %v771
      %v978 = vadd.f32 %v305, %v774
      %v979 = vadd.f32 %v306, %v779
      %v980 = vadd.f32 %v307, %v782
      %v981 = vadd.f32 %v308, %v787
      %v982 = vadd.f32 %v309, %v790
      %v983 = vadd.f32 %v310, %v795
      %v984 = vadd.f32 %v311, %v798
      %v985 = vadd.f32 %v312, %v803
      %v986 = vadd.f32 %v313, %v806
      %v987 = vadd.f32 %v314, %v811
      %v988 = vadd.f32 %v315, %v814
      %v989 = vadd.f32 %v316, %v819
      %v990 = vadd.f32 %v317, %v822
      %v991 = vadd.f32 %v318, %v827
      %v992 = vadd.f32 %v319, %v830
      %v993 = vadd.f32 %v320, %v835
      %v994 = vadd.f32 %v321, %v838
      %v995 = vadd.f32 %v322, %v843
      %v996 = vadd.f32 %v323, %v846
      %v997 = vadd.f32 %v324, %v851
      %v998 = vadd.f32 %v325, %v854
      %v999 = vadd.f32 %v326, %v859
      %v1000 = vadd.f32 %v327, %v862
      %v1001 = vadd.f32 %v328, %v867
      %v1002 = vadd.f32 %v329, %v870
      %v1003 = vadd.f32 %v330, %v875
      %v1004 = vadd.f32 %v331, %v878
      %v1005 = vadd.f32 %v332, %v883
      %v1006 = vadd.f32 %v333, %v886
      %v1007 = vadd.f32 %v334, %v891
      %v1008 = vadd.f32 %v335, %v894
      %v1009 = vadd.f32 %v336, %v899
      %v1010 = vadd.f32 %v337, %v902
      %v1011 = vadd.f32 %v338, %v907
      %v1012 = vadd.f32 %v339, %v910
      %v1013 = vadd.f32 %v340, %v915
      %v1014 = vadd.f32 %v341, %v918
      %v1015 = vadd.f32 %v342, %v923
      %v1016 = vadd.f32 %v343, %v926
      %v1017 = vadd.f32 %v344, %v931
      %v1018 = vadd.f32 %v345, %v934
      %v1019 = vadd.f32 %v346, %v939
      %v1020 = vadd.f32 %v347, %v942
      %v1021 = vadd.f32 %v348, %v947
      %v1022 = vadd.f32 %v349, %v950
      %v1023 = vadd.f32 %v350, %v955
      %v1024 = vadd.f32 %v351, %v958
      %1025 = vst [vmem:[#allocation2] sm:$0xff] %v961
      %1026 = vst [vmem:[#allocation2 + $0x8] sm:$0xff] %v962
      %1027 = vst [vmem:[#allocation2 + $0x10] sm:$0xff] %v963
      %1028 = vst [vmem:[#allocation2 + $0x18] sm:$0xff] %v964
      %1029 = vst [vmem:[#allocation2 + $0x20] sm:$0xff] %v965
      %1030 = vst [vmem:[#allocation2 + $0x28] sm:$0xff] %v966
      %1031 = vst [vmem:[#allocation2 + $0x30] sm:$0xff] %v967
      %1032 = vst [vmem:[#allocation2 + $0x38] sm:$0xff] %v968
      %1033 = vst [vmem:[#allocation2 + $0x40] sm:$0xff] %v969
      %1034 = vst [vmem:[#allocation2 + $0x48] sm:$0xff] %v970
      %1035 = vst [vmem:[#allocation2 + $0x50] sm:$0xff] %v971
      %1036 = vst [vmem:[#allocation2 + $0x58] sm:$0xff] %v972
      %1037 = vst [vmem:[#allocation2 + $0x60] sm:$0xff] %v973
      %1038 = vst [vmem:[#allocation2 + $0x68] sm:$0xff] %v974
      %1039 = vst [vmem:[#allocation2 + $0x70] sm:$0xff] %v975
      %1040 = vst [vmem:[#allocation2 + $0x78] sm:$0xff] %v976
      %1041 = vst [vmem:[#allocation2 + $0x80] sm:$0xff] %v977
      %1042 = vst [vmem:[#allocation2 + $0x88] sm:$0xff] %v978
      %1043 = vst [vmem:[#allocation2 + $0x90] sm:$0xff] %v979
      %1044 = vst [vmem:[#allocation2 + $0x98] sm:$0xff] %v980
      %1045 = vst [vmem:[#allocation2 + $0xa0] sm:$0xff] %v981
      %1046 = vst [vmem:[#allocation2 + $0xa8] sm:$0xff] %v982
      %1047 = vst [vmem:[#allocation2 + $0xb0] sm:$0xff] %v983
      %1048 = vst [vmem:[#allocation2 + $0xb8] sm:$0xff] %v984
      %1049 = vst [vmem:[#allocation2 + $0xc0] sm:$0xff] %v985
      %1050 = vst [vmem:[#allocation2 + $0xc8] sm:$0xff] %v986
      %1051 = vst [vmem:[#allocation2 + $0xd0] sm:$0xff] %v987
      %1052 = vst [vmem:[#allocation2 + $0xd8] sm:$0xff] %v988
      %1053 = vst [vmem:[#allocation2 + $0xe0] sm:$0xff] %v989
      %1054 = vst [vmem:[#allocation2 + $0xe8] sm:$0xff] %v990
      %1055 = vst [vmem:[#allocation2 + $0xf0] sm:$0xff] %v991
      %1056 = vst [vmem:[#allocation2 + $0xf8] sm:$0xff] %v992
      %1057 = vst [vmem:[#allocation2 + $0x100] sm:$0xff] %v993
      %1058 = vst [vmem:[#allocation2 + $0x108] sm:$0xff] %v994
      %1059 = vst [vmem:[#allocation2 + $0x110] sm:$0xff] %v995
      %1060 = vst [vmem:[#allocation2 + $0x118] sm:$0xff] %v996
      %1061 = vst [vmem:[#allocation2 + $0x120] sm:$0xff] %v997
      %1062 = vst [vmem:[#allocation2 + $0x128] sm:$0xff] %v998
      %1063 = vst [vmem:[#allocation2 + $0x130] sm:$0xff] %v999
      %1064 = vst [vmem:[#allocation2 + $0x138] sm:$0xff] %v1000
      %1065 = vst [vmem:[#allocation2 + $0x140] sm:$0xff] %v1001
      %1066 = vst [vmem:[#allocation2 + $0x148] sm:$0xff] %v1002
      %1067 = vst [vmem:[#allocation2 + $0x150] sm:$0xff] %v1003
      %1068 = vst [vmem:[#allocation2 + $0x158] sm:$0xff] %v1004
      %1069 = vst [vmem:[#allocation2 + $0x160] sm:$0xff] %v1005
      %1070 = vst [vmem:[#allocation2 + $0x168] sm:$0xff] %v1006
      %1071 = vst [vmem:[#allocation2 + $0x170] sm:$0xff] %v1007
      %1072 = vst [vmem:[#allocation2 + $0x178] sm:$0xff] %v1008
      %1073 = vst [vmem:[#allocation2 + $0x180] sm:$0xff] %v1009
      %1074 = vst [vmem:[#allocation2 + $0x188] sm:$0xff] %v1010
      %1075 = vst [vmem:[#allocation2 + $0x190] sm:$0xff] %v1011
      %1076 = vst [vmem:[#allocation2 + $0x198] sm:$0xff] %v1012
      %1077 = vst [vmem:[#allocation2 + $0x1a0] sm:$0xff] %v1013
      %1078 = vst [vmem:[#allocation2 + $0x1a8] sm:$0xff] %v1014
      %1079 = vst [vmem:[#allocation2 + $0x1b0] sm:$0xff] %v1015
      %1080 = vst [vmem:[#allocation2 + $0x1b8] sm:$0xff] %v1016
      %1081 = vst [vmem:[#allocation2 + $0x1c0] sm:$0xff] %v1017
      %1082 = vst [vmem:[#allocation2 + $0x1c8] sm:$0xff] %v1018
      %1083 = vst [vmem:[#allocation2 + $0x1d0] sm:$0xff] %v1019
      %1084 = vst [vmem:[#allocation2 + $0x1d8] sm:$0xff] %v1020
      %1085 = vst [vmem:[#allocation2 + $0x1e0] sm:$0xff] %v1021
      %1086 = vst [vmem:[#allocation2 + $0x1e8] sm:$0xff] %v1022
      %1087 = vst [vmem:[#allocation2 + $0x1f0] sm:$0xff] %v1023
      %1088 = vst [vmem:[#allocation2 + $0x1f8] sm:$0xff] %v1024
      // Predicated region
      $region37: #{discriminator_forward.8} parent=31 // pred_check
        %p1089 = pneg %p220
      $region38: #{discriminator_forward.8} parent=31 // pred_check_branch
        %1091 = sbr.rel (%p1089) target = $region40
      $region39: #{discriminator_forward.8} parent=31 // pred_region
        %v1092 = vld [vmem:[#allocation2] sm:$0xff]
        %v1093 = vld [vmem:[#allocation2 + $0x8] sm:$0xff]
        %v1094 = vld [vmem:[#allocation2 + $0x10] sm:$0xff]
        %v1095 = vld [vmem:[#allocation2 + $0x18] sm:$0xff]
        %v1096 = vld [vmem:[#allocation2 + $0x20] sm:$0xff]
        %v1097 = vld [vmem:[#allocation2 + $0x28] sm:$0xff]
        %v1098 = vld [vmem:[#allocation2 + $0x30] sm:$0xff]
        %v1099 = vld [vmem:[#allocation2 + $0x38] sm:$0xff]
        %v1100 = vld [vmem:[#allocation2 + $0x40] sm:$0xff]
        %v1101 = vld [vmem:[#allocation2 + $0x48] sm:$0xff]
        %v1102 = vld [vmem:[#allocation2 + $0x50] sm:$0xff]
        %v1103 = vld [vmem:[#allocation2 + $0x58] sm:$0xff]
        %v1104 = vld [vmem:[#allocation2 + $0x60] sm:$0xff]
        %v1105 = vld [vmem:[#allocation2 + $0x68] sm:$0xff]
        %v1106 = vld [vmem:[#allocation2 + $0x70] sm:$0xff]
        %v1107 = vld [vmem:[#allocation2 + $0x78] sm:$0xff]
        %v1108 = vld [vmem:[#allocation2 + $0x80] sm:$0xff]
        %v1109 = vld [vmem:[#allocation2 + $0x88] sm:$0xff]
        %v1110 = vld [vmem:[#allocation2 + $0x90] sm:$0xff]
        %v1111 = vld [vmem:[#allocation2 + $0x98] sm:$0xff]
        %v1112 = vld [vmem:[#allocation2 + $0xa0] sm:$0xff]
        %v1113 = vld [vmem:[#allocation2 + $0xa8] sm:$0xff]
        %v1114 = vld [vmem:[#allocation2 + $0xb0] sm:$0xff]
        %v1115 = vld [vmem:[#allocation2 + $0xb8] sm:$0xff]
        %v1116 = vld [vmem:[#allocation2 + $0xc0] sm:$0xff]
        %v1117 = vld [vmem:[#allocation2 + $0xc8] sm:$0xff]
        %v1118 = vld [vmem:[#allocation2 + $0xd0] sm:$0xff]
        %v1119 = vld [vmem:[#allocation2 + $0xd8] sm:$0xff]
        %v1120 = vld [vmem:[#allocation2 + $0xe0] sm:$0xff]
        %v1121 = vld [vmem:[#allocation2 + $0xe8] sm:$0xff]
        %v1122 = vld [vmem:[#allocation2 + $0xf0] sm:$0xff]
        %v1123 = vld [vmem:[#allocation2 + $0xf8] sm:$0xff]
        %v1124 = vld [vmem:[#allocation2 + $0x100] sm:$0xff]
        %v1125 = vld [vmem:[#allocation2 + $0x108] sm:$0xff]
        %v1126 = vld [vmem:[#allocation2 + $0x110] sm:$0xff]
        %v1127 = vld [vmem:[#allocation2 + $0x118] sm:$0xff]
        %v1128 = vld [vmem:[#allocation2 + $0x120] sm:$0xff]
        %v1129 = vld [vmem:[#allocation2 + $0x128] sm:$0xff]
        %v1130 = vld [vmem:[#allocation2 + $0x130] sm:$0xff]
        %v1131 = vld [vmem:[#allocation2 + $0x138] sm:$0xff]
        %v1132 = vld [vmem:[#allocation2 + $0x140] sm:$0xff]
        %v1133 = vld [vmem:[#allocation2 + $0x148] sm:$0xff]
        %v1134 = vld [vmem:[#allocation2 + $0x150] sm:$0xff]
        %v1135 = vld [vmem:[#allocation2 + $0x158] sm:$0xff]
        %v1136 = vld [vmem:[#allocation2 + $0x160] sm:$0xff]
        %v1137 = vld [vmem:[#allocation2 + $0x168] sm:$0xff]
        %v1138 = vld [vmem:[#allocation2 + $0x170] sm:$0xff]
        %v1139 = vld [vmem:[#allocation2 + $0x178] sm:$0xff]
        %v1140 = vld [vmem:[#allocation2 + $0x180] sm:$0xff]
        %v1141 = vld [vmem:[#allocation2 + $0x188] sm:$0xff]
        %v1142 = vld [vmem:[#allocation2 + $0x190] sm:$0xff]
        %v1143 = vld [vmem:[#allocation2 + $0x198] sm:$0xff]
        %v1144 = vld [vmem:[#allocation2 + $0x1a0] sm:$0xff]
        %v1145 = vld [vmem:[#allocation2 + $0x1a8] sm:$0xff]
        %v1146 = vld [vmem:[#allocation2 + $0x1b0] sm:$0xff]
        %v1147 = vld [vmem:[#allocation2 + $0x1b8] sm:$0xff]
        %v1148 = vld [vmem:[#allocation2 + $0x1c0] sm:$0xff]
        %v1149 = vld [vmem:[#allocation2 + $0x1c8] sm:$0xff]
        %v1150 = vld [vmem:[#allocation2 + $0x1d0] sm:$0xff]
        %v1151 = vld [vmem:[#allocation2 + $0x1d8] sm:$0xff]
        %v1152 = vld [vmem:[#allocation2 + $0x1e0] sm:$0xff]
        %v1153 = vld [vmem:[#allocation2 + $0x1e8] sm:$0xff]
        %v1154 = vld [vmem:[#allocation2 + $0x1f0] sm:$0xff]
        %v1155 = vld [vmem:[#allocation2 + $0x1f8] sm:$0xff]
        %v1156 = vld [vmem:[%s2] sm:$0x1]
        %v1158 = vlaneseq
        %v1159 = vshrl.u32 %v1158, 7
        %v1160 = vsub.s32 0, %v1159
        %v1161 = vrot.slane %v1156, %v1160
        %v1163 = vadd.f32 %v1092, %v1161
        %v1164 = vadd.f32 %v1093, %v1161
        %v1165 = vadd.f32 %v1094, %v1161
        %v1166 = vadd.f32 %v1095, %v1161
        %v1167 = vadd.f32 %v1096, %v1161
        %v1168 = vadd.f32 %v1097, %v1161
        %v1169 = vadd.f32 %v1098, %v1161
        %v1170 = vadd.f32 %v1099, %v1161
        %v1171 = vadd.f32 %v1100, %v1161
        %v1172 = vadd.f32 %v1101, %v1161
        %v1173 = vadd.f32 %v1102, %v1161
        %v1174 = vadd.f32 %v1103, %v1161
        %v1175 = vadd.f32 %v1104, %v1161
        %v1176 = vadd.f32 %v1105, %v1161
        %v1177 = vadd.f32 %v1106, %v1161
        %v1178 = vadd.f32 %v1107, %v1161
        %v1179 = vadd.f32 %v1108, %v1161
        %v1180 = vadd.f32 %v1109, %v1161
        %v1181 = vadd.f32 %v1110, %v1161
        %v1182 = vadd.f32 %v1111, %v1161
        %v1183 = vadd.f32 %v1112, %v1161
        %v1184 = vadd.f32 %v1113, %v1161
        %v1185 = vadd.f32 %v1114, %v1161
        %v1186 = vadd.f32 %v1115, %v1161
        %v1187 = vadd.f32 %v1116, %v1161
        %v1188 = vadd.f32 %v1117, %v1161
        %v1189 = vadd.f32 %v1118, %v1161
        %v1190 = vadd.f32 %v1119, %v1161
        %v1191 = vadd.f32 %v1120, %v1161
        %v1192 = vadd.f32 %v1121, %v1161
        %v1193 = vadd.f32 %v1122, %v1161
        %v1194 = vadd.f32 %v1123, %v1161
        %v1195 = vadd.f32 %v1124, %v1161
        %v1196 = vadd.f32 %v1125, %v1161
        %v1197 = vadd.f32 %v1126, %v1161
        %v1198 = vadd.f32 %v1127, %v1161
        %v1199 = vadd.f32 %v1128, %v1161
        %v1200 = vadd.f32 %v1129, %v1161
        %v1201 = vadd.f32 %v1130, %v1161
        %v1202 = vadd.f32 %v1131, %v1161
        %v1203 = vadd.f32 %v1132, %v1161
        %v1204 = vadd.f32 %v1133, %v1161
        %v1205 = vadd.f32 %v1134, %v1161
        %v1206 = vadd.f32 %v1135, %v1161
        %v1207 = vadd.f32 %v1136, %v1161
        %v1208 = vadd.f32 %v1137, %v1161
        %v1209 = vadd.f32 %v1138, %v1161
        %v1210 = vadd.f32 %v1139, %v1161
        %v1211 = vadd.f32 %v1140, %v1161
        %v1212 = vadd.f32 %v1141, %v1161
        %v1213 = vadd.f32 %v1142, %v1161
        %v1214 = vadd.f32 %v1143, %v1161
        %v1215 = vadd.f32 %v1144, %v1161
        %v1216 = vadd.f32 %v1145, %v1161
        %v1217 = vadd.f32 %v1146, %v1161
        %v1218 = vadd.f32 %v1147, %v1161
        %v1219 = vadd.f32 %v1148, %v1161
        %v1220 = vadd.f32 %v1149, %v1161
        %v1221 = vadd.f32 %v1150, %v1161
        %v1222 = vadd.f32 %v1151, %v1161
        %v1223 = vadd.f32 %v1152, %v1161
        %v1224 = vadd.f32 %v1153, %v1161
        %v1225 = vadd.f32 %v1154, %v1161
        %v1226 = vadd.f32 %v1155, %v1161
        %vm1227 = vcmp.gt.f32.partialorder %v1163, 0.0
        %vm1228 = vcmp.gt.f32.partialorder %v1164, 0.0
        %vm1229 = vcmp.gt.f32.partialorder %v1165, 0.0
        %vm1230 = vcmp.gt.f32.partialorder %v1166, 0.0
        %vm1231 = vcmp.gt.f32.partialorder %v1167, 0.0
        %vm1232 = vcmp.gt.f32.partialorder %v1168, 0.0
        %vm1233 = vcmp.gt.f32.partialorder %v1169, 0.0
        %vm1234 = vcmp.gt.f32.partialorder %v1170, 0.0
        %vm1235 = vcmp.gt.f32.partialorder %v1171, 0.0
        %vm1236 = vcmp.gt.f32.partialorder %v1172, 0.0
        %vm1237 = vcmp.gt.f32.partialorder %v1173, 0.0
        %vm1238 = vcmp.gt.f32.partialorder %v1174, 0.0
        %vm1239 = vcmp.gt.f32.partialorder %v1175, 0.0
        %vm1240 = vcmp.gt.f32.partialorder %v1176, 0.0
        %vm1241 = vcmp.gt.f32.partialorder %v1177, 0.0
        %vm1242 = vcmp.gt.f32.partialorder %v1178, 0.0
        %vm1243 = vcmp.gt.f32.partialorder %v1179, 0.0
        %vm1244 = vcmp.gt.f32.partialorder %v1180, 0.0
        %vm1245 = vcmp.gt.f32.partialorder %v1181, 0.0
        %vm1246 = vcmp.gt.f32.partialorder %v1182, 0.0
        %vm1247 = vcmp.gt.f32.partialorder %v1183, 0.0
        %vm1248 = vcmp.gt.f32.partialorder %v1184, 0.0
        %vm1249 = vcmp.gt.f32.partialorder %v1185, 0.0
        %vm1250 = vcmp.gt.f32.partialorder %v1186, 0.0
        %vm1251 = vcmp.gt.f32.partialorder %v1187, 0.0
        %vm1252 = vcmp.gt.f32.partialorder %v1188, 0.0
        %vm1253 = vcmp.gt.f32.partialorder %v1189, 0.0
        %vm1254 = vcmp.gt.f32.partialorder %v1190, 0.0
        %vm1255 = vcmp.gt.f32.partialorder %v1191, 0.0
        %vm1256 = vcmp.gt.f32.partialorder %v1192, 0.0
        %vm1257 = vcmp.gt.f32.partialorder %v1193, 0.0
        %vm1258 = vcmp.gt.f32.partialorder %v1194, 0.0
        %vm1259 = vcmp.gt.f32.partialorder %v1195, 0.0
        %vm1260 = vcmp.gt.f32.partialorder %v1196, 0.0
        %vm1261 = vcmp.gt.f32.partialorder %v1197, 0.0
        %vm1262 = vcmp.gt.f32.partialorder %v1198, 0.0
        %vm1263 = vcmp.gt.f32.partialorder %v1199, 0.0
        %vm1264 = vcmp.gt.f32.partialorder %v1200, 0.0
        %vm1265 = vcmp.gt.f32.partialorder %v1201, 0.0
        %vm1266 = vcmp.gt.f32.partialorder %v1202, 0.0
        %vm1267 = vcmp.gt.f32.partialorder %v1203, 0.0
        %vm1268 = vcmp.gt.f32.partialorder %v1204, 0.0
        %vm1269 = vcmp.gt.f32.partialorder %v1205, 0.0
        %vm1270 = vcmp.gt.f32.partialorder %v1206, 0.0
        %vm1271 = vcmp.gt.f32.partialorder %v1207, 0.0
        %vm1272 = vcmp.gt.f32.partialorder %v1208, 0.0
        %vm1273 = vcmp.gt.f32.partialorder %v1209, 0.0
        %vm1274 = vcmp.gt.f32.partialorder %v1210, 0.0
        %vm1275 = vcmp.gt.f32.partialorder %v1211, 0.0
        %vm1276 = vcmp.gt.f32.partialorder %v1212, 0.0
        %vm1277 = vcmp.gt.f32.partialorder %v1213, 0.0
        %vm1278 = vcmp.gt.f32.partialorder %v1214, 0.0
        %vm1279 = vcmp.gt.f32.partialorder %v1215, 0.0
        %vm1280 = vcmp.gt.f32.partialorder %v1216, 0.0
        %vm1281 = vcmp.gt.f32.partialorder %v1217, 0.0
        %vm1282 = vcmp.gt.f32.partialorder %v1218, 0.0
        %vm1283 = vcmp.gt.f32.partialorder %v1219, 0.0
        %vm1284 = vcmp.gt.f32.partialorder %v1220, 0.0
        %vm1285 = vcmp.gt.f32.partialorder %v1221, 0.0
        %vm1286 = vcmp.gt.f32.partialorder %v1222, 0.0
        %vm1287 = vcmp.gt.f32.partialorder %v1223, 0.0
        %vm1288 = vcmp.gt.f32.partialorder %v1224, 0.0
        %vm1289 = vcmp.gt.f32.partialorder %v1225, 0.0
        %vm1290 = vcmp.gt.f32.partialorder %v1226, 0.0
        %v1291 = vmul.f32 %v1163, 0.2
        %v1292 = vmul.f32 %v1164, 0.2
        %v1293 = vmul.f32 %v1165, 0.2
        %v1294 = vmul.f32 %v1166, 0.2
        %v1295 = vmul.f32 %v1167, 0.2
        %v1296 = vmul.f32 %v1168, 0.2
        %v1297 = vmul.f32 %v1169, 0.2
        %v1298 = vmul.f32 %v1170, 0.2
        %v1299 = vmul.f32 %v1171, 0.2
        %v1300 = vmul.f32 %v1172, 0.2
        %v1301 = vmul.f32 %v1173, 0.2
        %v1302 = vmul.f32 %v1174, 0.2
        %v1303 = vmul.f32 %v1175, 0.2
        %v1304 = vmul.f32 %v1176, 0.2
        %v1305 = vmul.f32 %v1177, 0.2
        %v1306 = vmul.f32 %v1178, 0.2
        %v1307 = vmul.f32 %v1179, 0.2
        %v1308 = vmul.f32 %v1180, 0.2
        %v1309 = vmul.f32 %v1181, 0.2
        %v1310 = vmul.f32 %v1182, 0.2
        %v1311 = vmul.f32 %v1183, 0.2
        %v1312 = vmul.f32 %v1184, 0.2
        %v1313 = vmul.f32 %v1185, 0.2
        %v1314 = vmul.f32 %v1186, 0.2
        %v1315 = vmul.f32 %v1187, 0.2
        %v1316 = vmul.f32 %v1188, 0.2
        %v1317 = vmul.f32 %v1189, 0.2
        %v1318 = vmul.f32 %v1190, 0.2
        %v1319 = vmul.f32 %v1191, 0.2
        %v1320 = vmul.f32 %v1192, 0.2
        %v1321 = vmul.f32 %v1193, 0.2
        %v1322 = vmul.f32 %v1194, 0.2
        %v1323 = vmul.f32 %v1195, 0.2
        %v1324 = vmul.f32 %v1196, 0.2
        %v1325 = vmul.f32 %v1197, 0.2
        %v1326 = vmul.f32 %v1198, 0.2
        %v1327 = vmul.f32 %v1199, 0.2
        %v1328 = vmul.f32 %v1200, 0.2
        %v1329 = vmul.f32 %v1201, 0.2
        %v1330 = vmul.f32 %v1202, 0.2
        %v1331 = vmul.f32 %v1203, 0.2
        %v1332 = vmul.f32 %v1204, 0.2
        %v1333 = vmul.f32 %v1205, 0.2
        %v1334 = vmul.f32 %v1206, 0.2
        %v1335 = vmul.f32 %v1207, 0.2
        %v1336 = vmul.f32 %v1208, 0.2
        %v1337 = vmul.f32 %v1209, 0.2
        %v1338 = vmul.f32 %v1210, 0.2
        %v1339 = vmul.f32 %v1211, 0.2
        %v1340 = vmul.f32 %v1212, 0.2
        %v1341 = vmul.f32 %v1213, 0.2
        %v1342 = vmul.f32 %v1214, 0.2
        %v1343 = vmul.f32 %v1215, 0.2
        %v1344 = vmul.f32 %v1216, 0.2
        %v1345 = vmul.f32 %v1217, 0.2
        %v1346 = vmul.f32 %v1218, 0.2
        %v1347 = vmul.f32 %v1219, 0.2
        %v1348 = vmul.f32 %v1220, 0.2
        %v1349 = vmul.f32 %v1221, 0.2
        %v1350 = vmul.f32 %v1222, 0.2
        %v1351 = vmul.f32 %v1223, 0.2
        %v1352 = vmul.f32 %v1224, 0.2
        %v1353 = vmul.f32 %v1225, 0.2
        %v1354 = vmul.f32 %v1226, 0.2
        %v1355 = vsel %vm1227, %v1163, %v1291
        %v1356 = vsel %vm1228, %v1164, %v1292
        %v1357 = vsel %vm1229, %v1165, %v1293
        %v1358 = vsel %vm1230, %v1166, %v1294
        %v1359 = vsel %vm1231, %v1167, %v1295
        %v1360 = vsel %vm1232, %v1168, %v1296
        %v1361 = vsel %vm1233, %v1169, %v1297
        %v1362 = vsel %vm1234, %v1170, %v1298
        %v1363 = vsel %vm1235, %v1171, %v1299
        %v1364 = vsel %vm1236, %v1172, %v1300
        %v1365 = vsel %vm1237, %v1173, %v1301
        %v1366 = vsel %vm1238, %v1174, %v1302
        %v1367 = vsel %vm1239, %v1175, %v1303
        %v1368 = vsel %vm1240, %v1176, %v1304
        %v1369 = vsel %vm1241, %v1177, %v1305
        %v1370 = vsel %vm1242, %v1178, %v1306
        %v1371 = vsel %vm1243, %v1179, %v1307
        %v1372 = vsel %vm1244, %v1180, %v1308
        %v1373 = vsel %vm1245, %v1181, %v1309
        %v1374 = vsel %vm1246, %v1182, %v1310
        %v1375 = vsel %vm1247, %v1183, %v1311
        %v1376 = vsel %vm1248, %v1184, %v1312
        %v1377 = vsel %vm1249, %v1185, %v1313
        %v1378 = vsel %vm1250, %v1186, %v1314
        %v1379 = vsel %vm1251, %v1187, %v1315
        %v1380 = vsel %vm1252, %v1188, %v1316
        %v1381 = vsel %vm1253, %v1189, %v1317
        %v1382 = vsel %vm1254, %v1190, %v1318
        %v1383 = vsel %vm1255, %v1191, %v1319
        %v1384 = vsel %vm1256, %v1192, %v1320
        %v1385 = vsel %vm1257, %v1193, %v1321
        %v1386 = vsel %vm1258, %v1194, %v1322
        %v1387 = vsel %vm1259, %v1195, %v1323
        %v1388 = vsel %vm1260, %v1196, %v1324
        %v1389 = vsel %vm1261, %v1197, %v1325
        %v1390 = vsel %vm1262, %v1198, %v1326
        %v1391 = vsel %vm1263, %v1199, %v1327
        %v1392 = vsel %vm1264, %v1200, %v1328
        %v1393 = vsel %vm1265, %v1201, %v1329
        %v1394 = vsel %vm1266, %v1202, %v1330
        %v1395 = vsel %vm1267, %v1203, %v1331
        %v1396 = vsel %vm1268, %v1204, %v1332
        %v1397 = vsel %vm1269, %v1205, %v1333
        %v1398 = vsel %vm1270, %v1206, %v1334
        %v1399 = vsel %vm1271, %v1207, %v1335
        %v1400 = vsel %vm1272, %v1208, %v1336
        %v1401 = vsel %vm1273, %v1209, %v1337
        %v1402 = vsel %vm1274, %v1210, %v1338
        %v1403 = vsel %vm1275, %v1211, %v1339
        %v1404 = vsel %vm1276, %v1212, %v1340
        %v1405 = vsel %vm1277, %v1213, %v1341
        %v1406 = vsel %vm1278, %v1214, %v1342
        %v1407 = vsel %vm1279, %v1215, %v1343
        %v1408 = vsel %vm1280, %v1216, %v1344
        %v1409 = vsel %vm1281, %v1217, %v1345
        %v1410 = vsel %vm1282, %v1218, %v1346
        %v1411 = vsel %vm1283, %v1219, %v1347
        %v1412 = vsel %vm1284, %v1220, %v1348
        %v1413 = vsel %vm1285, %v1221, %v1349
        %v1414 = vsel %vm1286, %v1222, %v1350
        %v1415 = vsel %vm1287, %v1223, %v1351
        %v1416 = vsel %vm1288, %v1224, %v1352
        %v1417 = vsel %vm1289, %v1225, %v1353
        %v1418 = vsel %vm1290, %v1226, %v1354
        %1419 = vst [vmem:[%s217] sm:$0xff] %v1355
        %1420 = vst [vmem:[%s217 + $0x8] sm:$0xff] %v1356
        %1421 = vst [vmem:[%s217 + $0x10] sm:$0xff] %v1357
        %1422 = vst [vmem:[%s217 + $0x18] sm:$0xff] %v1358
        %1423 = vst [vmem:[%s217 + $0x20] sm:$0xff] %v1359
        %1424 = vst [vmem:[%s217 + $0x28] sm:$0xff] %v1360
        %1425 = vst [vmem:[%s217 + $0x30] sm:$0xff] %v1361
        %1426 = vst [vmem:[%s217 + $0x38] sm:$0xff] %v1362
        %1427 = vst [vmem:[%s217 + $0x40] sm:$0xff] %v1363
        %1428 = vst [vmem:[%s217 + $0x48] sm:$0xff] %v1364
        %1429 = vst [vmem:[%s217 + $0x50] sm:$0xff] %v1365
        %1430 = vst [vmem:[%s217 + $0x58] sm:$0xff] %v1366
        %1431 = vst [vmem:[%s217 + $0x60] sm:$0xff] %v1367
        %1432 = vst [vmem:[%s217 + $0x68] sm:$0xff] %v1368
        %1433 = vst [vmem:[%s217 + $0x70] sm:$0xff] %v1369
        %1434 = vst [vmem:[%s217 + $0x78] sm:$0xff] %v1370
        %1435 = vst [vmem:[%s217 + $0x80] sm:$0xff] %v1371
        %1436 = vst [vmem:[%s217 + $0x88] sm:$0xff] %v1372
        %1437 = vst [vmem:[%s217 + $0x90] sm:$0xff] %v1373
        %1438 = vst [vmem:[%s217 + $0x98] sm:$0xff] %v1374
        %1439 = vst [vmem:[%s217 + $0xa0] sm:$0xff] %v1375
        %1440 = vst [vmem:[%s217 + $0xa8] sm:$0xff] %v1376
        %1441 = vst [vmem:[%s217 + $0xb0] sm:$0xff] %v1377
        %1442 = vst [vmem:[%s217 + $0xb8] sm:$0xff] %v1378
        %1443 = vst [vmem:[%s217 + $0xc0] sm:$0xff] %v1379
        %1444 = vst [vmem:[%s217 + $0xc8] sm:$0xff] %v1380
        %1445 = vst [vmem:[%s217 + $0xd0] sm:$0xff] %v1381
        %1446 = vst [vmem:[%s217 + $0xd8] sm:$0xff] %v1382
        %1447 = vst [vmem:[%s217 + $0xe0] sm:$0xff] %v1383
        %1448 = vst [vmem:[%s217 + $0xe8] sm:$0xff] %v1384
        %1449 = vst [vmem:[%s217 + $0xf0] sm:$0xff] %v1385
        %1450 = vst [vmem:[%s217 + $0xf8] sm:$0xff] %v1386
        %1451 = vst [vmem:[%s217 + $0x100] sm:$0xff] %v1387
        %1452 = vst [vmem:[%s217 + $0x108] sm:$0xff] %v1388
        %1453 = vst [vmem:[%s217 + $0x110] sm:$0xff] %v1389
        %1454 = vst [vmem:[%s217 + $0x118] sm:$0xff] %v1390
        %1455 = vst [vmem:[%s217 + $0x120] sm:$0xff] %v1391
        %1456 = vst [vmem:[%s217 + $0x128] sm:$0xff] %v1392
        %1457 = vst [vmem:[%s217 + $0x130] sm:$0xff] %v1393
        %1458 = vst [vmem:[%s217 + $0x138] sm:$0xff] %v1394
        %1459 = vst [vmem:[%s217 + $0x140] sm:$0xff] %v1395
        %1460 = vst [vmem:[%s217 + $0x148] sm:$0xff] %v1396
        %1461 = vst [vmem:[%s217 + $0x150] sm:$0xff] %v1397
        %1462 = vst [vmem:[%s217 + $0x158] sm:$0xff] %v1398
        %1463 = vst [vmem:[%s217 + $0x160] sm:$0xff] %v1399
        %1464 = vst [vmem:[%s217 + $0x168] sm:$0xff] %v1400
        %1465 = vst [vmem:[%s217 + $0x170] sm:$0xff] %v1401
        %1466 = vst [vmem:[%s217 + $0x178] sm:$0xff] %v1402
        %1467 = vst [vmem:[%s217 + $0x180] sm:$0xff] %v1403
        %1468 = vst [vmem:[%s217 + $0x188] sm:$0xff] %v1404
        %1469 = vst [vmem:[%s217 + $0x190] sm:$0xff] %v1405
        %1470 = vst [vmem:[%s217 + $0x198] sm:$0xff] %v1406
        %1471 = vst [vmem:[%s217 + $0x1a0] sm:$0xff] %v1407
        %1472 = vst [vmem:[%s217 + $0x1a8] sm:$0xff] %v1408
        %1473 = vst [vmem:[%s217 + $0x1b0] sm:$0xff] %v1409
        %1474 = vst [vmem:[%s217 + $0x1b8] sm:$0xff] %v1410
        %1475 = vst [vmem:[%s217 + $0x1c0] sm:$0xff] %v1411
        %1476 = vst [vmem:[%s217 + $0x1c8] sm:$0xff] %v1412
        %1477 = vst [vmem:[%s217 + $0x1d0] sm:$0xff] %v1413
        %1478 = vst [vmem:[%s217 + $0x1d8] sm:$0xff] %v1414
        %1479 = vst [vmem:[%s217 + $0x1e0] sm:$0xff] %v1415
        %1480 = vst [vmem:[%s217 + $0x1e8] sm:$0xff] %v1416
        %1481 = vst [vmem:[%s217 + $0x1f0] sm:$0xff] %v1417
        %1482 = vst [vmem:[%s217 + $0x1f8] sm:$0xff] %v1418
      $region40: #{discriminator_forward.8} parent=31 // pred_fallthru
        _
      %s1483 = smul.u32 64, %s18
      %p1484 = scmp.lt.s32.totalorder %s1483, 255
      %s1485 = scalar_select %p1484, %s1483, 255
      %s1486 = smul.addr %s1485, 8
      %s1487 = scalar_lea.vmem %s3, %s1486
      // Predicated region
      $region41: #{discriminator_forward.8} parent=31 // pred_check
        %p1488 = pneg %p119
      $region42: #{discriminator_forward.8} parent=31 // pred_check_branch
        %1490 = sbr.rel (%p1488) target = $region44
      $region43: #{discriminator_forward.8} parent=31 // pred_region
        %s1491 = smul.u32 64, %s18
      $region44: #{discriminator_forward.8} parent=31 // pred_fallthru
        _
    $region32: #{discriminator_forward.8} parent=5 // pred_fallthru
      _
    %p1492 = scmp.le.s32.totalorder 2, %s9
    // Predicated region
    $region45: #{discriminator_forward.8} parent=5 // pred_check
      %p1493 = pneg %p1492
    $region46: #{discriminator_forward.8} parent=5 // pred_check_branch
      %1495 = sbr.rel (%p1493) target = $region48
    $region47: #{discriminator_forward.8} parent=5 // pred_region
      %s1496 = ssub.s32 %s9, 2
      // Predicated region
      $region49: #{discriminator_forward.8} parent=47 // pred_check
        %p1497 = pneg %p125
      $region50: #{discriminator_forward.8} parent=47 // pred_check_branch
        %1499 = sbr.rel (%p1497) target = $region52
      $region51: #{discriminator_forward.8} parent=47 // pred_region
        %s1500 = smul.u32 64, %s20
        %p1501 = scmp.lt.s32.totalorder %s1500, 255
        %s1502 = scalar_select %p1501, %s1500, 255
        %s1503 = smul.addr %s1502, 8
        %s1504 = scalar_lea.vmem %s3, %s1503
      $region52: #{discriminator_forward.8} parent=47 // pred_fallthru
        _
    $region48: #{discriminator_forward.8} parent=5 // pred_fallthru
      _
  $region6: #{discriminator_forward.8} parent=0 // loop_footer
    %s13 = sadd.s32 1, %s9
  $region7: #{discriminator_forward.8} parent=0 // loop_footer_branch
    %8 = sbr.rel target = $region3
  $region8: #{discriminator_forward.8} parent=0 // loop_exit
    _

// kernel: discriminator_forward.10
$region0: #{discriminator_forward.10}
  #allocation0 [shape = 'u32[]', space=smem, size = 0x4, offset = 0x4, fixed_abs, tag = 'smem constant byte address 0x4 - core index']
  #allocation1 [shape = 'u32[144,128]{1,0:T(1,128)}', space=vmem, size = 0x12000, scoped, tag = 'internal scratch']
  %s0 = inlined_call_operand.vmem [shape: f32[512,128], index: 0, kind: input, shape index: {}]
  %s1 = inlined_call_operand.vmem [shape: f32[1,128], index: 1, kind: input, shape index: {}]
  %s2 = inlined_call_operand.vmem [shape: f32[1,128], index: 2, kind: input, shape index: {}]
  %s3 = inlined_call_operand.vmem [shape: f32[512,128], index: 3, kind: output, shape index: {}]
  %s4 = sld [smem:[#allocation0]]
  $region22: #{discriminator_forward.10} parent=0
    _
  %s6 = ssub.s32 1, %s4
  %s7 = scalar_select 0, %s6, %s4
  // Predicated region
  $region2: #{discriminator_forward.10} parent=0 // pred_check
    _
  $region3: #{discriminator_forward.10} parent=0 // pred_check_branch
    %9 = sbr.rel (0) target = $region5
  $region4: #{discriminator_forward.10} parent=0 // pred_region
    _
  $region5: #{discriminator_forward.10} parent=0 // pred_fallthru
    _
  // Predicated region
  $region6: #{discriminator_forward.10} parent=0 // pred_check
    _
  $region7: #{discriminator_forward.10} parent=0 // pred_check_branch
    %11 = sbr.rel (0) target = $region9
  $region8: #{discriminator_forward.10} parent=0 // pred_region
    _
  $region9: #{discriminator_forward.10} parent=0 // pred_fallthru
    _
  // Predicated region
  $region10: #{discriminator_forward.10} parent=0 // pred_check
    _
  $region11: #{discriminator_forward.10} parent=0 // pred_check_branch
    %13 = sbr.rel (0) target = $region13
  $region12: #{discriminator_forward.10} parent=0 // pred_region
    _
  $region13: #{discriminator_forward.10} parent=0 // pred_fallthru
    _
  %v14 = vld [vmem:[%s0] sm:$0xff]
  %v15 = vld [vmem:[%s0 + $0x8] sm:$0xff]
  %v16 = vld [vmem:[%s0 + $0x10] sm:$0xff]
  %v17 = vld [vmem:[%s0 + $0x18] sm:$0xff]
  %v18 = vld [vmem:[%s0 + $0x20] sm:$0xff]
  %v19 = vld [vmem:[%s0 + $0x28] sm:$0xff]
  %v20 = vld [vmem:[%s0 + $0x30] sm:$0xff]
  %v21 = vld [vmem:[%s0 + $0x38] sm:$0xff]
  %v22 = vld [vmem:[%s0 + $0x40] sm:$0xff]
  %v23 = vld [vmem:[%s0 + $0x48] sm:$0xff]
  %v24 = vld [vmem:[%s0 + $0x50] sm:$0xff]
  %v25 = vld [vmem:[%s0 + $0x58] sm:$0xff]
  %v26 = vld [vmem:[%s0 + $0x60] sm:$0xff]
  %v27 = vld [vmem:[%s0 + $0x68] sm:$0xff]
  %v28 = vld [vmem:[%s0 + $0x70] sm:$0xff]
  %v29 = vld [vmem:[%s0 + $0x78] sm:$0xff]
  %v30 = vld [vmem:[%s0 + $0x80] sm:$0xff]
  %v31 = vld [vmem:[%s0 + $0x88] sm:$0xff]
  %v32 = vld [vmem:[%s0 + $0x90] sm:$0xff]
  %v33 = vld [vmem:[%s0 + $0x98] sm:$0xff]
  %v34 = vld [vmem:[%s0 + $0xa0] sm:$0xff]
  %v35 = vld [vmem:[%s0 + $0xa8] sm:$0xff]
  %v36 = vld [vmem:[%s0 + $0xb0] sm:$0xff]
  %v37 = vld [vmem:[%s0 + $0xb8] sm:$0xff]
  %v38 = vld [vmem:[%s0 + $0xc0] sm:$0xff]
  %v39 = vld [vmem:[%s0 + $0xc8] sm:$0xff]
  %v40 = vld [vmem:[%s0 + $0xd0] sm:$0xff]
  %v41 = vld [vmem:[%s0 + $0xd8] sm:$0xff]
  %v42 = vld [vmem:[%s0 + $0xe0] sm:$0xff]
  %v43 = vld [vmem:[%s0 + $0xe8] sm:$0xff]
  %v44 = vld [vmem:[%s0 + $0xf0] sm:$0xff]
  %v45 = vld [vmem:[%s0 + $0xf8] sm:$0xff]
  %v46 = vld [vmem:[%s0 + $0x100] sm:$0xff]
  %v47 = vld [vmem:[%s0 + $0x108] sm:$0xff]
  %v48 = vld [vmem:[%s0 + $0x110] sm:$0xff]
  %v49 = vld [vmem:[%s0 + $0x118] sm:$0xff]
  %v50 = vld [vmem:[%s0 + $0x120] sm:$0xff]
  %v51 = vld [vmem:[%s0 + $0x128] sm:$0xff]
  %v52 = vld [vmem:[%s0 + $0x130] sm:$0xff]
  %v53 = vld [vmem:[%s0 + $0x138] sm:$0xff]
  %v54 = vld [vmem:[%s0 + $0x140] sm:$0xff]
  %v55 = vld [vmem:[%s0 + $0x148] sm:$0xff]
  %v56 = vld [vmem:[%s0 + $0x150] sm:$0xff]
  %v57 = vld [vmem:[%s0 + $0x158] sm:$0xff]
  %v58 = vld [vmem:[%s0 + $0x160] sm:$0xff]
  %v59 = vld [vmem:[%s0 + $0x168] sm:$0xff]
  %v60 = vld [vmem:[%s0 + $0x170] sm:$0xff]
  %v61 = vld [vmem:[%s0 + $0x178] sm:$0xff]
  %v62 = vld [vmem:[%s0 + $0x180] sm:$0xff]
  %v63 = vld [vmem:[%s0 + $0x188] sm:$0xff]
  %v64 = vld [vmem:[%s0 + $0x190] sm:$0xff]
  %v65 = vld [vmem:[%s0 + $0x198] sm:$0xff]
  %v66 = vld [vmem:[%s0 + $0x1a0] sm:$0xff]
  %v67 = vld [vmem:[%s0 + $0x1a8] sm:$0xff]
  %v68 = vld [vmem:[%s0 + $0x1b0] sm:$0xff]
  %v69 = vld [vmem:[%s0 + $0x1b8] sm:$0xff]
  %v70 = vld [vmem:[%s0 + $0x1c0] sm:$0xff]
  %v71 = vld [vmem:[%s0 + $0x1c8] sm:$0xff]
  %v72 = vld [vmem:[%s0 + $0x1d0] sm:$0xff]
  %v73 = vld [vmem:[%s0 + $0x1d8] sm:$0xff]
  %v74 = vld [vmem:[%s0 + $0x1e0] sm:$0xff]
  %v75 = vld [vmem:[%s0 + $0x1e8] sm:$0xff]
  %v76 = vld [vmem:[%s0 + $0x1f0] sm:$0xff]
  %v77 = vld [vmem:[%s0 + $0x1f8] sm:$0xff]
  %v78 = vld [vmem:[%s1] sm:$0x1]
  %v80 = vlaneseq
  %v81 = vshrl.u32 %v80, 7
  %v82 = vsub.s32 0, %v81
  %v83 = vrot.slane %v78, %v82
  %v85 = vmul.f32 %v14, %v83
  %v86 = vmul.f32 %v15, %v83
  %v87 = vmul.f32 %v16, %v83
  %v88 = vmul.f32 %v17, %v83
  %v89 = vmul.f32 %v18, %v83
  %v90 = vmul.f32 %v19, %v83
  %v91 = vmul.f32 %v20, %v83
  %v92 = vmul.f32 %v21, %v83
  %v93 = vmul.f32 %v22, %v83
  %v94 = vmul.f32 %v23, %v83
  %v95 = vmul.f32 %v24, %v83
  %v96 = vmul.f32 %v25, %v83
  %v97 = vmul.f32 %v26, %v83
  %v98 = vmul.f32 %v27, %v83
  %v99 = vmul.f32 %v28, %v83
  %v100 = vmul.f32 %v29, %v83
  %v101 = vmul.f32 %v30, %v83
  %v102 = vmul.f32 %v31, %v83
  %v103 = vmul.f32 %v32, %v83
  %v104 = vmul.f32 %v33, %v83
  %v105 = vmul.f32 %v34, %v83
  %v106 = vmul.f32 %v35, %v83
  %v107 = vmul.f32 %v36, %v83
  %v108 = vmul.f32 %v37, %v83
  %v109 = vmul.f32 %v38, %v83
  %v110 = vmul.f32 %v39, %v83
  %v111 = vmul.f32 %v40, %v83
  %v112 = vmul.f32 %v41, %v83
  %v113 = vmul.f32 %v42, %v83
  %v114 = vmul.f32 %v43, %v83
  %v115 = vmul.f32 %v44, %v83
  %v116 = vmul.f32 %v45, %v83
  %v117 = vmul.f32 %v46, %v83
  %v118 = vmul.f32 %v47, %v83
  %v119 = vmul.f32 %v48, %v83
  %v120 = vmul.f32 %v49, %v83
  %v121 = vmul.f32 %v50, %v83
  %v122 = vmul.f32 %v51, %v83
  %v123 = vmul.f32 %v52, %v83
  %v124 = vmul.f32 %v53, %v83
  %v125 = vmul.f32 %v54, %v83
  %v126 = vmul.f32 %v55, %v83
  %v127 = vmul.f32 %v56, %v83
  %v128 = vmul.f32 %v57, %v83
  %v129 = vmul.f32 %v58, %v83
  %v130 = vmul.f32 %v59, %v83
  %v131 = vmul.f32 %v60, %v83
  %v132 = vmul.f32 %v61, %v83
  %v133 = vmul.f32 %v62, %v83
  %v134 = vmul.f32 %v63, %v83
  %v135 = vmul.f32 %v64, %v83
  %v136 = vmul.f32 %v65, %v83
  %v137 = vmul.f32 %v66, %v83
  %v138 = vmul.f32 %v67, %v83
  %v139 = vmul.f32 %v68, %v83
  %v140 = vmul.f32 %v69, %v83
  %v141 = vmul.f32 %v70, %v83
  %v142 = vmul.f32 %v71, %v83
  %v143 = vmul.f32 %v72, %v83
  %v144 = vmul.f32 %v73, %v83
  %v145 = vmul.f32 %v74, %v83
  %v146 = vmul.f32 %v75, %v83
  %v147 = vmul.f32 %v76, %v83
  %v148 = vmul.f32 %v77, %v83
  %v149 = vld [vmem:[%s2] sm:$0x1]
  %v151 = vlaneseq
  %v152 = vshrl.u32 %v151, 7
  %v153 = vsub.s32 0, %v152
  %v154 = vrot.slane %v149, %v153
  %v156 = vadd.f32 %v85, %v154
  %v157 = vadd.f32 %v86, %v154
  %v158 = vadd.f32 %v87, %v154
  %v159 = vadd.f32 %v88, %v154
  %v160 = vadd.f32 %v89, %v154
  %v161 = vadd.f32 %v90, %v154
  %v162 = vadd.f32 %v91, %v154
  %v163 = vadd.f32 %v92, %v154
  %v164 = vadd.f32 %v93, %v154
  %v165 = vadd.f32 %v94, %v154
  %v166 = vadd.f32 %v95, %v154
  %v167 = vadd.f32 %v96, %v154
  %v168 = vadd.f32 %v97, %v154
  %v169 = vadd.f32 %v98, %v154
  %v170 = vadd.f32 %v99, %v154
  %v171 = vadd.f32 %v100, %v154
  %v172 = vadd.f32 %v101, %v154
  %v173 = vadd.f32 %v102, %v154
  %v174 = vadd.f32 %v103, %v154
  %v175 = vadd.f32 %v104, %v154
  %v176 = vadd.f32 %v105, %v154
  %v177 = vadd.f32 %v106, %v154
  %v178 = vadd.f32 %v107, %v154
  %v179 = vadd.f32 %v108, %v154
  %v180 = vadd.f32 %v109, %v154
  %v181 = vadd.f32 %v110, %v154
  %v182 = vadd.f32 %v111, %v154
  %v183 = vadd.f32 %v112, %v154
  %v184 = vadd.f32 %v113, %v154
  %v185 = vadd.f32 %v114, %v154
  %v186 = vadd.f32 %v115, %v154
  %v187 = vadd.f32 %v116, %v154
  %v188 = vadd.f32 %v117, %v154
  %v189 = vadd.f32 %v118, %v154
  %v190 = vadd.f32 %v119, %v154
  %v191 = vadd.f32 %v120, %v154
  %v192 = vadd.f32 %v121, %v154
  %v193 = vadd.f32 %v122, %v154
  %v194 = vadd.f32 %v123, %v154
  %v195 = vadd.f32 %v124, %v154
  %v196 = vadd.f32 %v125, %v154
  %v197 = vadd.f32 %v126, %v154
  %v198 = vadd.f32 %v127, %v154
  %v199 = vadd.f32 %v128, %v154
  %v200 = vadd.f32 %v129, %v154
  %v201 = vadd.f32 %v130, %v154
  %v202 = vadd.f32 %v131, %v154
  %v203 = vadd.f32 %v132, %v154
  %v204 = vadd.f32 %v133, %v154
  %v205 = vadd.f32 %v134, %v154
  %v206 = vadd.f32 %v135, %v154
  %v207 = vadd.f32 %v136, %v154
  %v208 = vadd.f32 %v137, %v154
  %v209 = vadd.f32 %v138, %v154
  %v210 = vadd.f32 %v139, %v154
  %v211 = vadd.f32 %v140, %v154
  %v212 = vadd.f32 %v141, %v154
  %v213 = vadd.f32 %v142, %v154
  %v214 = vadd.f32 %v143, %v154
  %v215 = vadd.f32 %v144, %v154
  %v216 = vadd.f32 %v145, %v154
  %v217 = vadd.f32 %v146, %v154
  %v218 = vadd.f32 %v147, %v154
  %v219 = vadd.f32 %v148, %v154
  %vm220 = vcmp.gt.f32.partialorder %v156, 0.0
  %vm221 = vcmp.gt.f32.partialorder %v157, 0.0
  %vm222 = vcmp.gt.f32.partialorder %v158, 0.0
  %vm223 = vcmp.gt.f32.partialorder %v159, 0.0
  %vm224 = vcmp.gt.f32.partialorder %v160, 0.0
  %vm225 = vcmp.gt.f32.partialorder %v161, 0.0
  %vm226 = vcmp.gt.f32.partialorder %v162, 0.0
  %vm227 = vcmp.gt.f32.partialorder %v163, 0.0
  %vm228 = vcmp.gt.f32.partialorder %v164, 0.0
  %vm229 = vcmp.gt.f32.partialorder %v165, 0.0
  %vm230 = vcmp.gt.f32.partialorder %v166, 0.0
  %vm231 = vcmp.gt.f32.partialorder %v167, 0.0
  %vm232 = vcmp.gt.f32.partialorder %v168, 0.0
  %vm233 = vcmp.gt.f32.partialorder %v169, 0.0
  %vm234 = vcmp.gt.f32.partialorder %v170, 0.0
  %vm235 = vcmp.gt.f32.partialorder %v171, 0.0
  %vm236 = vcmp.gt.f32.partialorder %v172, 0.0
  %vm237 = vcmp.gt.f32.partialorder %v173, 0.0
  %vm238 = vcmp.gt.f32.partialorder %v174, 0.0
  %vm239 = vcmp.gt.f32.partialorder %v175, 0.0
  %vm240 = vcmp.gt.f32.partialorder %v176, 0.0
  %vm241 = vcmp.gt.f32.partialorder %v177, 0.0
  %vm242 = vcmp.gt.f32.partialorder %v178, 0.0
  %vm243 = vcmp.gt.f32.partialorder %v179, 0.0
  %vm244 = vcmp.gt.f32.partialorder %v180, 0.0
  %vm245 = vcmp.gt.f32.partialorder %v181, 0.0
  %vm246 = vcmp.gt.f32.partialorder %v182, 0.0
  %vm247 = vcmp.gt.f32.partialorder %v183, 0.0
  %vm248 = vcmp.gt.f32.partialorder %v184, 0.0
  %vm249 = vcmp.gt.f32.partialorder %v185, 0.0
  %vm250 = vcmp.gt.f32.partialorder %v186, 0.0
  %vm251 = vcmp.gt.f32.partialorder %v187, 0.0
  %vm252 = vcmp.gt.f32.partialorder %v188, 0.0
  %vm253 = vcmp.gt.f32.partialorder %v189, 0.0
  %vm254 = vcmp.gt.f32.partialorder %v190, 0.0
  %vm255 = vcmp.gt.f32.partialorder %v191, 0.0
  %vm256 = vcmp.gt.f32.partialorder %v192, 0.0
  %vm257 = vcmp.gt.f32.partialorder %v193, 0.0
  %vm258 = vcmp.gt.f32.partialorder %v194, 0.0
  %vm259 = vcmp.gt.f32.partialorder %v195, 0.0
  %vm260 = vcmp.gt.f32.partialorder %v196, 0.0
  %vm261 = vcmp.gt.f32.partialorder %v197, 0.0
  %vm262 = vcmp.gt.f32.partialorder %v198, 0.0
  %vm263 = vcmp.gt.f32.partialorder %v199, 0.0
  %vm264 = vcmp.gt.f32.partialorder %v200, 0.0
  %vm265 = vcmp.gt.f32.partialorder %v201, 0.0
  %vm266 = vcmp.gt.f32.partialorder %v202, 0.0
  %vm267 = vcmp.gt.f32.partialorder %v203, 0.0
  %vm268 = vcmp.gt.f32.partialorder %v204, 0.0
  %vm269 = vcmp.gt.f32.partialorder %v205, 0.0
  %vm270 = vcmp.gt.f32.partialorder %v206, 0.0
  %vm271 = vcmp.gt.f32.partialorder %v207, 0.0
  %vm272 = vcmp.gt.f32.partialorder %v208, 0.0
  %vm273 = vcmp.gt.f32.partialorder %v209, 0.0
  %vm274 = vcmp.gt.f32.partialorder %v210, 0.0
  %vm275 = vcmp.gt.f32.partialorder %v211, 0.0
  %vm276 = vcmp.gt.f32.partialorder %v212, 0.0
  %vm277 = vcmp.gt.f32.partialorder %v213, 0.0
  %vm278 = vcmp.gt.f32.partialorder %v214, 0.0
  %vm279 = vcmp.gt.f32.partialorder %v215, 0.0
  %vm280 = vcmp.gt.f32.partialorder %v216, 0.0
  %vm281 = vcmp.gt.f32.partialorder %v217, 0.0
  %vm282 = vcmp.gt.f32.partialorder %v218, 0.0
  %vm283 = vcmp.gt.f32.partialorder %v219, 0.0
  %v284 = vmul.f32 %v156, 0.2
  %v285 = vmul.f32 %v157, 0.2
  %v286 = vmul.f32 %v158, 0.2
  %v287 = vmul.f32 %v159, 0.2
  %v288 = vmul.f32 %v160, 0.2
  %v289 = vmul.f32 %v161, 0.2
  %v290 = vmul.f32 %v162, 0.2
  %v291 = vmul.f32 %v163, 0.2
  %v292 = vmul.f32 %v164, 0.2
  %v293 = vmul.f32 %v165, 0.2
  %v294 = vmul.f32 %v166, 0.2
  %v295 = vmul.f32 %v167, 0.2
  %v296 = vmul.f32 %v168, 0.2
  %v297 = vmul.f32 %v169, 0.2
  %v298 = vmul.f32 %v170, 0.2
  %v299 = vmul.f32 %v171, 0.2
  %v300 = vmul.f32 %v172, 0.2
  %v301 = vmul.f32 %v173, 0.2
  %v302 = vmul.f32 %v174, 0.2
  %v303 = vmul.f32 %v175, 0.2
  %v304 = vmul.f32 %v176, 0.2
  %v305 = vmul.f32 %v177, 0.2
  %v306 = vmul.f32 %v178, 0.2
  %v307 = vmul.f32 %v179, 0.2
  %v308 = vmul.f32 %v180, 0.2
  %v309 = vmul.f32 %v181, 0.2
  %v310 = vmul.f32 %v182, 0.2
  %v311 = vmul.f32 %v183, 0.2
  %v312 = vmul.f32 %v184, 0.2
  %v313 = vmul.f32 %v185, 0.2
  %v314 = vmul.f32 %v186, 0.2
  %v315 = vmul.f32 %v187, 0.2
  %v316 = vmul.f32 %v188, 0.2
  %v317 = vmul.f32 %v189, 0.2
  %v318 = vmul.f32 %v190, 0.2
  %v319 = vmul.f32 %v191, 0.2
  %v320 = vmul.f32 %v192, 0.2
  %v321 = vmul.f32 %v193, 0.2
  %v322 = vmul.f32 %v194, 0.2
  %v323 = vmul.f32 %v195, 0.2
  %v324 = vmul.f32 %v196, 0.2
  %v325 = vmul.f32 %v197, 0.2
  %v326 = vmul.f32 %v198, 0.2
  %v327 = vmul.f32 %v199, 0.2
  %v328 = vmul.f32 %v200, 0.2
  %v329 = vmul.f32 %v201, 0.2
  %v330 = vmul.f32 %v202, 0.2
  %v331 = vmul.f32 %v203, 0.2
  %v332 = vmul.f32 %v204, 0.2
  %v333 = vmul.f32 %v205, 0.2
  %v334 = vmul.f32 %v206, 0.2
  %v335 = vmul.f32 %v207, 0.2
  %v336 = vmul.f32 %v208, 0.2
  %v337 = vmul.f32 %v209, 0.2
  %v338 = vmul.f32 %v210, 0.2
  %v339 = vmul.f32 %v211, 0.2
  %v340 = vmul.f32 %v212, 0.2
  %v341 = vmul.f32 %v213, 0.2
  %v342 = vmul.f32 %v214, 0.2
  %v343 = vmul.f32 %v215, 0.2
  %v344 = vmul.f32 %v216, 0.2
  %v345 = vmul.f32 %v217, 0.2
  %v346 = vmul.f32 %v218, 0.2
  %v347 = vmul.f32 %v219, 0.2
  %v348 = vsel %vm220, %v156, %v284
  %v349 = vsel %vm221, %v157, %v285
  %v350 = vsel %vm222, %v158, %v286
  %v351 = vsel %vm223, %v159, %v287
  %v352 = vsel %vm224, %v160, %v288
  %v353 = vsel %vm225, %v161, %v289
  %v354 = vsel %vm226, %v162, %v290
  %v355 = vsel %vm227, %v163, %v291
  %v356 = vsel %vm228, %v164, %v292
  %v357 = vsel %vm229, %v165, %v293
  %v358 = vsel %vm230, %v166, %v294
  %v359 = vsel %vm231, %v167, %v295
  %v360 = vsel %vm232, %v168, %v296
  %v361 = vsel %vm233, %v169, %v297
  %v362 = vsel %vm234, %v170, %v298
  %v363 = vsel %vm235, %v171, %v299
  %v364 = vsel %vm236, %v172, %v300
  %v365 = vsel %vm237, %v173, %v301
  %v366 = vsel %vm238, %v174, %v302
  %v367 = vsel %vm239, %v175, %v303
  %v368 = vsel %vm240, %v176, %v304
  %v369 = vsel %vm241, %v177, %v305
  %v370 = vsel %vm242, %v178, %v306
  %v371 = vsel %vm243, %v179, %v307
  %v372 = vsel %vm244, %v180, %v308
  %v373 = vsel %vm245, %v181, %v309
  %v374 = vsel %vm246, %v182, %v310
  %v375 = vsel %vm247, %v183, %v311
  %v376 = vsel %vm248, %v184, %v312
  %v377 = vsel %vm249, %v185, %v313
  %v378 = vsel %vm250, %v186, %v314
  %v379 = vsel %vm251, %v187, %v315
  %v380 = vsel %vm252, %v188, %v316
  %v381 = vsel %vm253, %v189, %v317
  %v382 = vsel %vm254, %v190, %v318
  %v383 = vsel %vm255, %v191, %v319
  %v384 = vsel %vm256, %v192, %v320
  %v385 = vsel %vm257, %v193, %v321
  %v386 = vsel %vm258, %v194, %v322
  %v387 = vsel %vm259, %v195, %v323
  %v388 = vsel %vm260, %v196, %v324
  %v389 = vsel %vm261, %v197, %v325
  %v390 = vsel %vm262, %v198, %v326
  %v391 = vsel %vm263, %v199, %v327
  %v392 = vsel %vm264, %v200, %v328
  %v393 = vsel %vm265, %v201, %v329
  %v394 = vsel %vm266, %v202, %v330
  %v395 = vsel %vm267, %v203, %v331
  %v396 = vsel %vm268, %v204, %v332
  %v397 = vsel %vm269, %v205, %v333
  %v398 = vsel %vm270, %v206, %v334
  %v399 = vsel %vm271, %v207, %v335
  %v400 = vsel %vm272, %v208, %v336
  %v401 = vsel %vm273, %v209, %v337
  %v402 = vsel %vm274, %v210, %v338
  %v403 = vsel %vm275, %v211, %v339
  %v404 = vsel %vm276, %v212, %v340
  %v405 = vsel %vm277, %v213, %v341
  %v406 = vsel %vm278, %v214, %v342
  %v407 = vsel %vm279, %v215, %v343
  %v408 = vsel %vm280, %v216, %v344
  %v409 = vsel %vm281, %v217, %v345
  %v410 = vsel %vm282, %v218, %v346
  %v411 = vsel %vm283, %v219, %v347
  %412 = vst [vmem:[%s3] sm:$0xff] %v348
  %413 = vst [vmem:[%s3 + $0x8] sm:$0xff] %v349
  %414 = vst [vmem:[%s3 + $0x10] sm:$0xff] %v350
  %415 = vst [vmem:[%s3 + $0x18] sm:$0xff] %v351
  %416 = vst [vmem:[%s3 + $0x20] sm:$0xff] %v352
  %417 = vst [vmem:[%s3 + $0x28] sm:$0xff] %v353
  %418 = vst [vmem:[%s3 + $0x30] sm:$0xff] %v354
  %419 = vst [vmem:[%s3 + $0x38] sm:$0xff] %v355
  %420 = vst [vmem:[%s3 + $0x40] sm:$0xff] %v356
  %421 = vst [vmem:[%s3 + $0x48] sm:$0xff] %v357
  %422 = vst [vmem:[%s3 + $0x50] sm:$0xff] %v358
  %423 = vst [vmem:[%s3 + $0x58] sm:$0xff] %v359
  %424 = vst [vmem:[%s3 + $0x60] sm:$0xff] %v360
  %425 = vst [vmem:[%s3 + $0x68] sm:$0xff] %v361
  %426 = vst [vmem:[%s3 + $0x70] sm:$0xff] %v362
  %427 = vst [vmem:[%s3 + $0x78] sm:$0xff] %v363
  %428 = vst [vmem:[%s3 + $0x80] sm:$0xff] %v364
  %429 = vst [vmem:[%s3 + $0x88] sm:$0xff] %v365
  %430 = vst [vmem:[%s3 + $0x90] sm:$0xff] %v366
  %431 = vst [vmem:[%s3 + $0x98] sm:$0xff] %v367
  %432 = vst [vmem:[%s3 + $0xa0] sm:$0xff] %v368
  %433 = vst [vmem:[%s3 + $0xa8] sm:$0xff] %v369
  %434 = vst [vmem:[%s3 + $0xb0] sm:$0xff] %v370
  %435 = vst [vmem:[%s3 + $0xb8] sm:$0xff] %v371
  %436 = vst [vmem:[%s3 + $0xc0] sm:$0xff] %v372
  %437 = vst [vmem:[%s3 + $0xc8] sm:$0xff] %v373
  %438 = vst [vmem:[%s3 + $0xd0] sm:$0xff] %v374
  %439 = vst [vmem:[%s3 + $0xd8] sm:$0xff] %v375
  %440 = vst [vmem:[%s3 + $0xe0] sm:$0xff] %v376
  %441 = vst [vmem:[%s3 + $0xe8] sm:$0xff] %v377
  %442 = vst [vmem:[%s3 + $0xf0] sm:$0xff] %v378
  %443 = vst [vmem:[%s3 + $0xf8] sm:$0xff] %v379
  %444 = vst [vmem:[%s3 + $0x100] sm:$0xff] %v380
  %445 = vst [vmem:[%s3 + $0x108] sm:$0xff] %v381
  %446 = vst [vmem:[%s3 + $0x110] sm:$0xff] %v382
  %447 = vst [vmem:[%s3 + $0x118] sm:$0xff] %v383
  %448 = vst [vmem:[%s3 + $0x120] sm:$0xff] %v384
  %449 = vst [vmem:[%s3 + $0x128] sm:$0xff] %v385
  %450 = vst [vmem:[%s3 + $0x130] sm:$0xff] %v386
  %451 = vst [vmem:[%s3 + $0x138] sm:$0xff] %v387
  %452 = vst [vmem:[%s3 + $0x140] sm:$0xff] %v388
  %453 = vst [vmem:[%s3 + $0x148] sm:$0xff] %v389
  %454 = vst [vmem:[%s3 + $0x150] sm:$0xff] %v390
  %455 = vst [vmem:[%s3 + $0x158] sm:$0xff] %v391
  %456 = vst [vmem:[%s3 + $0x160] sm:$0xff] %v392
  %457 = vst [vmem:[%s3 + $0x168] sm:$0xff] %v393
  %458 = vst [vmem:[%s3 + $0x170] sm:$0xff] %v394
  %459 = vst [vmem:[%s3 + $0x178] sm:$0xff] %v395
  %460 = vst [vmem:[%s3 + $0x180] sm:$0xff] %v396
  %461 = vst [vmem:[%s3 + $0x188] sm:$0xff] %v397
  %462 = vst [vmem:[%s3 + $0x190] sm:$0xff] %v398
  %463 = vst [vmem:[%s3 + $0x198] sm:$0xff] %v399
  %464 = vst [vmem:[%s3 + $0x1a0] sm:$0xff] %v400
  %465 = vst [vmem:[%s3 + $0x1a8] sm:$0xff] %v401
  %466 = vst [vmem:[%s3 + $0x1b0] sm:$0xff] %v402
  %467 = vst [vmem:[%s3 + $0x1b8] sm:$0xff] %v403
  %468 = vst [vmem:[%s3 + $0x1c0] sm:$0xff] %v404
  %469 = vst [vmem:[%s3 + $0x1c8] sm:$0xff] %v405
  %470 = vst [vmem:[%s3 + $0x1d0] sm:$0xff] %v406
  %471 = vst [vmem:[%s3 + $0x1d8] sm:$0xff] %v407
  %472 = vst [vmem:[%s3 + $0x1e0] sm:$0xff] %v408
  %473 = vst [vmem:[%s3 + $0x1e8] sm:$0xff] %v409
  %474 = vst [vmem:[%s3 + $0x1f0] sm:$0xff] %v410
  %475 = vst [vmem:[%s3 + $0x1f8] sm:$0xff] %v411
  // Predicated region
  $region14: #{discriminator_forward.10} parent=0 // pred_check
    _
  $region15: #{discriminator_forward.10} parent=0 // pred_check_branch
    %477 = sbr.rel (0) target = $region17
  $region16: #{discriminator_forward.10} parent=0 // pred_region
    _
  $region17: #{discriminator_forward.10} parent=0 // pred_fallthru
    _
  // Predicated region
  $region18: #{discriminator_forward.10} parent=0 // pred_check
    _
  $region19: #{discriminator_forward.10} parent=0 // pred_check_branch
    %479 = sbr.rel (0) target = $region21
  $region20: #{discriminator_forward.10} parent=0 // pred_region
    _
  $region21: #{discriminator_forward.10} parent=0 // pred_fallthru
    _

// kernel: discriminator_forward.9
$region0: #{discriminator_forward.9}
  #allocation0 [shape = 'u32[]', space=smem, size = 0x4, offset = 0x4, fixed_abs, tag = 'smem constant byte address 0x4 - core index']
  #allocation1 [shape = 'u32[144,128]{1,0:T(1,128)}', space=vmem, size = 0x12000, scoped, tag = 'internal scratch']
  #allocation2 [shape = 'f32[512,128]{1,0:T(8,128)}', space=vmem, size = 0x40000, scoped, tag = 'scratch operand']
  %s0 = inlined_call_operand.vmem [shape: bf16[512,128], index: 0, kind: input, shape index: {}]
  %s1 = inlined_call_operand.vmem [shape: bf16[128,128], index: 1, kind: input, shape index: {}]
  %s2 = inlined_call_operand.vmem [shape: f32[1,128], index: 2, kind: input, shape index: {}]
  %s3 = inlined_call_operand.vmem [shape: f32[512,128], index: 3, kind: output, shape index: {0}]
  %s4 = inlined_call_operand.vmem [shape: f32[1,2,128], index: 4, kind: output, shape index: {1}]
  %5 = xla_tuple %s3, %s4
  %s6 = sld [smem:[#allocation0]]
  $region38: #{discriminator_forward.9} parent=0
    _
  %s8 = ssub.s32 1, %s6
  %s9 = scalar_select 0, %s8, %s6
  // Predicated region
  $region2: #{discriminator_forward.9} parent=0 // pred_check
    _
  $region3: #{discriminator_forward.9} parent=0 // pred_check_branch
    %11 = sbr.rel (0) target = $region5
  $region4: #{discriminator_forward.9} parent=0 // pred_region
    _
  $region5: #{discriminator_forward.9} parent=0 // pred_fallthru
    _
  // Predicated region
  $region6: #{discriminator_forward.9} parent=0 // pred_check
    _
  $region7: #{discriminator_forward.9} parent=0 // pred_check_branch
    %13 = sbr.rel (0) target = $region9
  $region8: #{discriminator_forward.9} parent=0 // pred_region
    _
  $region9: #{discriminator_forward.9} parent=0 // pred_fallthru
    _
  // Predicated region
  $region10: #{discriminator_forward.9} parent=0 // pred_check
    _
  $region11: #{discriminator_forward.9} parent=0 // pred_check_branch
    %15 = sbr.rel (0) target = $region13
  $region12: #{discriminator_forward.9} parent=0 // pred_region
    _
  $region13: #{discriminator_forward.9} parent=0 // pred_fallthru
    _
  %p17 = scmp.eq.s32.totalorder 0, 0
  // Predicated region
  $region14: #{discriminator_forward.9} parent=0 // pred_check
    %p18 = pneg %p17
  $region15: #{discriminator_forward.9} parent=0 // pred_check_branch
    %20 = sbr.rel (%p18) target = $region17
  $region16: #{discriminator_forward.9} parent=0 // pred_region
    %21 = vst [vmem:[#allocation2] sm:$0xff] 0.0
    %22 = vst [vmem:[#allocation2 + $0x8] sm:$0xff] 0.0
    %23 = vst [vmem:[#allocation2 + $0x10] sm:$0xff] 0.0
    %24 = vst [vmem:[#allocation2 + $0x18] sm:$0xff] 0.0
    %25 = vst [vmem:[#allocation2 + $0x20] sm:$0xff] 0.0
    %26 = vst [vmem:[#allocation2 + $0x28] sm:$0xff] 0.0
    %27 = vst [vmem:[#allocation2 + $0x30] sm:$0xff] 0.0
    %28 = vst [vmem:[#allocation2 + $0x38] sm:$0xff] 0.0
    %29 = vst [vmem:[#allocation2 + $0x40] sm:$0xff] 0.0
    %30 = vst [vmem:[#allocation2 + $0x48] sm:$0xff] 0.0
    %31 = vst [vmem:[#allocation2 + $0x50] sm:$0xff] 0.0
    %32 = vst [vmem:[#allocation2 + $0x58] sm:$0xff] 0.0
    %33 = vst [vmem:[#allocation2 + $0x60] sm:$0xff] 0.0
    %34 = vst [vmem:[#allocation2 + $0x68] sm:$0xff] 0.0
    %35 = vst [vmem:[#allocation2 + $0x70] sm:$0xff] 0.0
    %36 = vst [vmem:[#allocation2 + $0x78] sm:$0xff] 0.0
    %37 = vst [vmem:[#allocation2 + $0x80] sm:$0xff] 0.0
    %38 = vst [vmem:[#allocation2 + $0x88] sm:$0xff] 0.0
    %39 = vst [vmem:[#allocation2 + $0x90] sm:$0xff] 0.0
    %40 = vst [vmem:[#allocation2 + $0x98] sm:$0xff] 0.0
    %41 = vst [vmem:[#allocation2 + $0xa0] sm:$0xff] 0.0
    %42 = vst [vmem:[#allocation2 + $0xa8] sm:$0xff] 0.0
    %43 = vst [vmem:[#allocation2 + $0xb0] sm:$0xff] 0.0
    %44 = vst [vmem:[#allocation2 + $0xb8] sm:$0xff] 0.0
    %45 = vst [vmem:[#allocation2 + $0xc0] sm:$0xff] 0.0
    %46 = vst [vmem:[#allocation2 + $0xc8] sm:$0xff] 0.0
    %47 = vst [vmem:[#allocation2 + $0xd0] sm:$0xff] 0.0
    %48 = vst [vmem:[#allocation2 + $0xd8] sm:$0xff] 0.0
    %49 = vst [vmem:[#allocation2 + $0xe0] sm:$0xff] 0.0
    %50 = vst [vmem:[#allocation2 + $0xe8] sm:$0xff] 0.0
    %51 = vst [vmem:[#allocation2 + $0xf0] sm:$0xff] 0.0
    %52 = vst [vmem:[#allocation2 + $0xf8] sm:$0xff] 0.0
    %53 = vst [vmem:[#allocation2 + $0x100] sm:$0xff] 0.0
    %54 = vst [vmem:[#allocation2 + $0x108] sm:$0xff] 0.0
    %55 = vst [vmem:[#allocation2 + $0x110] sm:$0xff] 0.0
    %56 = vst [vmem:[#allocation2 + $0x118] sm:$0xff] 0.0
    %57 = vst [vmem:[#allocation2 + $0x120] sm:$0xff] 0.0
    %58 = vst [vmem:[#allocation2 + $0x128] sm:$0xff] 0.0
    %59 = vst [vmem:[#allocation2 + $0x130] sm:$0xff] 0.0
    %60 = vst [vmem:[#allocation2 + $0x138] sm:$0xff] 0.0
    %61 = vst [vmem:[#allocation2 + $0x140] sm:$0xff] 0.0
    %62 = vst [vmem:[#allocation2 + $0x148] sm:$0xff] 0.0
    %63 = vst [vmem:[#allocation2 + $0x150] sm:$0xff] 0.0
    %64 = vst [vmem:[#allocation2 + $0x158] sm:$0xff] 0.0
    %65 = vst [vmem:[#allocation2 + $0x160] sm:$0xff] 0.0
    %66 = vst [vmem:[#allocation2 + $0x168] sm:$0xff] 0.0
    %67 = vst [vmem:[#allocation2 + $0x170] sm:$0xff] 0.0
    %68 = vst [vmem:[#allocation2 + $0x178] sm:$0xff] 0.0
    %69 = vst [vmem:[#allocation2 + $0x180] sm:$0xff] 0.0
    %70 = vst [vmem:[#allocation2 + $0x188] sm:$0xff] 0.0
    %71 = vst [vmem:[#allocation2 + $0x190] sm:$0xff] 0.0
    %72 = vst [vmem:[#allocation2 + $0x198] sm:$0xff] 0.0
    %73 = vst [vmem:[#allocation2 + $0x1a0] sm:$0xff] 0.0
    %74 = vst [vmem:[#allocation2 + $0x1a8] sm:$0xff] 0.0
    %75 = vst [vmem:[#allocation2 + $0x1b0] sm:$0xff] 0.0
    %76 = vst [vmem:[#allocation2 + $0x1b8] sm:$0xff] 0.0
    %77 = vst [vmem:[#allocation2 + $0x1c0] sm:$0xff] 0.0
    %78 = vst [vmem:[#allocation2 + $0x1c8] sm:$0xff] 0.0
    %79 = vst [vmem:[#allocation2 + $0x1d0] sm:$0xff] 0.0
    %80 = vst [vmem:[#allocation2 + $0x1d8] sm:$0xff] 0.0
    %81 = vst [vmem:[#allocation2 + $0x1e0] sm:$0xff] 0.0
    %82 = vst [vmem:[#allocation2 + $0x1e8] sm:$0xff] 0.0
    %83 = vst [vmem:[#allocation2 + $0x1f0] sm:$0xff] 0.0
    %84 = vst [vmem:[#allocation2 + $0x1f8] sm:$0xff] 0.0
  $region17: #{discriminator_forward.9} parent=0 // pred_fallthru
    _
  %v85 = vld [vmem:[#allocation2] sm:$0xff]
  %v86 = vld [vmem:[#allocation2 + $0x8] sm:$0xff]
  %v87 = vld [vmem:[#allocation2 + $0x10] sm:$0xff]
  %v88 = vld [vmem:[#allocation2 + $0x18] sm:$0xff]
  %v89 = vld [vmem:[#allocation2 + $0x20] sm:$0xff]
  %v90 = vld [vmem:[#allocation2 + $0x28] sm:$0xff]
  %v91 = vld [vmem:[#allocation2 + $0x30] sm:$0xff]
  %v92 = vld [vmem:[#allocation2 + $0x38] sm:$0xff]
  %v93 = vld [vmem:[#allocation2 + $0x40] sm:$0xff]
  %v94 = vld [vmem:[#allocation2 + $0x48] sm:$0xff]
  %v95 = vld [vmem:[#allocation2 + $0x50] sm:$0xff]
  %v96 = vld [vmem:[#allocation2 + $0x58] sm:$0xff]
  %v97 = vld [vmem:[#allocation2 + $0x60] sm:$0xff]
  %v98 = vld [vmem:[#allocation2 + $0x68] sm:$0xff]
  %v99 = vld [vmem:[#allocation2 + $0x70] sm:$0xff]
  %v100 = vld [vmem:[#allocation2 + $0x78] sm:$0xff]
  %v101 = vld [vmem:[#allocation2 + $0x80] sm:$0xff]
  %v102 = vld [vmem:[#allocation2 + $0x88] sm:$0xff]
  %v103 = vld [vmem:[#allocation2 + $0x90] sm:$0xff]
  %v104 = vld [vmem:[#allocation2 + $0x98] sm:$0xff]
  %v105 = vld [vmem:[#allocation2 + $0xa0] sm:$0xff]
  %v106 = vld [vmem:[#allocation2 + $0xa8] sm:$0xff]
  %v107 = vld [vmem:[#allocation2 + $0xb0] sm:$0xff]
  %v108 = vld [vmem:[#allocation2 + $0xb8] sm:$0xff]
  %v109 = vld [vmem:[#allocation2 + $0xc0] sm:$0xff]
  %v110 = vld [vmem:[#allocation2 + $0xc8] sm:$0xff]
  %v111 = vld [vmem:[#allocation2 + $0xd0] sm:$0xff]
  %v112 = vld [vmem:[#allocation2 + $0xd8] sm:$0xff]
  %v113 = vld [vmem:[#allocation2 + $0xe0] sm:$0xff]
  %v114 = vld [vmem:[#allocation2 + $0xe8] sm:$0xff]
  %v115 = vld [vmem:[#allocation2 + $0xf0] sm:$0xff]
  %v116 = vld [vmem:[#allocation2 + $0xf8] sm:$0xff]
  %v117 = vld [vmem:[#allocation2 + $0x100] sm:$0xff]
  %v118 = vld [vmem:[#allocation2 + $0x108] sm:$0xff]
  %v119 = vld [vmem:[#allocation2 + $0x110] sm:$0xff]
  %v120 = vld [vmem:[#allocation2 + $0x118] sm:$0xff]
  %v121 = vld [vmem:[#allocation2 + $0x120] sm:$0xff]
  %v122 = vld [vmem:[#allocation2 + $0x128] sm:$0xff]
  %v123 = vld [vmem:[#allocation2 + $0x130] sm:$0xff]
  %v124 = vld [vmem:[#allocation2 + $0x138] sm:$0xff]
  %v125 = vld [vmem:[#allocation2 + $0x140] sm:$0xff]
  %v126 = vld [vmem:[#allocation2 + $0x148] sm:$0xff]
  %v127 = vld [vmem:[#allocation2 + $0x150] sm:$0xff]
  %v128 = vld [vmem:[#allocation2 + $0x158] sm:$0xff]
  %v129 = vld [vmem:[#allocation2 + $0x160] sm:$0xff]
  %v130 = vld [vmem:[#allocation2 + $0x168] sm:$0xff]
  %v131 = vld [vmem:[#allocation2 + $0x170] sm:$0xff]
  %v132 = vld [vmem:[#allocation2 + $0x178] sm:$0xff]
  %v133 = vld [vmem:[#allocation2 + $0x180] sm:$0xff]
  %v134 = vld [vmem:[#allocation2 + $0x188] sm:$0xff]
  %v135 = vld [vmem:[#allocation2 + $0x190] sm:$0xff]
  %v136 = vld [vmem:[#allocation2 + $0x198] sm:$0xff]
  %v137 = vld [vmem:[#allocation2 + $0x1a0] sm:$0xff]
  %v138 = vld [vmem:[#allocation2 + $0x1a8] sm:$0xff]
  %v139 = vld [vmem:[#allocation2 + $0x1b0] sm:$0xff]
  %v140 = vld [vmem:[#allocation2 + $0x1b8] sm:$0xff]
  %v141 = vld [vmem:[#allocation2 + $0x1c0] sm:$0xff]
  %v142 = vld [vmem:[#allocation2 + $0x1c8] sm:$0xff]
  %v143 = vld [vmem:[#allocation2 + $0x1d0] sm:$0xff]
  %v144 = vld [vmem:[#allocation2 + $0x1d8] sm:$0xff]
  %v145 = vld [vmem:[#allocation2 + $0x1e0] sm:$0xff]
  %v146 = vld [vmem:[#allocation2 + $0x1e8] sm:$0xff]
  %v147 = vld [vmem:[#allocation2 + $0x1f0] sm:$0xff]
  %v148 = vld [vmem:[#allocation2 + $0x1f8] sm:$0xff]
  %v149 = vld [vmem:[%s0] sm:$0xf]
  %v150 = vld [vmem:[%s0 + $0x4] sm:$0xf]
  %v151 = vld [vmem:[%s0 + $0x8] sm:$0xf]
  %v152 = vld [vmem:[%s0 + $0xc] sm:$0xf]
  %v153 = vld [vmem:[%s0 + $0x10] sm:$0xf]
  %v154 = vld [vmem:[%s0 + $0x14] sm:$0xf]
  %v155 = vld [vmem:[%s0 + $0x18] sm:$0xf]
  %v156 = vld [vmem:[%s0 + $0x1c] sm:$0xf]
  %v157 = vld [vmem:[%s0 + $0x20] sm:$0xf]
  %v158 = vld [vmem:[%s0 + $0x24] sm:$0xf]
  %v159 = vld [vmem:[%s0 + $0x28] sm:$0xf]
  %v160 = vld [vmem:[%s0 + $0x2c] sm:$0xf]
  %v161 = vld [vmem:[%s0 + $0x30] sm:$0xf]
  %v162 = vld [vmem:[%s0 + $0x34] sm:$0xf]
  %v163 = vld [vmem:[%s0 + $0x38] sm:$0xf]
  %v164 = vld [vmem:[%s0 + $0x3c] sm:$0xf]
  %v165 = vld [vmem:[%s0 + $0x40] sm:$0xf]
  %v166 = vld [vmem:[%s0 + $0x44] sm:$0xf]
  %v167 = vld [vmem:[%s0 + $0x48] sm:$0xf]
  %v168 = vld [vmem:[%s0 + $0x4c] sm:$0xf]
  %v169 = vld [vmem:[%s0 + $0x50] sm:$0xf]
  %v170 = vld [vmem:[%s0 + $0x54] sm:$0xf]
  %v171 = vld [vmem:[%s0 + $0x58] sm:$0xf]
  %v172 = vld [vmem:[%s0 + $0x5c] sm:$0xf]
  %v173 = vld [vmem:[%s0 + $0x60] sm:$0xf]
  %v174 = vld [vmem:[%s0 + $0x64] sm:$0xf]
  %v175 = vld [vmem:[%s0 + $0x68] sm:$0xf]
  %v176 = vld [vmem:[%s0 + $0x6c] sm:$0xf]
  %v177 = vld [vmem:[%s0 + $0x70] sm:$0xf]
  %v178 = vld [vmem:[%s0 + $0x74] sm:$0xf]
  %v179 = vld [vmem:[%s0 + $0x78] sm:$0xf]
  %v180 = vld [vmem:[%s0 + $0x7c] sm:$0xf]
  %v181 = vld [vmem:[%s0 + $0x80] sm:$0xf]
  %v182 = vld [vmem:[%s0 + $0x84] sm:$0xf]
  %v183 = vld [vmem:[%s0 + $0x88] sm:$0xf]
  %v184 = vld [vmem:[%s0 + $0x8c] sm:$0xf]
  %v185 = vld [vmem:[%s0 + $0x90] sm:$0xf]
  %v186 = vld [vmem:[%s0 + $0x94] sm:$0xf]
  %v187 = vld [vmem:[%s0 + $0x98] sm:$0xf]
  %v188 = vld [vmem:[%s0 + $0x9c] sm:$0xf]
  %v189 = vld [vmem:[%s0 + $0xa0] sm:$0xf]
  %v190 = vld [vmem:[%s0 + $0xa4] sm:$0xf]
  %v191 = vld [vmem:[%s0 + $0xa8] sm:$0xf]
  %v192 = vld [vmem:[%s0 + $0xac] sm:$0xf]
  %v193 = vld [vmem:[%s0 + $0xb0] sm:$0xf]
  %v194 = vld [vmem:[%s0 + $0xb4] sm:$0xf]
  %v195 = vld [vmem:[%s0 + $0xb8] sm:$0xf]
  %v196 = vld [vmem:[%s0 + $0xbc] sm:$0xf]
  %v197 = vld [vmem:[%s0 + $0xc0] sm:$0xf]
  %v198 = vld [vmem:[%s0 + $0xc4] sm:$0xf]
  %v199 = vld [vmem:[%s0 + $0xc8] sm:$0xf]
  %v200 = vld [vmem:[%s0 + $0xcc] sm:$0xf]
  %v201 = vld [vmem:[%s0 + $0xd0] sm:$0xf]
  %v202 = vld [vmem:[%s0 + $0xd4] sm:$0xf]
  %v203 = vld [vmem:[%s0 + $0xd8] sm:$0xf]
  %v204 = vld [vmem:[%s0 + $0xdc] sm:$0xf]
  %v205 = vld [vmem:[%s0 + $0xe0] sm:$0xf]
  %v206 = vld [vmem:[%s0 + $0xe4] sm:$0xf]
  %v207 = vld [vmem:[%s0 + $0xe8] sm:$0xf]
  %v208 = vld [vmem:[%s0 + $0xec] sm:$0xf]
  %v209 = vld [vmem:[%s0 + $0xf0] sm:$0xf]
  %v210 = vld [vmem:[%s0 + $0xf4] sm:$0xf]
  %v211 = vld [vmem:[%s0 + $0xf8] sm:$0xf]
  %v212 = vld [vmem:[%s0 + $0xfc] sm:$0xf]
  %v213 = vld [vmem:[%s1] sm:$0xf]
  %v214 = vld [vmem:[%s1 + $0x4] sm:$0xf]
  %v215 = vld [vmem:[%s1 + $0x8] sm:$0xf]
  %v216 = vld [vmem:[%s1 + $0xc] sm:$0xf]
  %v217 = vld [vmem:[%s1 + $0x10] sm:$0xf]
  %v218 = vld [vmem:[%s1 + $0x14] sm:$0xf]
  %v219 = vld [vmem:[%s1 + $0x18] sm:$0xf]
  %v220 = vld [vmem:[%s1 + $0x1c] sm:$0xf]
  %v221 = vld [vmem:[%s1 + $0x20] sm:$0xf]
  %v222 = vld [vmem:[%s1 + $0x24] sm:$0xf]
  %v223 = vld [vmem:[%s1 + $0x28] sm:$0xf]
  %v224 = vld [vmem:[%s1 + $0x2c] sm:$0xf]
  %v225 = vld [vmem:[%s1 + $0x30] sm:$0xf]
  %v226 = vld [vmem:[%s1 + $0x34] sm:$0xf]
  %v227 = vld [vmem:[%s1 + $0x38] sm:$0xf]
  %v228 = vld [vmem:[%s1 + $0x3c] sm:$0xf]
  %v293 = vunpack.c.l.b16 %v149
  %v294 = vunpack.c.l.b16 %v150
  %v295 = vunpack.c.l.b16 %v151
  %v296 = vunpack.c.l.b16 %v152
  %v297 = vunpack.c.l.b16 %v153
  %v298 = vunpack.c.l.b16 %v154
  %v299 = vunpack.c.l.b16 %v155
  %v300 = vunpack.c.l.b16 %v156
  %v301 = vunpack.c.l.b16 %v157
  %v302 = vunpack.c.l.b16 %v158
  %v303 = vunpack.c.l.b16 %v159
  %v304 = vunpack.c.l.b16 %v160
  %v305 = vunpack.c.l.b16 %v161
  %v306 = vunpack.c.l.b16 %v162
  %v307 = vunpack.c.l.b16 %v163
  %v308 = vunpack.c.l.b16 %v164
  %v309 = vunpack.c.l.b16 %v165
  %v310 = vunpack.c.l.b16 %v166
  %v311 = vunpack.c.l.b16 %v167
  %v312 = vunpack.c.l.b16 %v168
  %v313 = vunpack.c.l.b16 %v169
  %v314 = vunpack.c.l.b16 %v170
  %v315 = vunpack.c.l.b16 %v171
  %v316 = vunpack.c.l.b16 %v172
  %v317 = vunpack.c.l.b16 %v173
  %v318 = vunpack.c.l.b16 %v174
  %v319 = vunpack.c.l.b16 %v175
  %v320 = vunpack.c.l.b16 %v176
  %v321 = vunpack.c.l.b16 %v177
  %v322 = vunpack.c.l.b16 %v178
  %v323 = vunpack.c.l.b16 %v179
  %v324 = vunpack.c.l.b16 %v180
  %v325 = vunpack.c.l.b16 %v181
  %v326 = vunpack.c.l.b16 %v182
  %v327 = vunpack.c.l.b16 %v183
  %v328 = vunpack.c.l.b16 %v184
  %v329 = vunpack.c.l.b16 %v185
  %v330 = vunpack.c.l.b16 %v186
  %v331 = vunpack.c.l.b16 %v187
  %v332 = vunpack.c.l.b16 %v188
  %v333 = vunpack.c.l.b16 %v189
  %v334 = vunpack.c.l.b16 %v190
  %v335 = vunpack.c.l.b16 %v191
  %v336 = vunpack.c.l.b16 %v192
  %v337 = vunpack.c.l.b16 %v193
  %v338 = vunpack.c.l.b16 %v194
  %v339 = vunpack.c.l.b16 %v195
  %v340 = vunpack.c.l.b16 %v196
  %v341 = vunpack.c.l.b16 %v197
  %v342 = vunpack.c.l.b16 %v198
  %v343 = vunpack.c.l.b16 %v199
  %v344 = vunpack.c.l.b16 %v200
  %v345 = vunpack.c.l.b16 %v201
  %v346 = vunpack.c.l.b16 %v202
  %v347 = vunpack.c.l.b16 %v203
  %v348 = vunpack.c.l.b16 %v204
  %v349 = vunpack.c.l.b16 %v205
  %v350 = vunpack.c.l.b16 %v206
  %v351 = vunpack.c.l.b16 %v207
  %v352 = vunpack.c.l.b16 %v208
  %v353 = vunpack.c.l.b16 %v209
  %v354 = vunpack.c.l.b16 %v210
  %v355 = vunpack.c.l.b16 %v211
  %v356 = vunpack.c.l.b16 %v212
  %v357 = vpack.c.b16 %v294, %v293
  %v358 = vpack.c.b16 %v296, %v295
  %v359 = vpack.c.b16 %v298, %v297
  %v360 = vpack.c.b16 %v300, %v299
  %v361 = vpack.c.b16 %v302, %v301
  %v362 = vpack.c.b16 %v304, %v303
  %v363 = vpack.c.b16 %v306, %v305
  %v364 = vpack.c.b16 %v308, %v307
  %v365 = vpack.c.b16 %v310, %v309
  %v366 = vpack.c.b16 %v312, %v311
  %v367 = vpack.c.b16 %v314, %v313
  %v368 = vpack.c.b16 %v316, %v315
  %v369 = vpack.c.b16 %v318, %v317
  %v370 = vpack.c.b16 %v320, %v319
  %v371 = vpack.c.b16 %v322, %v321
  %v372 = vpack.c.b16 %v324, %v323
  %v373 = vpack.c.b16 %v326, %v325
  %v374 = vpack.c.b16 %v328, %v327
  %v375 = vpack.c.b16 %v330, %v329
  %v376 = vpack.c.b16 %v332, %v331
  %v377 = vpack.c.b16 %v334, %v333
  %v378 = vpack.c.b16 %v336, %v335
  %v379 = vpack.c.b16 %v338, %v337
  %v380 = vpack.c.b16 %v340, %v339
  %v381 = vpack.c.b16 %v342, %v341
  %v382 = vpack.c.b16 %v344, %v343
  %v383 = vpack.c.b16 %v346, %v345
  %v384 = vpack.c.b16 %v348, %v347
  %v385 = vpack.c.b16 %v350, %v349
  %v386 = vpack.c.b16 %v352, %v351
  %v387 = vpack.c.b16 %v354, %v353
  %v388 = vpack.c.b16 %v356, %v355
  %v437 = vunpack.c.l.b16 %v213
  %v438 = vunpack.c.l.b16 %v214
  %v439 = vunpack.c.l.b16 %v215
  %v440 = vunpack.c.l.b16 %v216
  %v441 = vunpack.c.l.b16 %v217
  %v442 = vunpack.c.l.b16 %v218
  %v443 = vunpack.c.l.b16 %v219
  %v444 = vunpack.c.l.b16 %v220
  %v445 = vunpack.c.l.b16 %v221
  %v446 = vunpack.c.l.b16 %v222
  %v447 = vunpack.c.l.b16 %v223
  %v448 = vunpack.c.l.b16 %v224
  %v449 = vunpack.c.l.b16 %v225
  %v450 = vunpack.c.l.b16 %v226
  %v451 = vunpack.c.l.b16 %v227
  %v452 = vunpack.c.l.b16 %v228
  %v453 = vpack.c.b16 %v438, %v437
  %v454 = vpack.c.b16 %v440, %v439
  %v455 = vpack.c.b16 %v442, %v441
  %v456 = vpack.c.b16 %v444, %v443
  %v457 = vpack.c.b16 %v446, %v445
  %v458 = vpack.c.b16 %v448, %v447
  %v459 = vpack.c.b16 %v450, %v449
  %v460 = vpack.c.b16 %v452, %v451
  %469 = vmatprep.subr.bf16.mxu0 0
  %470 = vmatpush1.bf16.msra.mxu0 %v460
  %471 = vmatprep.subr.bf16.mxu0 0
  %472 = vmatpush1.bf16.msra.mxu0 %v459
  %473 = vmatprep.subr.bf16.mxu0 0
  %474 = vmatpush1.bf16.msra.mxu0 %v458
  %475 = vmatprep.subr.bf16.mxu0 0
  %476 = vmatpush1.bf16.msra.mxu0 %v457
  %477 = vmatprep.subr.bf16.mxu0 0
  %478 = vmatpush1.bf16.msra.mxu0 %v456
  %479 = vmatprep.subr.bf16.mxu0 0
  %480 = vmatpush1.bf16.msra.mxu0 %v455
  %481 = vmatprep.subr.bf16.mxu0 0
  %482 = vmatpush1.bf16.msra.mxu0 %v454
  %483 = vmatprep.subr.bf16.mxu0 0
  %484 = vmatpush1.bf16.msra.mxu0 %v453
  %485 = vmatprep.subr.bf16.mxu0 0
  %486 = vmatpush2.bf16.msra.mxu0 0
  %487 = vmatprep.subr.bf16.mxu0 0
  %488 = vmatpush2.bf16.msra.mxu0 0
  %489 = vmatprep.subr.bf16.mxu0 0
  %490 = vmatpush2.bf16.msra.mxu0 0
  %491 = vmatprep.subr.bf16.mxu0 0
  %492 = vmatpush2.bf16.msra.mxu0 0
  %493 = vmatprep.subr.bf16.mxu0 0
  %494 = vmatpush2.bf16.msra.mxu0 0
  %495 = vmatprep.subr.bf16.mxu0 0
  %496 = vmatpush2.bf16.msra.mxu0 0
  %497 = vmatprep.subr.bf16.mxu0 0
  %498 = vmatpush2.bf16.msra.mxu0 0
  %499 = vmatprep.subr.bf16.mxu0 0
  %500 = vmatpush2.bf16.msra.mxu0 0
  %501 = vmatprep.mubr.bf16.mxu0 0
  %502 = vmatmul.mubr.bf16.gmra.mxu0 %v357
  %v503 = vpop.f32.mrf.mxu0
  %v504 = vadd.f32 0.0, %v503
  %v505 = vpop.f32.mrf.mxu0
  %v506 = vpop.f32.mrf.mxu0
  %v507 = vadd.f32 0.0, %v506
  %v508 = vpop.f32.mrf.mxu0
  %509 = vmatprep.mubr.bf16.mxu0 0
  %510 = vmatmul.mubr.bf16.gmra.mxu0 %v358
  %v511 = vpop.f32.mrf.mxu0
  %v512 = vadd.f32 0.0, %v511
  %v513 = vpop.f32.mrf.mxu0
  %v514 = vpop.f32.mrf.mxu0
  %v515 = vadd.f32 0.0, %v514
  %v516 = vpop.f32.mrf.mxu0
  %517 = vmatprep.mubr.bf16.mxu0 0
  %518 = vmatmul.mubr.bf16.gmra.mxu0 %v359
  %v519 = vpop.f32.mrf.mxu0
  %v520 = vadd.f32 0.0, %v519
  %v521 = vpop.f32.mrf.mxu0
  %v522 = vpop.f32.mrf.mxu0
  %v523 = vadd.f32 0.0, %v522
  %v524 = vpop.f32.mrf.mxu0
  %525 = vmatprep.mubr.bf16.mxu0 0
  %526 = vmatmul.mubr.bf16.gmra.mxu0 %v360
  %v527 = vpop.f32.mrf.mxu0
  %v528 = vadd.f32 0.0, %v527
  %v529 = vpop.f32.mrf.mxu0
  %v530 = vpop.f32.mrf.mxu0
  %v531 = vadd.f32 0.0, %v530
  %v532 = vpop.f32.mrf.mxu0
  %533 = vmatprep.mubr.bf16.mxu0 0
  %534 = vmatmul.mubr.bf16.gmra.mxu0 %v361
  %v535 = vpop.f32.mrf.mxu0
  %v536 = vadd.f32 0.0, %v535
  %v537 = vpop.f32.mrf.mxu0
  %v538 = vpop.f32.mrf.mxu0
  %v539 = vadd.f32 0.0, %v538
  %v540 = vpop.f32.mrf.mxu0
  %541 = vmatprep.mubr.bf16.mxu0 0
  %542 = vmatmul.mubr.bf16.gmra.mxu0 %v362
  %v543 = vpop.f32.mrf.mxu0
  %v544 = vadd.f32 0.0, %v543
  %v545 = vpop.f32.mrf.mxu0
  %v546 = vpop.f32.mrf.mxu0
  %v547 = vadd.f32 0.0, %v546
  %v548 = vpop.f32.mrf.mxu0
  %549 = vmatprep.mubr.bf16.mxu0 0
  %550 = vmatmul.mubr.bf16.gmra.mxu0 %v363
  %v551 = vpop.f32.mrf.mxu0
  %v552 = vadd.f32 0.0, %v551
  %v553 = vpop.f32.mrf.mxu0
  %v554 = vpop.f32.mrf.mxu0
  %v555 = vadd.f32 0.0, %v554
  %v556 = vpop.f32.mrf.mxu0
  %557 = vmatprep.mubr.bf16.mxu0 0
  %558 = vmatmul.mubr.bf16.gmra.mxu0 %v364
  %v559 = vpop.f32.mrf.mxu0
  %v560 = vadd.f32 0.0, %v559
  %v561 = vpop.f32.mrf.mxu0
  %v562 = vpop.f32.mrf.mxu0
  %v563 = vadd.f32 0.0, %v562
  %v564 = vpop.f32.mrf.mxu0
  %565 = vmatprep.mubr.bf16.mxu0 0
  %566 = vmatmul.mubr.bf16.gmra.mxu0 %v365
  %v567 = vpop.f32.mrf.mxu0
  %v568 = vadd.f32 0.0, %v567
  %v569 = vpop.f32.mrf.mxu0
  %v570 = vpop.f32.mrf.mxu0
  %v571 = vadd.f32 0.0, %v570
  %v572 = vpop.f32.mrf.mxu0
  %573 = vmatprep.mubr.bf16.mxu0 0
  %574 = vmatmul.mubr.bf16.gmra.mxu0 %v366
  %v575 = vpop.f32.mrf.mxu0
  %v576 = vadd.f32 0.0, %v575
  %v577 = vpop.f32.mrf.mxu0
  %v578 = vpop.f32.mrf.mxu0
  %v579 = vadd.f32 0.0, %v578
  %v580 = vpop.f32.mrf.mxu0
  %581 = vmatprep.mubr.bf16.mxu0 0
  %582 = vmatmul.mubr.bf16.gmra.mxu0 %v367
  %v583 = vpop.f32.mrf.mxu0
  %v584 = vadd.f32 0.0, %v583
  %v585 = vpop.f32.mrf.mxu0
  %v586 = vpop.f32.mrf.mxu0
  %v587 = vadd.f32 0.0, %v586
  %v588 = vpop.f32.mrf.mxu0
  %589 = vmatprep.mubr.bf16.mxu0 0
  %590 = vmatmul.mubr.bf16.gmra.mxu0 %v368
  %v591 = vpop.f32.mrf.mxu0
  %v592 = vadd.f32 0.0, %v591
  %v593 = vpop.f32.mrf.mxu0
  %v594 = vpop.f32.mrf.mxu0
  %v595 = vadd.f32 0.0, %v594
  %v596 = vpop.f32.mrf.mxu0
  %597 = vmatprep.mubr.bf16.mxu0 0
  %598 = vmatmul.mubr.bf16.gmra.mxu0 %v369
  %v599 = vpop.f32.mrf.mxu0
  %v600 = vadd.f32 0.0, %v599
  %v601 = vpop.f32.mrf.mxu0
  %v602 = vpop.f32.mrf.mxu0
  %v603 = vadd.f32 0.0, %v602
  %v604 = vpop.f32.mrf.mxu0
  %605 = vmatprep.mubr.bf16.mxu0 0
  %606 = vmatmul.mubr.bf16.gmra.mxu0 %v370
  %v607 = vpop.f32.mrf.mxu0
  %v608 = vadd.f32 0.0, %v607
  %v609 = vpop.f32.mrf.mxu0
  %v610 = vpop.f32.mrf.mxu0
  %v611 = vadd.f32 0.0, %v610
  %v612 = vpop.f32.mrf.mxu0
  %613 = vmatprep.mubr.bf16.mxu0 0
  %614 = vmatmul.mubr.bf16.gmra.mxu0 %v371
  %v615 = vpop.f32.mrf.mxu0
  %v616 = vadd.f32 0.0, %v615
  %v617 = vpop.f32.mrf.mxu0
  %v618 = vpop.f32.mrf.mxu0
  %v619 = vadd.f32 0.0, %v618
  %v620 = vpop.f32.mrf.mxu0
  %621 = vmatprep.mubr.bf16.mxu0 0
  %622 = vmatmul.mubr.bf16.gmra.mxu0 %v372
  %v623 = vpop.f32.mrf.mxu0
  %v624 = vadd.f32 0.0, %v623
  %v625 = vpop.f32.mrf.mxu0
  %v626 = vpop.f32.mrf.mxu0
  %v627 = vadd.f32 0.0, %v626
  %v628 = vpop.f32.mrf.mxu0
  %629 = vmatprep.mubr.bf16.mxu0 0
  %630 = vmatmul.mubr.bf16.gmra.mxu0 %v373
  %v631 = vpop.f32.mrf.mxu0
  %v632 = vadd.f32 0.0, %v631
  %v633 = vpop.f32.mrf.mxu0
  %v634 = vpop.f32.mrf.mxu0
  %v635 = vadd.f32 0.0, %v634
  %v636 = vpop.f32.mrf.mxu0
  %637 = vmatprep.mubr.bf16.mxu0 0
  %638 = vmatmul.mubr.bf16.gmra.mxu0 %v374
  %v639 = vpop.f32.mrf.mxu0
  %v640 = vadd.f32 0.0, %v639
  %v641 = vpop.f32.mrf.mxu0
  %v642 = vpop.f32.mrf.mxu0
  %v643 = vadd.f32 0.0, %v642
  %v644 = vpop.f32.mrf.mxu0
  %645 = vmatprep.mubr.bf16.mxu0 0
  %646 = vmatmul.mubr.bf16.gmra.mxu0 %v375
  %v647 = vpop.f32.mrf.mxu0
  %v648 = vadd.f32 0.0, %v647
  %v649 = vpop.f32.mrf.mxu0
  %v650 = vpop.f32.mrf.mxu0
  %v651 = vadd.f32 0.0, %v650
  %v652 = vpop.f32.mrf.mxu0
  %653 = vmatprep.mubr.bf16.mxu0 0
  %654 = vmatmul.mubr.bf16.gmra.mxu0 %v376
  %v655 = vpop.f32.mrf.mxu0
  %v656 = vadd.f32 0.0, %v655
  %v657 = vpop.f32.mrf.mxu0
  %v658 = vpop.f32.mrf.mxu0
  %v659 = vadd.f32 0.0, %v658
  %v660 = vpop.f32.mrf.mxu0
  %661 = vmatprep.mubr.bf16.mxu0 0
  %662 = vmatmul.mubr.bf16.gmra.mxu0 %v377
  %v663 = vpop.f32.mrf.mxu0
  %v664 = vadd.f32 0.0, %v663
  %v665 = vpop.f32.mrf.mxu0
  %v666 = vpop.f32.mrf.mxu0
  %v667 = vadd.f32 0.0, %v666
  %v668 = vpop.f32.mrf.mxu0
  %669 = vmatprep.mubr.bf16.mxu0 0
  %670 = vmatmul.mubr.bf16.gmra.mxu0 %v378
  %v671 = vpop.f32.mrf.mxu0
  %v672 = vadd.f32 0.0, %v671
  %v673 = vpop.f32.mrf.mxu0
  %v674 = vpop.f32.mrf.mxu0
  %v675 = vadd.f32 0.0, %v674
  %v676 = vpop.f32.mrf.mxu0
  %677 = vmatprep.mubr.bf16.mxu0 0
  %678 = vmatmul.mubr.bf16.gmra.mxu0 %v379
  %v679 = vpop.f32.mrf.mxu0
  %v680 = vadd.f32 0.0, %v679
  %v681 = vpop.f32.mrf.mxu0
  %v682 = vpop.f32.mrf.mxu0
  %v683 = vadd.f32 0.0, %v682
  %v684 = vpop.f32.mrf.mxu0
  %685 = vmatprep.mubr.bf16.mxu0 0
  %686 = vmatmul.mubr.bf16.gmra.mxu0 %v380
  %v687 = vpop.f32.mrf.mxu0
  %v688 = vadd.f32 0.0, %v687
  %v689 = vpop.f32.mrf.mxu0
  %v690 = vpop.f32.mrf.mxu0
  %v691 = vadd.f32 0.0, %v690
  %v692 = vpop.f32.mrf.mxu0
  %693 = vmatprep.mubr.bf16.mxu0 0
  %694 = vmatmul.mubr.bf16.gmra.mxu0 %v381
  %v695 = vpop.f32.mrf.mxu0
  %v696 = vadd.f32 0.0, %v695
  %v697 = vpop.f32.mrf.mxu0
  %v698 = vpop.f32.mrf.mxu0
  %v699 = vadd.f32 0.0, %v698
  %v700 = vpop.f32.mrf.mxu0
  %701 = vmatprep.mubr.bf16.mxu0 0
  %702 = vmatmul.mubr.bf16.gmra.mxu0 %v382
  %v703 = vpop.f32.mrf.mxu0
  %v704 = vadd.f32 0.0, %v703
  %v705 = vpop.f32.mrf.mxu0
  %v706 = vpop.f32.mrf.mxu0
  %v707 = vadd.f32 0.0, %v706
  %v708 = vpop.f32.mrf.mxu0
  %709 = vmatprep.mubr.bf16.mxu0 0
  %710 = vmatmul.mubr.bf16.gmra.mxu0 %v383
  %v711 = vpop.f32.mrf.mxu0
  %v712 = vadd.f32 0.0, %v711
  %v713 = vpop.f32.mrf.mxu0
  %v714 = vpop.f32.mrf.mxu0
  %v715 = vadd.f32 0.0, %v714
  %v716 = vpop.f32.mrf.mxu0
  %717 = vmatprep.mubr.bf16.mxu0 0
  %718 = vmatmul.mubr.bf16.gmra.mxu0 %v384
  %v719 = vpop.f32.mrf.mxu0
  %v720 = vadd.f32 0.0, %v719
  %v721 = vpop.f32.mrf.mxu0
  %v722 = vpop.f32.mrf.mxu0
  %v723 = vadd.f32 0.0, %v722
  %v724 = vpop.f32.mrf.mxu0
  %725 = vmatprep.mubr.bf16.mxu0 0
  %726 = vmatmul.mubr.bf16.gmra.mxu0 %v385
  %v727 = vpop.f32.mrf.mxu0
  %v728 = vadd.f32 0.0, %v727
  %v729 = vpop.f32.mrf.mxu0
  %v730 = vpop.f32.mrf.mxu0
  %v731 = vadd.f32 0.0, %v730
  %v732 = vpop.f32.mrf.mxu0
  %733 = vmatprep.mubr.bf16.mxu0 0
  %734 = vmatmul.mubr.bf16.gmra.mxu0 %v386
  %v735 = vpop.f32.mrf.mxu0
  %v736 = vadd.f32 0.0, %v735
  %v737 = vpop.f32.mrf.mxu0
  %v738 = vpop.f32.mrf.mxu0
  %v739 = vadd.f32 0.0, %v738
  %v740 = vpop.f32.mrf.mxu0
  %741 = vmatprep.mubr.bf16.mxu0 0
  %742 = vmatmul.mubr.bf16.gmra.mxu0 %v387
  %v743 = vpop.f32.mrf.mxu0
  %v744 = vadd.f32 0.0, %v743
  %v745 = vpop.f32.mrf.mxu0
  %v746 = vpop.f32.mrf.mxu0
  %v747 = vadd.f32 0.0, %v746
  %v748 = vpop.f32.mrf.mxu0
  %749 = vmatprep.mubr.bf16.mxu0 0
  %750 = vmatmul.mubr.bf16.gmra.mxu0 %v388
  %v751 = vpop.f32.mrf.mxu0
  %v752 = vadd.f32 0.0, %v751
  %v753 = vpop.f32.mrf.mxu0
  %v754 = vpop.f32.mrf.mxu0
  %v755 = vadd.f32 0.0, %v754
  %v756 = vpop.f32.mrf.mxu0
  %757 = vdwg.mxu0
  %v758 = vadd.f32 %v85, %v504
  %v759 = vadd.f32 %v86, %v507
  %v760 = vadd.f32 %v87, %v512
  %v761 = vadd.f32 %v88, %v515
  %v762 = vadd.f32 %v89, %v520
  %v763 = vadd.f32 %v90, %v523
  %v764 = vadd.f32 %v91, %v528
  %v765 = vadd.f32 %v92, %v531
  %v766 = vadd.f32 %v93, %v536
  %v767 = vadd.f32 %v94, %v539
  %v768 = vadd.f32 %v95, %v544
  %v769 = vadd.f32 %v96, %v547
  %v770 = vadd.f32 %v97, %v552
  %v771 = vadd.f32 %v98, %v555
  %v772 = vadd.f32 %v99, %v560
  %v773 = vadd.f32 %v100, %v563
  %v774 = vadd.f32 %v101, %v568
  %v775 = vadd.f32 %v102, %v571
  %v776 = vadd.f32 %v103, %v576
  %v777 = vadd.f32 %v104, %v579
  %v778 = vadd.f32 %v105, %v584
  %v779 = vadd.f32 %v106, %v587
  %v780 = vadd.f32 %v107, %v592
  %v781 = vadd.f32 %v108, %v595
  %v782 = vadd.f32 %v109, %v600
  %v783 = vadd.f32 %v110, %v603
  %v784 = vadd.f32 %v111, %v608
  %v785 = vadd.f32 %v112, %v611
  %v786 = vadd.f32 %v113, %v616
  %v787 = vadd.f32 %v114, %v619
  %v788 = vadd.f32 %v115, %v624
  %v789 = vadd.f32 %v116, %v627
  %v790 = vadd.f32 %v117, %v632
  %v791 = vadd.f32 %v118, %v635
  %v792 = vadd.f32 %v119, %v640
  %v793 = vadd.f32 %v120, %v643
  %v794 = vadd.f32 %v121, %v648
  %v795 = vadd.f32 %v122, %v651
  %v796 = vadd.f32 %v123, %v656
  %v797 = vadd.f32 %v124, %v659
  %v798 = vadd.f32 %v125, %v664
  %v799 = vadd.f32 %v126, %v667
  %v800 = vadd.f32 %v127, %v672
  %v801 = vadd.f32 %v128, %v675
  %v802 = vadd.f32 %v129, %v680
  %v803 = vadd.f32 %v130, %v683
  %v804 = vadd.f32 %v131, %v688
  %v805 = vadd.f32 %v132, %v691
  %v806 = vadd.f32 %v133, %v696
  %v807 = vadd.f32 %v134, %v699
  %v808 = vadd.f32 %v135, %v704
  %v809 = vadd.f32 %v136, %v707
  %v810 = vadd.f32 %v137, %v712
  %v811 = vadd.f32 %v138, %v715
  %v812 = vadd.f32 %v139, %v720
  %v813 = vadd.f32 %v140, %v723
  %v814 = vadd.f32 %v141, %v728
  %v815 = vadd.f32 %v142, %v731
  %v816 = vadd.f32 %v143, %v736
  %v817 = vadd.f32 %v144, %v739
  %v818 = vadd.f32 %v145, %v744
  %v819 = vadd.f32 %v146, %v747
  %v820 = vadd.f32 %v147, %v752
  %v821 = vadd.f32 %v148, %v755
  %822 = vst [vmem:[#allocation2] sm:$0xff] %v758
  %823 = vst [vmem:[#allocation2 + $0x8] sm:$0xff] %v759
  %824 = vst [vmem:[#allocation2 + $0x10] sm:$0xff] %v760
  %825 = vst [vmem:[#allocation2 + $0x18] sm:$0xff] %v761
  %826 = vst [vmem:[#allocation2 + $0x20] sm:$0xff] %v762
  %827 = vst [vmem:[#allocation2 + $0x28] sm:$0xff] %v763
  %828 = vst [vmem:[#allocation2 + $0x30] sm:$0xff] %v764
  %829 = vst [vmem:[#allocation2 + $0x38] sm:$0xff] %v765
  %830 = vst [vmem:[#allocation2 + $0x40] sm:$0xff] %v766
  %831 = vst [vmem:[#allocation2 + $0x48] sm:$0xff] %v767
  %832 = vst [vmem:[#allocation2 + $0x50] sm:$0xff] %v768
  %833 = vst [vmem:[#allocation2 + $0x58] sm:$0xff] %v769
  %834 = vst [vmem:[#allocation2 + $0x60] sm:$0xff] %v770
  %835 = vst [vmem:[#allocation2 + $0x68] sm:$0xff] %v771
  %836 = vst [vmem:[#allocation2 + $0x70] sm:$0xff] %v772
  %837 = vst [vmem:[#allocation2 + $0x78] sm:$0xff] %v773
  %838 = vst [vmem:[#allocation2 + $0x80] sm:$0xff] %v774
  %839 = vst [vmem:[#allocation2 + $0x88] sm:$0xff] %v775
  %840 = vst [vmem:[#allocation2 + $0x90] sm:$0xff] %v776
  %841 = vst [vmem:[#allocation2 + $0x98] sm:$0xff] %v777
  %842 = vst [vmem:[#allocation2 + $0xa0] sm:$0xff] %v778
  %843 = vst [vmem:[#allocation2 + $0xa8] sm:$0xff] %v779
  %844 = vst [vmem:[#allocation2 + $0xb0] sm:$0xff] %v780
  %845 = vst [vmem:[#allocation2 + $0xb8] sm:$0xff] %v781
  %846 = vst [vmem:[#allocation2 + $0xc0] sm:$0xff] %v782
  %847 = vst [vmem:[#allocation2 + $0xc8] sm:$0xff] %v783
  %848 = vst [vmem:[#allocation2 + $0xd0] sm:$0xff] %v784
  %849 = vst [vmem:[#allocation2 + $0xd8] sm:$0xff] %v785
  %850 = vst [vmem:[#allocation2 + $0xe0] sm:$0xff] %v786
  %851 = vst [vmem:[#allocation2 + $0xe8] sm:$0xff] %v787
  %852 = vst [vmem:[#allocation2 + $0xf0] sm:$0xff] %v788
  %853 = vst [vmem:[#allocation2 + $0xf8] sm:$0xff] %v789
  %854 = vst [vmem:[#allocation2 + $0x100] sm:$0xff] %v790
  %855 = vst [vmem:[#allocation2 + $0x108] sm:$0xff] %v791
  %856 = vst [vmem:[#allocation2 + $0x110] sm:$0xff] %v792
  %857 = vst [vmem:[#allocation2 + $0x118] sm:$0xff] %v793
  %858 = vst [vmem:[#allocation2 + $0x120] sm:$0xff] %v794
  %859 = vst [vmem:[#allocation2 + $0x128] sm:$0xff] %v795
  %860 = vst [vmem:[#allocation2 + $0x130] sm:$0xff] %v796
  %861 = vst [vmem:[#allocation2 + $0x138] sm:$0xff] %v797
  %862 = vst [vmem:[#allocation2 + $0x140] sm:$0xff] %v798
  %863 = vst [vmem:[#allocation2 + $0x148] sm:$0xff] %v799
  %864 = vst [vmem:[#allocation2 + $0x150] sm:$0xff] %v800
  %865 = vst [vmem:[#allocation2 + $0x158] sm:$0xff] %v801
  %866 = vst [vmem:[#allocation2 + $0x160] sm:$0xff] %v802
  %867 = vst [vmem:[#allocation2 + $0x168] sm:$0xff] %v803
  %868 = vst [vmem:[#allocation2 + $0x170] sm:$0xff] %v804
  %869 = vst [vmem:[#allocation2 + $0x178] sm:$0xff] %v805
  %870 = vst [vmem:[#allocation2 + $0x180] sm:$0xff] %v806
  %871 = vst [vmem:[#allocation2 + $0x188] sm:$0xff] %v807
  %872 = vst [vmem:[#allocation2 + $0x190] sm:$0xff] %v808
  %873 = vst [vmem:[#allocation2 + $0x198] sm:$0xff] %v809
  %874 = vst [vmem:[#allocation2 + $0x1a0] sm:$0xff] %v810
  %875 = vst [vmem:[#allocation2 + $0x1a8] sm:$0xff] %v811
  %876 = vst [vmem:[#allocation2 + $0x1b0] sm:$0xff] %v812
  %877 = vst [vmem:[#allocation2 + $0x1b8] sm:$0xff] %v813
  %878 = vst [vmem:[#allocation2 + $0x1c0] sm:$0xff] %v814
  %879 = vst [vmem:[#allocation2 + $0x1c8] sm:$0xff] %v815
  %880 = vst [vmem:[#allocation2 + $0x1d0] sm:$0xff] %v816
  %881 = vst [vmem:[#allocation2 + $0x1d8] sm:$0xff] %v817
  %882 = vst [vmem:[#allocation2 + $0x1e0] sm:$0xff] %v818
  %883 = vst [vmem:[#allocation2 + $0x1e8] sm:$0xff] %v819
  %884 = vst [vmem:[#allocation2 + $0x1f0] sm:$0xff] %v820
  %885 = vst [vmem:[#allocation2 + $0x1f8] sm:$0xff] %v821
  // Predicated region
  $region18: #{discriminator_forward.9} parent=0 // pred_check
    %p886 = pneg %p17
  $region19: #{discriminator_forward.9} parent=0 // pred_check_branch
    %888 = sbr.rel (%p886) target = $region21
  $region20: #{discriminator_forward.9} parent=0 // pred_region
    %v889 = vld [vmem:[#allocation2] sm:$0xff]
    %v890 = vld [vmem:[#allocation2 + $0x8] sm:$0xff]
    %v891 = vld [vmem:[#allocation2 + $0x10] sm:$0xff]
    %v892 = vld [vmem:[#allocation2 + $0x18] sm:$0xff]
    %v893 = vld [vmem:[#allocation2 + $0x20] sm:$0xff]
    %v894 = vld [vmem:[#allocation2 + $0x28] sm:$0xff]
    %v895 = vld [vmem:[#allocation2 + $0x30] sm:$0xff]
    %v896 = vld [vmem:[#allocation2 + $0x38] sm:$0xff]
    %v897 = vld [vmem:[#allocation2 + $0x40] sm:$0xff]
    %v898 = vld [vmem:[#allocation2 + $0x48] sm:$0xff]
    %v899 = vld [vmem:[#allocation2 + $0x50] sm:$0xff]
    %v900 = vld [vmem:[#allocation2 + $0x58] sm:$0xff]
    %v901 = vld [vmem:[#allocation2 + $0x60] sm:$0xff]
    %v902 = vld [vmem:[#allocation2 + $0x68] sm:$0xff]
    %v903 = vld [vmem:[#allocation2 + $0x70] sm:$0xff]
    %v904 = vld [vmem:[#allocation2 + $0x78] sm:$0xff]
    %v905 = vld [vmem:[#allocation2 + $0x80] sm:$0xff]
    %v906 = vld [vmem:[#allocation2 + $0x88] sm:$0xff]
    %v907 = vld [vmem:[#allocation2 + $0x90] sm:$0xff]
    %v908 = vld [vmem:[#allocation2 + $0x98] sm:$0xff]
    %v909 = vld [vmem:[#allocation2 + $0xa0] sm:$0xff]
    %v910 = vld [vmem:[#allocation2 + $0xa8] sm:$0xff]
    %v911 = vld [vmem:[#allocation2 + $0xb0] sm:$0xff]
    %v912 = vld [vmem:[#allocation2 + $0xb8] sm:$0xff]
    %v913 = vld [vmem:[#allocation2 + $0xc0] sm:$0xff]
    %v914 = vld [vmem:[#allocation2 + $0xc8] sm:$0xff]
    %v915 = vld [vmem:[#allocation2 + $0xd0] sm:$0xff]
    %v916 = vld [vmem:[#allocation2 + $0xd8] sm:$0xff]
    %v917 = vld [vmem:[#allocation2 + $0xe0] sm:$0xff]
    %v918 = vld [vmem:[#allocation2 + $0xe8] sm:$0xff]
    %v919 = vld [vmem:[#allocation2 + $0xf0] sm:$0xff]
    %v920 = vld [vmem:[#allocation2 + $0xf8] sm:$0xff]
    %v921 = vld [vmem:[#allocation2 + $0x100] sm:$0xff]
    %v922 = vld [vmem:[#allocation2 + $0x108] sm:$0xff]
    %v923 = vld [vmem:[#allocation2 + $0x110] sm:$0xff]
    %v924 = vld [vmem:[#allocation2 + $0x118] sm:$0xff]
    %v925 = vld [vmem:[#allocation2 + $0x120] sm:$0xff]
    %v926 = vld [vmem:[#allocation2 + $0x128] sm:$0xff]
    %v927 = vld [vmem:[#allocation2 + $0x130] sm:$0xff]
    %v928 = vld [vmem:[#allocation2 + $0x138] sm:$0xff]
    %v929 = vld [vmem:[#allocation2 + $0x140] sm:$0xff]
    %v930 = vld [vmem:[#allocation2 + $0x148] sm:$0xff]
    %v931 = vld [vmem:[#allocation2 + $0x150] sm:$0xff]
    %v932 = vld [vmem:[#allocation2 + $0x158] sm:$0xff]
    %v933 = vld [vmem:[#allocation2 + $0x160] sm:$0xff]
    %v934 = vld [vmem:[#allocation2 + $0x168] sm:$0xff]
    %v935 = vld [vmem:[#allocation2 + $0x170] sm:$0xff]
    %v936 = vld [vmem:[#allocation2 + $0x178] sm:$0xff]
    %v937 = vld [vmem:[#allocation2 + $0x180] sm:$0xff]
    %v938 = vld [vmem:[#allocation2 + $0x188] sm:$0xff]
    %v939 = vld [vmem:[#allocation2 + $0x190] sm:$0xff]
    %v940 = vld [vmem:[#allocation2 + $0x198] sm:$0xff]
    %v941 = vld [vmem:[#allocation2 + $0x1a0] sm:$0xff]
    %v942 = vld [vmem:[#allocation2 + $0x1a8] sm:$0xff]
    %v943 = vld [vmem:[#allocation2 + $0x1b0] sm:$0xff]
    %v944 = vld [vmem:[#allocation2 + $0x1b8] sm:$0xff]
    %v945 = vld [vmem:[#allocation2 + $0x1c0] sm:$0xff]
    %v946 = vld [vmem:[#allocation2 + $0x1c8] sm:$0xff]
    %v947 = vld [vmem:[#allocation2 + $0x1d0] sm:$0xff]
    %v948 = vld [vmem:[#allocation2 + $0x1d8] sm:$0xff]
    %v949 = vld [vmem:[#allocation2 + $0x1e0] sm:$0xff]
    %v950 = vld [vmem:[#allocation2 + $0x1e8] sm:$0xff]
    %v951 = vld [vmem:[#allocation2 + $0x1f0] sm:$0xff]
    %v952 = vld [vmem:[#allocation2 + $0x1f8] sm:$0xff]
    %v953 = vld [vmem:[%s2] sm:$0x1]
    %v955 = vlaneseq
    %v956 = vshrl.u32 %v955, 7
    %v957 = vsub.s32 0, %v956
    %v958 = vrot.slane %v953, %v957
    %v960 = vadd.f32 %v889, %v958
    %v961 = vadd.f32 %v890, %v958
    %v962 = vadd.f32 %v891, %v958
    %v963 = vadd.f32 %v892, %v958
    %v964 = vadd.f32 %v893, %v958
    %v965 = vadd.f32 %v894, %v958
    %v966 = vadd.f32 %v895, %v958
    %v967 = vadd.f32 %v896, %v958
    %v968 = vadd.f32 %v897, %v958
    %v969 = vadd.f32 %v898, %v958
    %v970 = vadd.f32 %v899, %v958
    %v971 = vadd.f32 %v900, %v958
    %v972 = vadd.f32 %v901, %v958
    %v973 = vadd.f32 %v902, %v958
    %v974 = vadd.f32 %v903, %v958
    %v975 = vadd.f32 %v904, %v958
    %v976 = vadd.f32 %v905, %v958
    %v977 = vadd.f32 %v906, %v958
    %v978 = vadd.f32 %v907, %v958
    %v979 = vadd.f32 %v908, %v958
    %v980 = vadd.f32 %v909, %v958
    %v981 = vadd.f32 %v910, %v958
    %v982 = vadd.f32 %v911, %v958
    %v983 = vadd.f32 %v912, %v958
    %v984 = vadd.f32 %v913, %v958
    %v985 = vadd.f32 %v914, %v958
    %v986 = vadd.f32 %v915, %v958
    %v987 = vadd.f32 %v916, %v958
    %v988 = vadd.f32 %v917, %v958
    %v989 = vadd.f32 %v918, %v958
    %v990 = vadd.f32 %v919, %v958
    %v991 = vadd.f32 %v920, %v958
    %v992 = vadd.f32 %v921, %v958
    %v993 = vadd.f32 %v922, %v958
    %v994 = vadd.f32 %v923, %v958
    %v995 = vadd.f32 %v924, %v958
    %v996 = vadd.f32 %v925, %v958
    %v997 = vadd.f32 %v926, %v958
    %v998 = vadd.f32 %v927, %v958
    %v999 = vadd.f32 %v928, %v958
    %v1000 = vadd.f32 %v929, %v958
    %v1001 = vadd.f32 %v930, %v958
    %v1002 = vadd.f32 %v931, %v958
    %v1003 = vadd.f32 %v932, %v958
    %v1004 = vadd.f32 %v933, %v958
    %v1005 = vadd.f32 %v934, %v958
    %v1006 = vadd.f32 %v935, %v958
    %v1007 = vadd.f32 %v936, %v958
    %v1008 = vadd.f32 %v937, %v958
    %v1009 = vadd.f32 %v938, %v958
    %v1010 = vadd.f32 %v939, %v958
    %v1011 = vadd.f32 %v940, %v958
    %v1012 = vadd.f32 %v941, %v958
    %v1013 = vadd.f32 %v942, %v958
    %v1014 = vadd.f32 %v943, %v958
    %v1015 = vadd.f32 %v944, %v958
    %v1016 = vadd.f32 %v945, %v958
    %v1017 = vadd.f32 %v946, %v958
    %v1018 = vadd.f32 %v947, %v958
    %v1019 = vadd.f32 %v948, %v958
    %v1020 = vadd.f32 %v949, %v958
    %v1021 = vadd.f32 %v950, %v958
    %v1022 = vadd.f32 %v951, %v958
    %v1023 = vadd.f32 %v952, %v958
    %v1024 = vadd.f32 %v960, %v961
    %v1025 = vadd.f32 %v1024, %v962
    %v1026 = vadd.f32 %v1025, %v963
    %v1027 = vadd.f32 %v1026, %v964
    %v1028 = vadd.f32 %v1027, %v965
    %v1029 = vadd.f32 %v1028, %v966
    %v1030 = vadd.f32 %v1029, %v967
    %v1031 = vadd.f32 %v1030, %v968
    %v1032 = vadd.f32 %v1031, %v969
    %v1033 = vadd.f32 %v1032, %v970
    %v1034 = vadd.f32 %v1033, %v971
    %v1035 = vadd.f32 %v1034, %v972
    %v1036 = vadd.f32 %v1035, %v973
    %v1037 = vadd.f32 %v1036, %v974
    %v1038 = vadd.f32 %v1037, %v975
    %v1039 = vadd.f32 %v1038, %v976
    %v1040 = vadd.f32 %v1039, %v977
    %v1041 = vadd.f32 %v1040, %v978
    %v1042 = vadd.f32 %v1041, %v979
    %v1043 = vadd.f32 %v1042, %v980
    %v1044 = vadd.f32 %v1043, %v981
    %v1045 = vadd.f32 %v1044, %v982
    %v1046 = vadd.f32 %v1045, %v983
    %v1047 = vadd.f32 %v1046, %v984
    %v1048 = vadd.f32 %v1047, %v985
    %v1049 = vadd.f32 %v1048, %v986
    %v1050 = vadd.f32 %v1049, %v987
    %v1051 = vadd.f32 %v1050, %v988
    %v1052 = vadd.f32 %v1051, %v989
    %v1053 = vadd.f32 %v1052, %v990
    %v1054 = vadd.f32 %v1053, %v991
    %v1055 = vadd.f32 %v1054, %v992
    %v1056 = vadd.f32 %v1055, %v993
    %v1057 = vadd.f32 %v1056, %v994
    %v1058 = vadd.f32 %v1057, %v995
    %v1059 = vadd.f32 %v1058, %v996
    %v1060 = vadd.f32 %v1059, %v997
    %v1061 = vadd.f32 %v1060, %v998
    %v1062 = vadd.f32 %v1061, %v999
    %v1063 = vadd.f32 %v1062, %v1000
    %v1064 = vadd.f32 %v1063, %v1001
    %v1065 = vadd.f32 %v1064, %v1002
    %v1066 = vadd.f32 %v1065, %v1003
    %v1067 = vadd.f32 %v1066, %v1004
    %v1068 = vadd.f32 %v1067, %v1005
    %v1069 = vadd.f32 %v1068, %v1006
    %v1070 = vadd.f32 %v1069, %v1007
    %v1071 = vadd.f32 %v1070, %v1008
    %v1072 = vadd.f32 %v1071, %v1009
    %v1073 = vadd.f32 %v1072, %v1010
    %v1074 = vadd.f32 %v1073, %v1011
    %v1075 = vadd.f32 %v1074, %v1012
    %v1076 = vadd.f32 %v1075, %v1013
    %v1077 = vadd.f32 %v1076, %v1014
    %v1078 = vadd.f32 %v1077, %v1015
    %v1079 = vadd.f32 %v1078, %v1016
    %v1080 = vadd.f32 %v1079, %v1017
    %v1081 = vadd.f32 %v1080, %v1018
    %v1082 = vadd.f32 %v1081, %v1019
    %v1083 = vadd.f32 %v1082, %v1020
    %v1084 = vadd.f32 %v1083, %v1021
    %v1085 = vadd.f32 %v1084, %v1022
    %v1086 = vadd.f32 %v1085, %v1023
    %v1087 = vrot.slane %v1086, 4
    %v1088 = vadd.f32 %v1086, %v1087
    %v1089 = vrot.slane %v1088, 2
    %v1090 = vadd.f32 %v1088, %v1089
    %v1091 = vrot.slane %v1090, 1
    %v1092 = vadd.f32 %v1090, %v1091
    %v1093 = vmul.f32 %v960, %v960
    %v1094 = vmul.f32 %v961, %v961
    %v1095 = vmul.f32 %v962, %v962
    %v1096 = vmul.f32 %v963, %v963
    %v1097 = vmul.f32 %v964, %v964
    %v1098 = vmul.f32 %v965, %v965
    %v1099 = vmul.f32 %v966, %v966
    %v1100 = vmul.f32 %v967, %v967
    %v1101 = vmul.f32 %v968, %v968
    %v1102 = vmul.f32 %v969, %v969
    %v1103 = vmul.f32 %v970, %v970
    %v1104 = vmul.f32 %v971, %v971
    %v1105 = vmul.f32 %v972, %v972
    %v1106 = vmul.f32 %v973, %v973
    %v1107 = vmul.f32 %v974, %v974
    %v1108 = vmul.f32 %v975, %v975
    %v1109 = vmul.f32 %v976, %v976
    %v1110 = vmul.f32 %v977, %v977
    %v1111 = vmul.f32 %v978, %v978
    %v1112 = vmul.f32 %v979, %v979
    %v1113 = vmul.f32 %v980, %v980
    %v1114 = vmul.f32 %v981, %v981
    %v1115 = vmul.f32 %v982, %v982
    %v1116 = vmul.f32 %v983, %v983
    %v1117 = vmul.f32 %v984, %v984
    %v1118 = vmul.f32 %v985, %v985
    %v1119 = vmul.f32 %v986, %v986
    %v1120 = vmul.f32 %v987, %v987
    %v1121 = vmul.f32 %v988, %v988
    %v1122 = vmul.f32 %v989, %v989
    %v1123 = vmul.f32 %v990, %v990
    %v1124 = vmul.f32 %v991, %v991
    %v1125 = vmul.f32 %v992, %v992
    %v1126 = vmul.f32 %v993, %v993
    %v1127 = vmul.f32 %v994, %v994
    %v1128 = vmul.f32 %v995, %v995
    %v1129 = vmul.f32 %v996, %v996
    %v1130 = vmul.f32 %v997, %v997
    %v1131 = vmul.f32 %v998, %v998
    %v1132 = vmul.f32 %v999, %v999
    %v1133 = vmul.f32 %v1000, %v1000
    %v1134 = vmul.f32 %v1001, %v1001
    %v1135 = vmul.f32 %v1002, %v1002
    %v1136 = vmul.f32 %v1003, %v1003
    %v1137 = vmul.f32 %v1004, %v1004
    %v1138 = vmul.f32 %v1005, %v1005
    %v1139 = vmul.f32 %v1006, %v1006
    %v1140 = vmul.f32 %v1007, %v1007
    %v1141 = vmul.f32 %v1008, %v1008
    %v1142 = vmul.f32 %v1009, %v1009
    %v1143 = vmul.f32 %v1010, %v1010
    %v1144 = vmul.f32 %v1011, %v1011
    %v1145 = vmul.f32 %v1012, %v1012
    %v1146 = vmul.f32 %v1013, %v1013
    %v1147 = vmul.f32 %v1014, %v1014
    %v1148 = vmul.f32 %v1015, %v1015
    %v1149 = vmul.f32 %v1016, %v1016
    %v1150 = vmul.f32 %v1017, %v1017
    %v1151 = vmul.f32 %v1018, %v1018
    %v1152 = vmul.f32 %v1019, %v1019
    %v1153 = vmul.f32 %v1020, %v1020
    %v1154 = vmul.f32 %v1021, %v1021
    %v1155 = vmul.f32 %v1022, %v1022
    %v1156 = vmul.f32 %v1023, %v1023
    %v1157 = vadd.f32 %v1093, %v1094
    %v1158 = vadd.f32 %v1157, %v1095
    %v1159 = vadd.f32 %v1158, %v1096
    %v1160 = vadd.f32 %v1159, %v1097
    %v1161 = vadd.f32 %v1160, %v1098
    %v1162 = vadd.f32 %v1161, %v1099
    %v1163 = vadd.f32 %v1162, %v1100
    %v1164 = vadd.f32 %v1163, %v1101
    %v1165 = vadd.f32 %v1164, %v1102
    %v1166 = vadd.f32 %v1165, %v1103
    %v1167 = vadd.f32 %v1166, %v1104
    %v1168 = vadd.f32 %v1167, %v1105
    %v1169 = vadd.f32 %v1168, %v1106
    %v1170 = vadd.f32 %v1169, %v1107
    %v1171 = vadd.f32 %v1170, %v1108
    %v1172 = vadd.f32 %v1171, %v1109
    %v1173 = vadd.f32 %v1172, %v1110
    %v1174 = vadd.f32 %v1173, %v1111
    %v1175 = vadd.f32 %v1174, %v1112
    %v1176 = vadd.f32 %v1175, %v1113
    %v1177 = vadd.f32 %v1176, %v1114
    %v1178 = vadd.f32 %v1177, %v1115
    %v1179 = vadd.f32 %v1178, %v1116
    %v1180 = vadd.f32 %v1179, %v1117
    %v1181 = vadd.f32 %v1180, %v1118
    %v1182 = vadd.f32 %v1181, %v1119
    %v1183 = vadd.f32 %v1182, %v1120
    %v1184 = vadd.f32 %v1183, %v1121
    %v1185 = vadd.f32 %v1184, %v1122
    %v1186 = vadd.f32 %v1185, %v1123
    %v1187 = vadd.f32 %v1186, %v1124
    %v1188 = vadd.f32 %v1187, %v1125
    %v1189 = vadd.f32 %v1188, %v1126
    %v1190 = vadd.f32 %v1189, %v1127
    %v1191 = vadd.f32 %v1190, %v1128
    %v1192 = vadd.f32 %v1191, %v1129
    %v1193 = vadd.f32 %v1192, %v1130
    %v1194 = vadd.f32 %v1193, %v1131
    %v1195 = vadd.f32 %v1194, %v1132
    %v1196 = vadd.f32 %v1195, %v1133
    %v1197 = vadd.f32 %v1196, %v1134
    %v1198 = vadd.f32 %v1197, %v1135
    %v1199 = vadd.f32 %v1198, %v1136
    %v1200 = vadd.f32 %v1199, %v1137
    %v1201 = vadd.f32 %v1200, %v1138
    %v1202 = vadd.f32 %v1201, %v1139
    %v1203 = vadd.f32 %v1202, %v1140
    %v1204 = vadd.f32 %v1203, %v1141
    %v1205 = vadd.f32 %v1204, %v1142
    %v1206 = vadd.f32 %v1205, %v1143
    %v1207 = vadd.f32 %v1206, %v1144
    %v1208 = vadd.f32 %v1207, %v1145
    %v1209 = vadd.f32 %v1208, %v1146
    %v1210 = vadd.f32 %v1209, %v1147
    %v1211 = vadd.f32 %v1210, %v1148
    %v1212 = vadd.f32 %v1211, %v1149
    %v1213 = vadd.f32 %v1212, %v1150
    %v1214 = vadd.f32 %v1213, %v1151
    %v1215 = vadd.f32 %v1214, %v1152
    %v1216 = vadd.f32 %v1215, %v1153
    %v1217 = vadd.f32 %v1216, %v1154
    %v1218 = vadd.f32 %v1217, %v1155
    %v1219 = vadd.f32 %v1218, %v1156
    %v1220 = vrot.slane %v1219, 4
    %v1221 = vadd.f32 %v1219, %v1220
    %v1222 = vrot.slane %v1221, 2
    %v1223 = vadd.f32 %v1221, %v1222
    %v1224 = vrot.slane %v1223, 1
    %v1225 = vadd.f32 %v1223, %v1224
    %vm1226 = vcmask 1040384
    %v1227 = vsel %vm1226, %v1092, %v1225
    %1228 = vst [vmem:[%s4] sm:$0x3] %v1227
    %1229 = vst [vmem:[%s3] sm:$0xff] %v960
    %1230 = vst [vmem:[%s3 + $0x8] sm:$0xff] %v961
    %1231 = vst [vmem:[%s3 + $0x10] sm:$0xff] %v962
    %1232 = vst [vmem:[%s3 + $0x18] sm:$0xff] %v963
    %1233 = vst [vmem:[%s3 + $0x20] sm:$0xff] %v964
    %1234 = vst [vmem:[%s3 + $0x28] sm:$0xff] %v965
    %1235 = vst [vmem:[%s3 + $0x30] sm:$0xff] %v966
    %1236 = vst [vmem:[%s3 + $0x38] sm:$0xff] %v967
    %1237 = vst [vmem:[%s3 + $0x40] sm:$0xff] %v968
    %1238 = vst [vmem:[%s3 + $0x48] sm:$0xff] %v969
    %1239 = vst [vmem:[%s3 + $0x50] sm:$0xff] %v970
    %1240 = vst [vmem:[%s3 + $0x58] sm:$0xff] %v971
    %1241 = vst [vmem:[%s3 + $0x60] sm:$0xff] %v972
    %1242 = vst [vmem:[%s3 + $0x68] sm:$0xff] %v973
    %1243 = vst [vmem:[%s3 + $0x70] sm:$0xff] %v974
    %1244 = vst [vmem:[%s3 + $0x78] sm:$0xff] %v975
    %1245 = vst [vmem:[%s3 + $0x80] sm:$0xff] %v976
    %1246 = vst [vmem:[%s3 + $0x88] sm:$0xff] %v977
    %1247 = vst [vmem:[%s3 + $0x90] sm:$0xff] %v978
    %1248 = vst [vmem:[%s3 + $0x98] sm:$0xff] %v979
    %1249 = vst [vmem:[%s3 + $0xa0] sm:$0xff] %v980
    %1250 = vst [vmem:[%s3 + $0xa8] sm:$0xff] %v981
    %1251 = vst [vmem:[%s3 + $0xb0] sm:$0xff] %v982
    %1252 = vst [vmem:[%s3 + $0xb8] sm:$0xff] %v983
    %1253 = vst [vmem:[%s3 + $0xc0] sm:$0xff] %v984
    %1254 = vst [vmem:[%s3 + $0xc8] sm:$0xff] %v985
    %1255 = vst [vmem:[%s3 + $0xd0] sm:$0xff] %v986
    %1256 = vst [vmem:[%s3 + $0xd8] sm:$0xff] %v987
    %1257 = vst [vmem:[%s3 + $0xe0] sm:$0xff] %v988
    %1258 = vst [vmem:[%s3 + $0xe8] sm:$0xff] %v989
    %1259 = vst [vmem:[%s3 + $0xf0] sm:$0xff] %v990
    %1260 = vst [vmem:[%s3 + $0xf8] sm:$0xff] %v991
    %1261 = vst [vmem:[%s3 + $0x100] sm:$0xff] %v992
    %1262 = vst [vmem:[%s3 + $0x108] sm:$0xff] %v993
    %1263 = vst [vmem:[%s3 + $0x110] sm:$0xff] %v994
    %1264 = vst [vmem:[%s3 + $0x118] sm:$0xff] %v995
    %1265 = vst [vmem:[%s3 + $0x120] sm:$0xff] %v996
    %1266 = vst [vmem:[%s3 + $0x128] sm:$0xff] %v997
    %1267 = vst [vmem:[%s3 + $0x130] sm:$0xff] %v998
    %1268 = vst [vmem:[%s3 + $0x138] sm:$0xff] %v999
    %1269 = vst [vmem:[%s3 + $0x140] sm:$0xff] %v1000
    %1270 = vst [vmem:[%s3 + $0x148] sm:$0xff] %v1001
    %1271 = vst [vmem:[%s3 + $0x150] sm:$0xff] %v1002
    %1272 = vst [vmem:[%s3 + $0x158] sm:$0xff] %v1003
    %1273 = vst [vmem:[%s3 + $0x160] sm:$0xff] %v1004
    %1274 = vst [vmem:[%s3 + $0x168] sm:$0xff] %v1005
    %1275 = vst [vmem:[%s3 + $0x170] sm:$0xff] %v1006
    %1276 = vst [vmem:[%s3 + $0x178] sm:$0xff] %v1007
    %1277 = vst [vmem:[%s3 + $0x180] sm:$0xff] %v1008
    %1278 = vst [vmem:[%s3 + $0x188] sm:$0xff] %v1009
    %1279 = vst [vmem:[%s3 + $0x190] sm:$0xff] %v1010
    %1280 = vst [vmem:[%s3 + $0x198] sm:$0xff] %v1011
    %1281 = vst [vmem:[%s3 + $0x1a0] sm:$0xff] %v1012
    %1282 = vst [vmem:[%s3 + $0x1a8] sm:$0xff] %v1013
    %1283 = vst [vmem:[%s3 + $0x1b0] sm:$0xff] %v1014
    %1284 = vst [vmem:[%s3 + $0x1b8] sm:$0xff] %v1015
    %1285 = vst [vmem:[%s3 + $0x1c0] sm:$0xff] %v1016
    %1286 = vst [vmem:[%s3 + $0x1c8] sm:$0xff] %v1017
    %1287 = vst [vmem:[%s3 + $0x1d0] sm:$0xff] %v1018
    %1288 = vst [vmem:[%s3 + $0x1d8] sm:$0xff] %v1019
    %1289 = vst [vmem:[%s3 + $0x1e0] sm:$0xff] %v1020
    %1290 = vst [vmem:[%s3 + $0x1e8] sm:$0xff] %v1021
    %1291 = vst [vmem:[%s3 + $0x1f0] sm:$0xff] %v1022
    %1292 = vst [vmem:[%s3 + $0x1f8] sm:$0xff] %v1023
  $region21: #{discriminator_forward.9} parent=0 // pred_fallthru
    _
  // Predicated region
  $region22: #{discriminator_forward.9} parent=0 // pred_check
    _
  $region23: #{discriminator_forward.9} parent=0 // pred_check_branch
    %1294 = sbr.rel (0) target = $region25
  $region24: #{discriminator_forward.9} parent=0 // pred_region
    _
  $region25: #{discriminator_forward.9} parent=0 // pred_fallthru
    _
  // Predicated region
  $region26: #{discriminator_forward.9} parent=0 // pred_check
    _
  $region27: #{discriminator_forward.9} parent=0 // pred_check_branch
    %1296 = sbr.rel (0) target = $region29
  $region28: #{discriminator_forward.9} parent=0 // pred_region
    _
  $region29: #{discriminator_forward.9} parent=0 // pred_fallthru
    _
  // Predicated region
  $region30: #{discriminator_forward.9} parent=0 // pred_check
    _
  $region31: #{discriminator_forward.9} parent=0 // pred_check_branch
    %1298 = sbr.rel (0) target = $region33
  $region32: #{discriminator_forward.9} parent=0 // pred_region
    _
  $region33: #{discriminator_forward.9} parent=0 // pred_fallthru
    _
  // Predicated region
  $region34: #{discriminator_forward.9} parent=0 // pred_check
    _
  $region35: #{discriminator_forward.9} parent=0 // pred_check_branch
    %1300 = sbr.rel (0) target = $region37
  $region36: #{discriminator_forward.9} parent=0 // pred_region
    _
  $region37: #{discriminator_forward.9} parent=0 // pred_fallthru
    _

// kernel: discriminator_forward.12
$region0: #{discriminator_forward.12}
  #allocation0 [shape = 'u32[]', space=smem, size = 0x4, offset = 0x4, fixed_abs, tag = 'smem constant byte address 0x4 - core index']
  #allocation1 [shape = 'u32[144,128]{1,0:T(1,128)}', space=vmem, size = 0x12000, scoped, tag = 'internal scratch']
  %s0 = inlined_call_operand.vmem [shape: f32[128,128], index: 0, kind: input, shape index: {}]
  %s1 = inlined_call_operand.vmem [shape: f32[1,128], index: 1, kind: input, shape index: {}]
  %s2 = inlined_call_operand.vmem [shape: f32[1,128], index: 2, kind: input, shape index: {}]
  %s3 = inlined_call_operand.vmem [shape: f32[128,128], index: 3, kind: output, shape index: {}]
  %s4 = sld [smem:[#allocation0]]
  $region22: #{discriminator_forward.12} parent=0
    _
  %s6 = ssub.s32 1, %s4
  %s7 = scalar_select 0, %s6, %s4
  // Predicated region
  $region2: #{discriminator_forward.12} parent=0 // pred_check
    _
  $region3: #{discriminator_forward.12} parent=0 // pred_check_branch
    %9 = sbr.rel (0) target = $region5
  $region4: #{discriminator_forward.12} parent=0 // pred_region
    _
  $region5: #{discriminator_forward.12} parent=0 // pred_fallthru
    _
  // Predicated region
  $region6: #{discriminator_forward.12} parent=0 // pred_check
    _
  $region7: #{discriminator_forward.12} parent=0 // pred_check_branch
    %11 = sbr.rel (0) target = $region9
  $region8: #{discriminator_forward.12} parent=0 // pred_region
    _
  $region9: #{discriminator_forward.12} parent=0 // pred_fallthru
    _
  // Predicated region
  $region10: #{discriminator_forward.12} parent=0 // pred_check
    _
  $region11: #{discriminator_forward.12} parent=0 // pred_check_branch
    %13 = sbr.rel (0) target = $region13
  $region12: #{discriminator_forward.12} parent=0 // pred_region
    _
  $region13: #{discriminator_forward.12} parent=0 // pred_fallthru
    _
  %v14 = vld [vmem:[%s0] sm:$0xff]
  %v15 = vld [vmem:[%s0 + $0x8] sm:$0xff]
  %v16 = vld [vmem:[%s0 + $0x10] sm:$0xff]
  %v17 = vld [vmem:[%s0 + $0x18] sm:$0xff]
  %v18 = vld [vmem:[%s0 + $0x20] sm:$0xff]
  %v19 = vld [vmem:[%s0 + $0x28] sm:$0xff]
  %v20 = vld [vmem:[%s0 + $0x30] sm:$0xff]
  %v21 = vld [vmem:[%s0 + $0x38] sm:$0xff]
  %v22 = vld [vmem:[%s0 + $0x40] sm:$0xff]
  %v23 = vld [vmem:[%s0 + $0x48] sm:$0xff]
  %v24 = vld [vmem:[%s0 + $0x50] sm:$0xff]
  %v25 = vld [vmem:[%s0 + $0x58] sm:$0xff]
  %v26 = vld [vmem:[%s0 + $0x60] sm:$0xff]
  %v27 = vld [vmem:[%s0 + $0x68] sm:$0xff]
  %v28 = vld [vmem:[%s0 + $0x70] sm:$0xff]
  %v29 = vld [vmem:[%s0 + $0x78] sm:$0xff]
  %v30 = vld [vmem:[%s1] sm:$0x1]
  %v32 = vlaneseq
  %v33 = vshrl.u32 %v32, 7
  %v34 = vsub.s32 0, %v33
  %v35 = vrot.slane %v30, %v34
  %v37 = vmul.f32 %v14, %v35
  %v38 = vmul.f32 %v15, %v35
  %v39 = vmul.f32 %v16, %v35
  %v40 = vmul.f32 %v17, %v35
  %v41 = vmul.f32 %v18, %v35
  %v42 = vmul.f32 %v19, %v35
  %v43 = vmul.f32 %v20, %v35
  %v44 = vmul.f32 %v21, %v35
  %v45 = vmul.f32 %v22, %v35
  %v46 = vmul.f32 %v23, %v35
  %v47 = vmul.f32 %v24, %v35
  %v48 = vmul.f32 %v25, %v35
  %v49 = vmul.f32 %v26, %v35
  %v50 = vmul.f32 %v27, %v35
  %v51 = vmul.f32 %v28, %v35
  %v52 = vmul.f32 %v29, %v35
  %v53 = vld [vmem:[%s2] sm:$0x1]
  %v55 = vlaneseq
  %v56 = vshrl.u32 %v55, 7
  %v57 = vsub.s32 0, %v56
  %v58 = vrot.slane %v53, %v57
  %v60 = vadd.f32 %v37, %v58
  %v61 = vadd.f32 %v38, %v58
  %v62 = vadd.f32 %v39, %v58
  %v63 = vadd.f32 %v40, %v58
  %v64 = vadd.f32 %v41, %v58
  %v65 = vadd.f32 %v42, %v58
  %v66 = vadd.f32 %v43, %v58
  %v67 = vadd.f32 %v44, %v58
  %v68 = vadd.f32 %v45, %v58
  %v69 = vadd.f32 %v46, %v58
  %v70 = vadd.f32 %v47, %v58
  %v71 = vadd.f32 %v48, %v58
  %v72 = vadd.f32 %v49, %v58
  %v73 = vadd.f32 %v50, %v58
  %v74 = vadd.f32 %v51, %v58
  %v75 = vadd.f32 %v52, %v58
  %vm76 = vcmp.gt.f32.partialorder %v60, 0.0
  %vm77 = vcmp.gt.f32.partialorder %v61, 0.0
  %vm78 = vcmp.gt.f32.partialorder %v62, 0.0
  %vm79 = vcmp.gt.f32.partialorder %v63, 0.0
  %vm80 = vcmp.gt.f32.partialorder %v64, 0.0
  %vm81 = vcmp.gt.f32.partialorder %v65, 0.0
  %vm82 = vcmp.gt.f32.partialorder %v66, 0.0
  %vm83 = vcmp.gt.f32.partialorder %v67, 0.0
  %vm84 = vcmp.gt.f32.partialorder %v68, 0.0
  %vm85 = vcmp.gt.f32.partialorder %v69, 0.0
  %vm86 = vcmp.gt.f32.partialorder %v70, 0.0
  %vm87 = vcmp.gt.f32.partialorder %v71, 0.0
  %vm88 = vcmp.gt.f32.partialorder %v72, 0.0
  %vm89 = vcmp.gt.f32.partialorder %v73, 0.0
  %vm90 = vcmp.gt.f32.partialorder %v74, 0.0
  %vm91 = vcmp.gt.f32.partialorder %v75, 0.0
  %v92 = vmul.f32 %v60, 0.2
  %v93 = vmul.f32 %v61, 0.2
  %v94 = vmul.f32 %v62, 0.2
  %v95 = vmul.f32 %v63, 0.2
  %v96 = vmul.f32 %v64, 0.2
  %v97 = vmul.f32 %v65, 0.2
  %v98 = vmul.f32 %v66, 0.2
  %v99 = vmul.f32 %v67, 0.2
  %v100 = vmul.f32 %v68, 0.2
  %v101 = vmul.f32 %v69, 0.2
  %v102 = vmul.f32 %v70, 0.2
  %v103 = vmul.f32 %v71, 0.2
  %v104 = vmul.f32 %v72, 0.2
  %v105 = vmul.f32 %v73, 0.2
  %v106 = vmul.f32 %v74, 0.2
  %v107 = vmul.f32 %v75, 0.2
  %v108 = vsel %vm76, %v60, %v92
  %v109 = vsel %vm77, %v61, %v93
  %v110 = vsel %vm78, %v62, %v94
  %v111 = vsel %vm79, %v63, %v95
  %v112 = vsel %vm80, %v64, %v96
  %v113 = vsel %vm81, %v65, %v97
  %v114 = vsel %vm82, %v66, %v98
  %v115 = vsel %vm83, %v67, %v99
  %v116 = vsel %vm84, %v68, %v100
  %v117 = vsel %vm85, %v69, %v101
  %v118 = vsel %vm86, %v70, %v102
  %v119 = vsel %vm87, %v71, %v103
  %v120 = vsel %vm88, %v72, %v104
  %v121 = vsel %vm89, %v73, %v105
  %v122 = vsel %vm90, %v74, %v106
  %v123 = vsel %vm91, %v75, %v107
  %124 = vst [vmem:[%s3] sm:$0xff] %v108
  %125 = vst [vmem:[%s3 + $0x8] sm:$0xff] %v109
  %126 = vst [vmem:[%s3 + $0x10] sm:$0xff] %v110
  %127 = vst [vmem:[%s3 + $0x18] sm:$0xff] %v111
  %128 = vst [vmem:[%s3 + $0x20] sm:$0xff] %v112
  %129 = vst [vmem:[%s3 + $0x28] sm:$0xff] %v113
  %130 = vst [vmem:[%s3 + $0x30] sm:$0xff] %v114
  %131 = vst [vmem:[%s3 + $0x38] sm:$0xff] %v115
  %132 = vst [vmem:[%s3 + $0x40] sm:$0xff] %v116
  %133 = vst [vmem:[%s3 + $0x48] sm:$0xff] %v117
  %134 = vst [vmem:[%s3 + $0x50] sm:$0xff] %v118
  %135 = vst [vmem:[%s3 + $0x58] sm:$0xff] %v119
  %136 = vst [vmem:[%s3 + $0x60] sm:$0xff] %v120
  %137 = vst [vmem:[%s3 + $0x68] sm:$0xff] %v121
  %138 = vst [vmem:[%s3 + $0x70] sm:$0xff] %v122
  %139 = vst [vmem:[%s3 + $0x78] sm:$0xff] %v123
  // Predicated region
  $region14: #{discriminator_forward.12} parent=0 // pred_check
    _
  $region15: #{discriminator_forward.12} parent=0 // pred_check_branch
    %141 = sbr.rel (0) target = $region17
  $region16: #{discriminator_forward.12} parent=0 // pred_region
    _
  $region17: #{discriminator_forward.12} parent=0 // pred_fallthru
    _
  // Predicated region
  $region18: #{discriminator_forward.12} parent=0 // pred_check
    _
  $region19: #{discriminator_forward.12} parent=0 // pred_check_branch
    %143 = sbr.rel (0) target = $region21
  $region20: #{discriminator_forward.12} parent=0 // pred_region
    _
  $region21: #{discriminator_forward.12} parent=0 // pred_fallthru
    _

// kernel: discriminator_forward.11
$region0: #{discriminator_forward.11}
  #allocation0 [shape = 'u32[]', space=smem, size = 0x4, offset = 0x4, fixed_abs, tag = 'smem constant byte address 0x4 - core index']
  #allocation1 [shape = 'u32[144,128]{1,0:T(1,128)}', space=vmem, size = 0x12000, scoped, tag = 'internal scratch']
  #allocation2 [shape = 'f32[128,128]{1,0:T(8,128)}', space=vmem, size = 0x10000, scoped, tag = 'scratch operand']
  %s0 = inlined_call_operand.vmem [shape: bf16[128,256], index: 0, kind: input, shape index: {}]
  %s1 = inlined_call_operand.vmem [shape: bf16[256,128], index: 1, kind: input, shape index: {}]
  %s2 = inlined_call_operand.vmem [shape: f32[1,128], index: 2, kind: input, shape index: {}]
  %s3 = inlined_call_operand.vmem [shape: f32[128,128], index: 3, kind: output, shape index: {0}]
  %s4 = inlined_call_operand.vmem [shape: f32[1,2,128], index: 4, kind: output, shape index: {1}]
  %5 = xla_tuple %s3, %s4
  %s6 = sld [smem:[#allocation0]]
  $region38: #{discriminator_forward.11} parent=0
    _
  %s8 = ssub.s32 1, %s6
  %s9 = scalar_select 0, %s8, %s6
  // Predicated region
  $region2: #{discriminator_forward.11} parent=0 // pred_check
    _
  $region3: #{discriminator_forward.11} parent=0 // pred_check_branch
    %11 = sbr.rel (0) target = $region5
  $region4: #{discriminator_forward.11} parent=0 // pred_region
    _
  $region5: #{discriminator_forward.11} parent=0 // pred_fallthru
    _
  // Predicated region
  $region6: #{discriminator_forward.11} parent=0 // pred_check
    _
  $region7: #{discriminator_forward.11} parent=0 // pred_check_branch
    %13 = sbr.rel (0) target = $region9
  $region8: #{discriminator_forward.11} parent=0 // pred_region
    _
  $region9: #{discriminator_forward.11} parent=0 // pred_fallthru
    _
  // Predicated region
  $region10: #{discriminator_forward.11} parent=0 // pred_check
    _
  $region11: #{discriminator_forward.11} parent=0 // pred_check_branch
    %15 = sbr.rel (0) target = $region13
  $region12: #{discriminator_forward.11} parent=0 // pred_region
    _
  $region13: #{discriminator_forward.11} parent=0 // pred_fallthru
    _
  %p17 = scmp.eq.s32.totalorder 0, 0
  // Predicated region
  $region14: #{discriminator_forward.11} parent=0 // pred_check
    %p18 = pneg %p17
  $region15: #{discriminator_forward.11} parent=0 // pred_check_branch
    %20 = sbr.rel (%p18) target = $region17
  $region16: #{discriminator_forward.11} parent=0 // pred_region
    %21 = vst [vmem:[#allocation2] sm:$0xff] 0.0
    %22 = vst [vmem:[#allocation2 + $0x8] sm:$0xff] 0.0
    %23 = vst [vmem:[#allocation2 + $0x10] sm:$0xff] 0.0
    %24 = vst [vmem:[#allocation2 + $0x18] sm:$0xff] 0.0
    %25 = vst [vmem:[#allocation2 + $0x20] sm:$0xff] 0.0
    %26 = vst [vmem:[#allocation2 + $0x28] sm:$0xff] 0.0
    %27 = vst [vmem:[#allocation2 + $0x30] sm:$0xff] 0.0
    %28 = vst [vmem:[#allocation2 + $0x38] sm:$0xff] 0.0
    %29 = vst [vmem:[#allocation2 + $0x40] sm:$0xff] 0.0
    %30 = vst [vmem:[#allocation2 + $0x48] sm:$0xff] 0.0
    %31 = vst [vmem:[#allocation2 + $0x50] sm:$0xff] 0.0
    %32 = vst [vmem:[#allocation2 + $0x58] sm:$0xff] 0.0
    %33 = vst [vmem:[#allocation2 + $0x60] sm:$0xff] 0.0
    %34 = vst [vmem:[#allocation2 + $0x68] sm:$0xff] 0.0
    %35 = vst [vmem:[#allocation2 + $0x70] sm:$0xff] 0.0
    %36 = vst [vmem:[#allocation2 + $0x78] sm:$0xff] 0.0
  $region17: #{discriminator_forward.11} parent=0 // pred_fallthru
    _
  %v37 = vld [vmem:[#allocation2] sm:$0xff]
  %v38 = vld [vmem:[#allocation2 + $0x8] sm:$0xff]
  %v39 = vld [vmem:[#allocation2 + $0x10] sm:$0xff]
  %v40 = vld [vmem:[#allocation2 + $0x18] sm:$0xff]
  %v41 = vld [vmem:[#allocation2 + $0x20] sm:$0xff]
  %v42 = vld [vmem:[#allocation2 + $0x28] sm:$0xff]
  %v43 = vld [vmem:[#allocation2 + $0x30] sm:$0xff]
  %v44 = vld [vmem:[#allocation2 + $0x38] sm:$0xff]
  %v45 = vld [vmem:[#allocation2 + $0x40] sm:$0xff]
  %v46 = vld [vmem:[#allocation2 + $0x48] sm:$0xff]
  %v47 = vld [vmem:[#allocation2 + $0x50] sm:$0xff]
  %v48 = vld [vmem:[#allocation2 + $0x58] sm:$0xff]
  %v49 = vld [vmem:[#allocation2 + $0x60] sm:$0xff]
  %v50 = vld [vmem:[#allocation2 + $0x68] sm:$0xff]
  %v51 = vld [vmem:[#allocation2 + $0x70] sm:$0xff]
  %v52 = vld [vmem:[#allocation2 + $0x78] sm:$0xff]
  %v53 = vld [vmem:[%s0] sm:$0xff]
  %v54 = vld [vmem:[%s0 + $0x8] sm:$0xff]
  %v55 = vld [vmem:[%s0 + $0x10] sm:$0xff]
  %v56 = vld [vmem:[%s0 + $0x18] sm:$0xff]
  %v57 = vld [vmem:[%s0 + $0x20] sm:$0xff]
  %v58 = vld [vmem:[%s0 + $0x28] sm:$0xff]
  %v59 = vld [vmem:[%s0 + $0x30] sm:$0xff]
  %v60 = vld [vmem:[%s0 + $0x38] sm:$0xff]
  %v61 = vld [vmem:[%s0 + $0x40] sm:$0xff]
  %v62 = vld [vmem:[%s0 + $0x48] sm:$0xff]
  %v63 = vld [vmem:[%s0 + $0x50] sm:$0xff]
  %v64 = vld [vmem:[%s0 + $0x58] sm:$0xff]
  %v65 = vld [vmem:[%s0 + $0x60] sm:$0xff]
  %v66 = vld [vmem:[%s0 + $0x68] sm:$0xff]
  %v67 = vld [vmem:[%s0 + $0x70] sm:$0xff]
  %v68 = vld [vmem:[%s0 + $0x78] sm:$0xff]
  %v69 = vld [vmem:[%s1] sm:$0xf]
  %v70 = vld [vmem:[%s1 + $0x4] sm:$0xf]
  %v71 = vld [vmem:[%s1 + $0x8] sm:$0xf]
  %v72 = vld [vmem:[%s1 + $0xc] sm:$0xf]
  %v73 = vld [vmem:[%s1 + $0x10] sm:$0xf]
  %v74 = vld [vmem:[%s1 + $0x14] sm:$0xf]
  %v75 = vld [vmem:[%s1 + $0x18] sm:$0xf]
  %v76 = vld [vmem:[%s1 + $0x1c] sm:$0xf]
  %v77 = vld [vmem:[%s1 + $0x20] sm:$0xf]
  %v78 = vld [vmem:[%s1 + $0x24] sm:$0xf]
  %v79 = vld [vmem:[%s1 + $0x28] sm:$0xf]
  %v80 = vld [vmem:[%s1 + $0x2c] sm:$0xf]
  %v81 = vld [vmem:[%s1 + $0x30] sm:$0xf]
  %v82 = vld [vmem:[%s1 + $0x34] sm:$0xf]
  %v83 = vld [vmem:[%s1 + $0x38] sm:$0xf]
  %v84 = vld [vmem:[%s1 + $0x3c] sm:$0xf]
  %v85 = vld [vmem:[%s1 + $0x40] sm:$0xf]
  %v86 = vld [vmem:[%s1 + $0x44] sm:$0xf]
  %v87 = vld [vmem:[%s1 + $0x48] sm:$0xf]
  %v88 = vld [vmem:[%s1 + $0x4c] sm:$0xf]
  %v89 = vld [vmem:[%s1 + $0x50] sm:$0xf]
  %v90 = vld [vmem:[%s1 + $0x54] sm:$0xf]
  %v91 = vld [vmem:[%s1 + $0x58] sm:$0xf]
  %v92 = vld [vmem:[%s1 + $0x5c] sm:$0xf]
  %v93 = vld [vmem:[%s1 + $0x60] sm:$0xf]
  %v94 = vld [vmem:[%s1 + $0x64] sm:$0xf]
  %v95 = vld [vmem:[%s1 + $0x68] sm:$0xf]
  %v96 = vld [vmem:[%s1 + $0x6c] sm:$0xf]
  %v97 = vld [vmem:[%s1 + $0x70] sm:$0xf]
  %v98 = vld [vmem:[%s1 + $0x74] sm:$0xf]
  %v99 = vld [vmem:[%s1 + $0x78] sm:$0xf]
  %v100 = vld [vmem:[%s1 + $0x7c] sm:$0xf]
  %v117 = vunpack.c.l.b16 %v53
  %v118 = vunpack.c.h.b16 %v53
  %v119 = vunpack.c.l.b16 %v54
  %v120 = vunpack.c.h.b16 %v54
  %v121 = vunpack.c.l.b16 %v55
  %v122 = vunpack.c.h.b16 %v55
  %v123 = vunpack.c.l.b16 %v56
  %v124 = vunpack.c.h.b16 %v56
  %v125 = vunpack.c.l.b16 %v57
  %v126 = vunpack.c.h.b16 %v57
  %v127 = vunpack.c.l.b16 %v58
  %v128 = vunpack.c.h.b16 %v58
  %v129 = vunpack.c.l.b16 %v59
  %v130 = vunpack.c.h.b16 %v59
  %v131 = vunpack.c.l.b16 %v60
  %v132 = vunpack.c.h.b16 %v60
  %v133 = vunpack.c.l.b16 %v61
  %v134 = vunpack.c.h.b16 %v61
  %v135 = vunpack.c.l.b16 %v62
  %v136 = vunpack.c.h.b16 %v62
  %v137 = vunpack.c.l.b16 %v63
  %v138 = vunpack.c.h.b16 %v63
  %v139 = vunpack.c.l.b16 %v64
  %v140 = vunpack.c.h.b16 %v64
  %v141 = vunpack.c.l.b16 %v65
  %v142 = vunpack.c.h.b16 %v65
  %v143 = vunpack.c.l.b16 %v66
  %v144 = vunpack.c.h.b16 %v66
  %v145 = vunpack.c.l.b16 %v67
  %v146 = vunpack.c.h.b16 %v67
  %v147 = vunpack.c.l.b16 %v68
  %v148 = vunpack.c.h.b16 %v68
  %v149 = vpack.c.b16 %v119, %v117
  %v150 = vpack.c.b16 %v120, %v118
  %v151 = vpack.c.b16 %v123, %v121
  %v152 = vpack.c.b16 %v124, %v122
  %v153 = vpack.c.b16 %v127, %v125
  %v154 = vpack.c.b16 %v128, %v126
  %v155 = vpack.c.b16 %v131, %v129
  %v156 = vpack.c.b16 %v132, %v130
  %v157 = vpack.c.b16 %v135, %v133
  %v158 = vpack.c.b16 %v136, %v134
  %v159 = vpack.c.b16 %v139, %v137
  %v160 = vpack.c.b16 %v140, %v138
  %v161 = vpack.c.b16 %v143, %v141
  %v162 = vpack.c.b16 %v144, %v142
  %v163 = vpack.c.b16 %v147, %v145
  %v164 = vpack.c.b16 %v148, %v146
  %v213 = vunpack.c.l.b16 %v69
  %v214 = vunpack.c.l.b16 %v70
  %v215 = vunpack.c.l.b16 %v71
  %v216 = vunpack.c.l.b16 %v72
  %v217 = vunpack.c.l.b16 %v73
  %v218 = vunpack.c.l.b16 %v74
  %v219 = vunpack.c.l.b16 %v75
  %v220 = vunpack.c.l.b16 %v76
  %v221 = vunpack.c.l.b16 %v77
  %v222 = vunpack.c.l.b16 %v78
  %v223 = vunpack.c.l.b16 %v79
  %v224 = vunpack.c.l.b16 %v80
  %v225 = vunpack.c.l.b16 %v81
  %v226 = vunpack.c.l.b16 %v82
  %v227 = vunpack.c.l.b16 %v83
  %v228 = vunpack.c.l.b16 %v84
  %v229 = vunpack.c.l.b16 %v85
  %v230 = vunpack.c.l.b16 %v86
  %v231 = vunpack.c.l.b16 %v87
  %v232 = vunpack.c.l.b16 %v88
  %v233 = vunpack.c.l.b16 %v89
  %v234 = vunpack.c.l.b16 %v90
  %v235 = vunpack.c.l.b16 %v91
  %v236 = vunpack.c.l.b16 %v92
  %v237 = vunpack.c.l.b16 %v93
  %v238 = vunpack.c.l.b16 %v94
  %v239 = vunpack.c.l.b16 %v95
  %v240 = vunpack.c.l.b16 %v96
  %v241 = vunpack.c.l.b16 %v97
  %v242 = vunpack.c.l.b16 %v98
  %v243 = vunpack.c.l.b16 %v99
  %v244 = vunpack.c.l.b16 %v100
  %v245 = vpack.c.b16 %v214, %v213
  %v246 = vpack.c.b16 %v216, %v215
  %v247 = vpack.c.b16 %v218, %v217
  %v248 = vpack.c.b16 %v220, %v219
  %v249 = vpack.c.b16 %v222, %v221
  %v250 = vpack.c.b16 %v224, %v223
  %v251 = vpack.c.b16 %v226, %v225
  %v252 = vpack.c.b16 %v228, %v227
  %v253 = vpack.c.b16 %v230, %v229
  %v254 = vpack.c.b16 %v232, %v231
  %v255 = vpack.c.b16 %v234, %v233
  %v256 = vpack.c.b16 %v236, %v235
  %v257 = vpack.c.b16 %v238, %v237
  %v258 = vpack.c.b16 %v240, %v239
  %v259 = vpack.c.b16 %v242, %v241
  %v260 = vpack.c.b16 %v244, %v243
  %277 = vmatprep.subr.bf16.mxu0 0
  %278 = vmatpush1.bf16.msra.mxu0 %v252
  %279 = vmatprep.subr.bf16.mxu0 0
  %280 = vmatpush1.bf16.msra.mxu0 %v251
  %281 = vmatprep.subr.bf16.mxu0 0
  %282 = vmatpush1.bf16.msra.mxu0 %v250
  %283 = vmatprep.subr.bf16.mxu0 0
  %284 = vmatpush1.bf16.msra.mxu0 %v249
  %285 = vmatprep.subr.bf16.mxu0 0
  %286 = vmatpush1.bf16.msra.mxu0 %v248
  %287 = vmatprep.subr.bf16.mxu0 0
  %288 = vmatpush1.bf16.msra.mxu0 %v247
  %289 = vmatprep.subr.bf16.mxu0 0
  %290 = vmatpush1.bf16.msra.mxu0 %v246
  %291 = vmatprep.subr.bf16.mxu0 0
  %292 = vmatpush1.bf16.msra.mxu0 %v245
  %293 = vmatprep.subr.bf16.mxu0 0
  %294 = vmatpush2.bf16.msra.mxu0 %v260
  %295 = vmatprep.subr.bf16.mxu0 0
  %296 = vmatpush2.bf16.msra.mxu0 %v259
  %297 = vmatprep.subr.bf16.mxu0 0
  %298 = vmatpush2.bf16.msra.mxu0 %v258
  %299 = vmatprep.subr.bf16.mxu0 0
  %300 = vmatpush2.bf16.msra.mxu0 %v257
  %301 = vmatprep.subr.bf16.mxu0 0
  %302 = vmatpush2.bf16.msra.mxu0 %v256
  %303 = vmatprep.subr.bf16.mxu0 0
  %304 = vmatpush2.bf16.msra.mxu0 %v255
  %305 = vmatprep.subr.bf16.mxu0 0
  %306 = vmatpush2.bf16.msra.mxu0 %v254
  %307 = vmatprep.subr.bf16.mxu0 0
  %308 = vmatpush2.bf16.msra.mxu0 %v253
  %309 = vmatprep.mubr.bf16.mxu0 %v150
  %310 = vmatmul.mubr.bf16.gmra.mxu0 %v149
  %v311 = vpop.f32.mrf.mxu0
  %v312 = vadd.f32 0.0, %v311
  %v313 = vpop.f32.mrf.mxu0
  %v314 = vpop.f32.mrf.mxu0
  %v315 = vadd.f32 0.0, %v314
  %v316 = vpop.f32.mrf.mxu0
  %317 = vmatprep.mubr.bf16.mxu0 %v152
  %318 = vmatmul.mubr.bf16.gmra.mxu0 %v151
  %v319 = vpop.f32.mrf.mxu0
  %v320 = vadd.f32 0.0, %v319
  %v321 = vpop.f32.mrf.mxu0
  %v322 = vpop.f32.mrf.mxu0
  %v323 = vadd.f32 0.0, %v322
  %v324 = vpop.f32.mrf.mxu0
  %325 = vmatprep.mubr.bf16.mxu0 %v154
  %326 = vmatmul.mubr.bf16.gmra.mxu0 %v153
  %v327 = vpop.f32.mrf.mxu0
  %v328 = vadd.f32 0.0, %v327
  %v329 = vpop.f32.mrf.mxu0
  %v330 = vpop.f32.mrf.mxu0
  %v331 = vadd.f32 0.0, %v330
  %v332 = vpop.f32.mrf.mxu0
  %333 = vmatprep.mubr.bf16.mxu0 %v156
  %334 = vmatmul.mubr.bf16.gmra.mxu0 %v155
  %v335 = vpop.f32.mrf.mxu0
  %v336 = vadd.f32 0.0, %v335
  %v337 = vpop.f32.mrf.mxu0
  %v338 = vpop.f32.mrf.mxu0
  %v339 = vadd.f32 0.0, %v338
  %v340 = vpop.f32.mrf.mxu0
  %341 = vmatprep.mubr.bf16.mxu0 %v158
  %342 = vmatmul.mubr.bf16.gmra.mxu0 %v157
  %v343 = vpop.f32.mrf.mxu0
  %v344 = vadd.f32 0.0, %v343
  %v345 = vpop.f32.mrf.mxu0
  %v346 = vpop.f32.mrf.mxu0
  %v347 = vadd.f32 0.0, %v346
  %v348 = vpop.f32.mrf.mxu0
  %349 = vmatprep.mubr.bf16.mxu0 %v160
  %350 = vmatmul.mubr.bf16.gmra.mxu0 %v159
  %v351 = vpop.f32.mrf.mxu0
  %v352 = vadd.f32 0.0, %v351
  %v353 = vpop.f32.mrf.mxu0
  %v354 = vpop.f32.mrf.mxu0
  %v355 = vadd.f32 0.0, %v354
  %v356 = vpop.f32.mrf.mxu0
  %357 = vmatprep.mubr.bf16.mxu0 %v162
  %358 = vmatmul.mubr.bf16.gmra.mxu0 %v161
  %v359 = vpop.f32.mrf.mxu0
  %v360 = vadd.f32 0.0, %v359
  %v361 = vpop.f32.mrf.mxu0
  %v362 = vpop.f32.mrf.mxu0
  %v363 = vadd.f32 0.0, %v362
  %v364 = vpop.f32.mrf.mxu0
  %365 = vmatprep.mubr.bf16.mxu0 %v164
  %366 = vmatmul.mubr.bf16.gmra.mxu0 %v163
  %v367 = vpop.f32.mrf.mxu0
  %v368 = vadd.f32 0.0, %v367
  %v369 = vpop.f32.mrf.mxu0
  %v370 = vpop.f32.mrf.mxu0
  %v371 = vadd.f32 0.0, %v370
  %v372 = vpop.f32.mrf.mxu0
  %373 = vdwg.mxu0
  %v374 = vadd.f32 %v37, %v312
  %v375 = vadd.f32 %v38, %v315
  %v376 = vadd.f32 %v39, %v320
  %v377 = vadd.f32 %v40, %v323
  %v378 = vadd.f32 %v41, %v328
  %v379 = vadd.f32 %v42, %v331
  %v380 = vadd.f32 %v43, %v336
  %v381 = vadd.f32 %v44, %v339
  %v382 = vadd.f32 %v45, %v344
  %v383 = vadd.f32 %v46, %v347
  %v384 = vadd.f32 %v47, %v352
  %v385 = vadd.f32 %v48, %v355
  %v386 = vadd.f32 %v49, %v360
  %v387 = vadd.f32 %v50, %v363
  %v388 = vadd.f32 %v51, %v368
  %v389 = vadd.f32 %v52, %v371
  %390 = vst [vmem:[#allocation2] sm:$0xff] %v374
  %391 = vst [vmem:[#allocation2 + $0x8] sm:$0xff] %v375
  %392 = vst [vmem:[#allocation2 + $0x10] sm:$0xff] %v376
  %393 = vst [vmem:[#allocation2 + $0x18] sm:$0xff] %v377
  %394 = vst [vmem:[#allocation2 + $0x20] sm:$0xff] %v378
  %395 = vst [vmem:[#allocation2 + $0x28] sm:$0xff] %v379
  %396 = vst [vmem:[#allocation2 + $0x30] sm:$0xff] %v380
  %397 = vst [vmem:[#allocation2 + $0x38] sm:$0xff] %v381
  %398 = vst [vmem:[#allocation2 + $0x40] sm:$0xff] %v382
  %399 = vst [vmem:[#allocation2 + $0x48] sm:$0xff] %v383
  %400 = vst [vmem:[#allocation2 + $0x50] sm:$0xff] %v384
  %401 = vst [vmem:[#allocation2 + $0x58] sm:$0xff] %v385
  %402 = vst [vmem:[#allocation2 + $0x60] sm:$0xff] %v386
  %403 = vst [vmem:[#allocation2 + $0x68] sm:$0xff] %v387
  %404 = vst [vmem:[#allocation2 + $0x70] sm:$0xff] %v388
  %405 = vst [vmem:[#allocation2 + $0x78] sm:$0xff] %v389
  // Predicated region
  $region18: #{discriminator_forward.11} parent=0 // pred_check
    %p406 = pneg %p17
  $region19: #{discriminator_forward.11} parent=0 // pred_check_branch
    %408 = sbr.rel (%p406) target = $region21
  $region20: #{discriminator_forward.11} parent=0 // pred_region
    %v409 = vld [vmem:[#allocation2] sm:$0xff]
    %v410 = vld [vmem:[#allocation2 + $0x8] sm:$0xff]
    %v411 = vld [vmem:[#allocation2 + $0x10] sm:$0xff]
    %v412 = vld [vmem:[#allocation2 + $0x18] sm:$0xff]
    %v413 = vld [vmem:[#allocation2 + $0x20] sm:$0xff]
    %v414 = vld [vmem:[#allocation2 + $0x28] sm:$0xff]
    %v415 = vld [vmem:[#allocation2 + $0x30] sm:$0xff]
    %v416 = vld [vmem:[#allocation2 + $0x38] sm:$0xff]
    %v417 = vld [vmem:[#allocation2 + $0x40] sm:$0xff]
    %v418 = vld [vmem:[#allocation2 + $0x48] sm:$0xff]
    %v419 = vld [vmem:[#allocation2 + $0x50] sm:$0xff]
    %v420 = vld [vmem:[#allocation2 + $0x58] sm:$0xff]
    %v421 = vld [vmem:[#allocation2 + $0x60] sm:$0xff]
    %v422 = vld [vmem:[#allocation2 + $0x68] sm:$0xff]
    %v423 = vld [vmem:[#allocation2 + $0x70] sm:$0xff]
    %v424 = vld [vmem:[#allocation2 + $0x78] sm:$0xff]
    %v425 = vld [vmem:[%s2] sm:$0x1]
    %v427 = vlaneseq
    %v428 = vshrl.u32 %v427, 7
    %v429 = vsub.s32 0, %v428
    %v430 = vrot.slane %v425, %v429
    %v432 = vadd.f32 %v409, %v430
    %v433 = vadd.f32 %v410, %v430
    %v434 = vadd.f32 %v411, %v430
    %v435 = vadd.f32 %v412, %v430
    %v436 = vadd.f32 %v413, %v430
    %v437 = vadd.f32 %v414, %v430
    %v438 = vadd.f32 %v415, %v430
    %v439 = vadd.f32 %v416, %v430
    %v440 = vadd.f32 %v417, %v430
    %v441 = vadd.f32 %v418, %v430
    %v442 = vadd.f32 %v419, %v430
    %v443 = vadd.f32 %v420, %v430
    %v444 = vadd.f32 %v421, %v430
    %v445 = vadd.f32 %v422, %v430
    %v446 = vadd.f32 %v423, %v430
    %v447 = vadd.f32 %v424, %v430
    %v448 = vadd.f32 %v432, %v433
    %v449 = vadd.f32 %v448, %v434
    %v450 = vadd.f32 %v449, %v435
    %v451 = vadd.f32 %v450, %v436
    %v452 = vadd.f32 %v451, %v437
    %v453 = vadd.f32 %v452, %v438
    %v454 = vadd.f32 %v453, %v439
    %v455 = vadd.f32 %v454, %v440
    %v456 = vadd.f32 %v455, %v441
    %v457 = vadd.f32 %v456, %v442
    %v458 = vadd.f32 %v457, %v443
    %v459 = vadd.f32 %v458, %v444
    %v460 = vadd.f32 %v459, %v445
    %v461 = vadd.f32 %v460, %v446
    %v462 = vadd.f32 %v461, %v447
    %v463 = vrot.slane %v462, 4
    %v464 = vadd.f32 %v462, %v463
    %v465 = vrot.slane %v464, 2
    %v466 = vadd.f32 %v464, %v465
    %v467 = vrot.slane %v466, 1
    %v468 = vadd.f32 %v466, %v467
    %v469 = vmul.f32 %v432, %v432
    %v470 = vmul.f32 %v433, %v433
    %v471 = vmul.f32 %v434, %v434
    %v472 = vmul.f32 %v435, %v435
    %v473 = vmul.f32 %v436, %v436
    %v474 = vmul.f32 %v437, %v437
    %v475 = vmul.f32 %v438, %v438
    %v476 = vmul.f32 %v439, %v439
    %v477 = vmul.f32 %v440, %v440
    %v478 = vmul.f32 %v441, %v441
    %v479 = vmul.f32 %v442, %v442
    %v480 = vmul.f32 %v443, %v443
    %v481 = vmul.f32 %v444, %v444
    %v482 = vmul.f32 %v445, %v445
    %v483 = vmul.f32 %v446, %v446
    %v484 = vmul.f32 %v447, %v447
    %v485 = vadd.f32 %v469, %v470
    %v486 = vadd.f32 %v485, %v471
    %v487 = vadd.f32 %v486, %v472
    %v488 = vadd.f32 %v487, %v473
    %v489 = vadd.f32 %v488, %v474
    %v490 = vadd.f32 %v489, %v475
    %v491 = vadd.f32 %v490, %v476
    %v492 = vadd.f32 %v491, %v477
    %v493 = vadd.f32 %v492, %v478
    %v494 = vadd.f32 %v493, %v479
    %v495 = vadd.f32 %v494, %v480
    %v496 = vadd.f32 %v495, %v481
    %v497 = vadd.f32 %v496, %v482
    %v498 = vadd.f32 %v497, %v483
    %v499 = vadd.f32 %v498, %v484
    %v500 = vrot.slane %v499, 4
    %v501 = vadd.f32 %v499, %v500
    %v502 = vrot.slane %v501, 2
    %v503 = vadd.f32 %v501, %v502
    %v504 = vrot.slane %v503, 1
    %v505 = vadd.f32 %v503, %v504
    %vm506 = vcmask 1040384
    %v507 = vsel %vm506, %v468, %v505
    %508 = vst [vmem:[%s4] sm:$0x3] %v507
    %509 = vst [vmem:[%s3] sm:$0xff] %v432
    %510 = vst [vmem:[%s3 + $0x8] sm:$0xff] %v433
    %511 = vst [vmem:[%s3 + $0x10] sm:$0xff] %v434
    %512 = vst [vmem:[%s3 + $0x18] sm:$0xff] %v435
    %513 = vst [vmem:[%s3 + $0x20] sm:$0xff] %v436
    %514 = vst [vmem:[%s3 + $0x28] sm:$0xff] %v437
    %515 = vst [vmem:[%s3 + $0x30] sm:$0xff] %v438
    %516 = vst [vmem:[%s3 + $0x38] sm:$0xff] %v439
    %517 = vst [vmem:[%s3 + $0x40] sm:$0xff] %v440
    %518 = vst [vmem:[%s3 + $0x48] sm:$0xff] %v441
    %519 = vst [vmem:[%s3 + $0x50] sm:$0xff] %v442
    %520 = vst [vmem:[%s3 + $0x58] sm:$0xff] %v443
    %521 = vst [vmem:[%s3 + $0x60] sm:$0xff] %v444
    %522 = vst [vmem:[%s3 + $0x68] sm:$0xff] %v445
    %523 = vst [vmem:[%s3 + $0x70] sm:$0xff] %v446
    %524 = vst [vmem:[%s3 + $0x78] sm:$0xff] %v447
  $region21: #{discriminator_forward.11} parent=0 // pred_fallthru
    _
  // Predicated region
  $region22: #{discriminator_forward.11} parent=0 // pred_check
    _
  $region23: #{discriminator_forward.11} parent=0 // pred_check_branch
    %526 = sbr.rel (0) target = $region25
  $region24: #{discriminator_forward.11} parent=0 // pred_region
    _
  $region25: #{discriminator_forward.11} parent=0 // pred_fallthru
    _
  // Predicated region
  $region26: #{discriminator_forward.11} parent=0 // pred_check
    _
  $region27: #{discriminator_forward.11} parent=0 // pred_check_branch
    %528 = sbr.rel (0) target = $region29
  $region28: #{discriminator_forward.11} parent=0 // pred_region
    _
  $region29: #{discriminator_forward.11} parent=0 // pred_fallthru
    _
  // Predicated region
  $region30: #{discriminator_forward.11} parent=0 // pred_check
    _
  $region31: #{discriminator_forward.11} parent=0 // pred_check_branch
    %530 = sbr.rel (0) target = $region33
  $region32: #{discriminator_forward.11} parent=0 // pred_region
    _
  $region33: #{discriminator_forward.11} parent=0 // pred_fallthru
    _
  // Predicated region
  $region34: #{discriminator_forward.11} parent=0 // pred_check
    _
  $region35: #{discriminator_forward.11} parent=0 // pred_check_branch
    %532 = sbr.rel (0) target = $region37
  $region36: #{discriminator_forward.11} parent=0 // pred_region
    _
  $region37: #{discriminator_forward.11} parent=0 // pred_fallthru
    _

// kernel: discriminator_forward.14
$region0: #{discriminator_forward.14}
  #allocation0 [shape = 'u32[]', space=smem, size = 0x4, offset = 0x4, fixed_abs, tag = 'smem constant byte address 0x4 - core index']
  #allocation1 [shape = 'u32[144,128]{1,0:T(1,128)}', space=vmem, size = 0x12000, scoped, tag = 'internal scratch']
  %s0 = inlined_call_operand.vmem [shape: f32[32,128], index: 0, kind: input, shape index: {}]
  %s1 = inlined_call_operand.vmem [shape: f32[1,128], index: 1, kind: input, shape index: {}]
  %s2 = inlined_call_operand.vmem [shape: f32[1,128], index: 2, kind: input, shape index: {}]
  %s3 = inlined_call_operand.vmem [shape: f32[32,128], index: 3, kind: output, shape index: {}]
  %s4 = sld [smem:[#allocation0]]
  $region22: #{discriminator_forward.14} parent=0
    _
  %s6 = ssub.s32 1, %s4
  %s7 = scalar_select 0, %s6, %s4
  // Predicated region
  $region2: #{discriminator_forward.14} parent=0 // pred_check
    _
  $region3: #{discriminator_forward.14} parent=0 // pred_check_branch
    %9 = sbr.rel (0) target = $region5
  $region4: #{discriminator_forward.14} parent=0 // pred_region
    _
  $region5: #{discriminator_forward.14} parent=0 // pred_fallthru
    _
  // Predicated region
  $region6: #{discriminator_forward.14} parent=0 // pred_check
    _
  $region7: #{discriminator_forward.14} parent=0 // pred_check_branch
    %11 = sbr.rel (0) target = $region9
  $region8: #{discriminator_forward.14} parent=0 // pred_region
    _
  $region9: #{discriminator_forward.14} parent=0 // pred_fallthru
    _
  // Predicated region
  $region10: #{discriminator_forward.14} parent=0 // pred_check
    _
  $region11: #{discriminator_forward.14} parent=0 // pred_check_branch
    %13 = sbr.rel (0) target = $region13
  $region12: #{discriminator_forward.14} parent=0 // pred_region
    _
  $region13: #{discriminator_forward.14} parent=0 // pred_fallthru
    _
  %v14 = vld [vmem:[%s0] sm:$0xff]
  %v15 = vld [vmem:[%s0 + $0x8] sm:$0xff]
  %v16 = vld [vmem:[%s0 + $0x10] sm:$0xff]
  %v17 = vld [vmem:[%s0 + $0x18] sm:$0xff]
  %v18 = vld [vmem:[%s1] sm:$0x1]
  %v20 = vlaneseq
  %v21 = vshrl.u32 %v20, 7
  %v22 = vsub.s32 0, %v21
  %v23 = vrot.slane %v18, %v22
  %v25 = vmul.f32 %v14, %v23
  %v26 = vmul.f32 %v15, %v23
  %v27 = vmul.f32 %v16, %v23
  %v28 = vmul.f32 %v17, %v23
  %v29 = vld [vmem:[%s2] sm:$0x1]
  %v31 = vlaneseq
  %v32 = vshrl.u32 %v31, 7
  %v33 = vsub.s32 0, %v32
  %v34 = vrot.slane %v29, %v33
  %v36 = vadd.f32 %v25, %v34
  %v37 = vadd.f32 %v26, %v34
  %v38 = vadd.f32 %v27, %v34
  %v39 = vadd.f32 %v28, %v34
  %vm40 = vcmp.gt.f32.partialorder %v36, 0.0
  %vm41 = vcmp.gt.f32.partialorder %v37, 0.0
  %vm42 = vcmp.gt.f32.partialorder %v38, 0.0
  %vm43 = vcmp.gt.f32.partialorder %v39, 0.0
  %v44 = vmul.f32 %v36, 0.2
  %v45 = vmul.f32 %v37, 0.2
  %v46 = vmul.f32 %v38, 0.2
  %v47 = vmul.f32 %v39, 0.2
  %v48 = vsel %vm40, %v36, %v44
  %v49 = vsel %vm41, %v37, %v45
  %v50 = vsel %vm42, %v38, %v46
  %v51 = vsel %vm43, %v39, %v47
  %52 = vst [vmem:[%s3] sm:$0xff] %v48
  %53 = vst [vmem:[%s3 + $0x8] sm:$0xff] %v49
  %54 = vst [vmem:[%s3 + $0x10] sm:$0xff] %v50
  %55 = vst [vmem:[%s3 + $0x18] sm:$0xff] %v51
  // Predicated region
  $region14: #{discriminator_forward.14} parent=0 // pred_check
    _
  $region15: #{discriminator_forward.14} parent=0 // pred_check_branch
    %57 = sbr.rel (0) target = $region17
  $region16: #{discriminator_forward.14} parent=0 // pred_region
    _
  $region17: #{discriminator_forward.14} parent=0 // pred_fallthru
    _
  // Predicated region
  $region18: #{discriminator_forward.14} parent=0 // pred_check
    _
  $region19: #{discriminator_forward.14} parent=0 // pred_check_branch
    %59 = sbr.rel (0) target = $region21
  $region20: #{discriminator_forward.14} parent=0 // pred_region
    _
  $region21: #{discriminator_forward.14} parent=0 // pred_fallthru
    _

// kernel: discriminator_forward.13
$region0: #{discriminator_forward.13}
  #allocation0 [shape = 'u32[]', space=smem, size = 0x4, offset = 0x4, fixed_abs, tag = 'smem constant byte address 0x4 - core index']
  #allocation1 [shape = 'u32[144,128]{1,0:T(1,128)}', space=vmem, size = 0x12000, scoped, tag = 'internal scratch']
  #allocation2 [shape = 'f32[32,128]{1,0:T(8,128)}', space=vmem, size = 0x4000, scoped, tag = 'scratch operand']
  %s0 = inlined_call_operand.vmem [shape: bf16[32,512], index: 0, kind: input, shape index: {}]
  %s1 = inlined_call_operand.vmem [shape: bf16[512,128], index: 1, kind: input, shape index: {}]
  %s2 = inlined_call_operand.vmem [shape: f32[1,128], index: 2, kind: input, shape index: {}]
  %s3 = inlined_call_operand.vmem [shape: f32[32,128], index: 3, kind: output, shape index: {0}]
  %s4 = inlined_call_operand.vmem [shape: f32[1,2,128], index: 4, kind: output, shape index: {1}]
  %5 = xla_tuple %s3, %s4
  %s6 = sld [smem:[#allocation0]]
  $region38: #{discriminator_forward.13} parent=0
    _
  %s8 = ssub.s32 1, %s6
  %s9 = scalar_select 0, %s8, %s6
  // Predicated region
  $region2: #{discriminator_forward.13} parent=0 // pred_check
    _
  $region3: #{discriminator_forward.13} parent=0 // pred_check_branch
    %11 = sbr.rel (0) target = $region5
  $region4: #{discriminator_forward.13} parent=0 // pred_region
    _
  $region5: #{discriminator_forward.13} parent=0 // pred_fallthru
    _
  // Predicated region
  $region6: #{discriminator_forward.13} parent=0 // pred_check
    _
  $region7: #{discriminator_forward.13} parent=0 // pred_check_branch
    %13 = sbr.rel (0) target = $region9
  $region8: #{discriminator_forward.13} parent=0 // pred_region
    _
  $region9: #{discriminator_forward.13} parent=0 // pred_fallthru
    _
  // Predicated region
  $region10: #{discriminator_forward.13} parent=0 // pred_check
    _
  $region11: #{discriminator_forward.13} parent=0 // pred_check_branch
    %15 = sbr.rel (0) target = $region13
  $region12: #{discriminator_forward.13} parent=0 // pred_region
    _
  $region13: #{discriminator_forward.13} parent=0 // pred_fallthru
    _
  %p17 = scmp.eq.s32.totalorder 0, 0
  // Predicated region
  $region14: #{discriminator_forward.13} parent=0 // pred_check
    %p18 = pneg %p17
  $region15: #{discriminator_forward.13} parent=0 // pred_check_branch
    %20 = sbr.rel (%p18) target = $region17
  $region16: #{discriminator_forward.13} parent=0 // pred_region
    %21 = vst [vmem:[#allocation2] sm:$0xff] 0.0
    %22 = vst [vmem:[#allocation2 + $0x8] sm:$0xff] 0.0
    %23 = vst [vmem:[#allocation2 + $0x10] sm:$0xff] 0.0
    %24 = vst [vmem:[#allocation2 + $0x18] sm:$0xff] 0.0
  $region17: #{discriminator_forward.13} parent=0 // pred_fallthru
    _
  %v25 = vld [vmem:[#allocation2] sm:$0xff]
  %v26 = vld [vmem:[#allocation2 + $0x8] sm:$0xff]
  %v27 = vld [vmem:[#allocation2 + $0x10] sm:$0xff]
  %v28 = vld [vmem:[#allocation2 + $0x18] sm:$0xff]
  %v29 = vld [vmem:[%s0] sm:$0xff]
  %v30 = vld [vmem:[%s0 + $0x8] sm:$0xff]
  %v31 = vld [vmem:[%s0 + $0x10] sm:$0xff]
  %v32 = vld [vmem:[%s0 + $0x18] sm:$0xff]
  %v33 = vld [vmem:[%s0 + $0x20] sm:$0xff]
  %v34 = vld [vmem:[%s0 + $0x28] sm:$0xff]
  %v35 = vld [vmem:[%s0 + $0x30] sm:$0xff]
  %v36 = vld [vmem:[%s0 + $0x38] sm:$0xff]
  %v37 = vld [vmem:[%s1] sm:$0xf]
  %v38 = vld [vmem:[%s1 + $0x4] sm:$0xf]
  %v39 = vld [vmem:[%s1 + $0x8] sm:$0xf]
  %v40 = vld [vmem:[%s1 + $0xc] sm:$0xf]
  %v41 = vld [vmem:[%s1 + $0x10] sm:$0xf]
  %v42 = vld [vmem:[%s1 + $0x14] sm:$0xf]
  %v43 = vld [vmem:[%s1 + $0x18] sm:$0xf]
  %v44 = vld [vmem:[%s1 + $0x1c] sm:$0xf]
  %v45 = vld [vmem:[%s1 + $0x20] sm:$0xf]
  %v46 = vld [vmem:[%s1 + $0x24] sm:$0xf]
  %v47 = vld [vmem:[%s1 + $0x28] sm:$0xf]
  %v48 = vld [vmem:[%s1 + $0x2c] sm:$0xf]
  %v49 = vld [vmem:[%s1 + $0x30] sm:$0xf]
  %v50 = vld [vmem:[%s1 + $0x34] sm:$0xf]
  %v51 = vld [vmem:[%s1 + $0x38] sm:$0xf]
  %v52 = vld [vmem:[%s1 + $0x3c] sm:$0xf]
  %v53 = vld [vmem:[%s1 + $0x40] sm:$0xf]
  %v54 = vld [vmem:[%s1 + $0x44] sm:$0xf]
  %v55 = vld [vmem:[%s1 + $0x48] sm:$0xf]
  %v56 = vld [vmem:[%s1 + $0x4c] sm:$0xf]
  %v57 = vld [vmem:[%s1 + $0x50] sm:$0xf]
  %v58 = vld [vmem:[%s1 + $0x54] sm:$0xf]
  %v59 = vld [vmem:[%s1 + $0x58] sm:$0xf]
  %v60 = vld [vmem:[%s1 + $0x5c] sm:$0xf]
  %v61 = vld [vmem:[%s1 + $0x60] sm:$0xf]
  %v62 = vld [vmem:[%s1 + $0x64] sm:$0xf]
  %v63 = vld [vmem:[%s1 + $0x68] sm:$0xf]
  %v64 = vld [vmem:[%s1 + $0x6c] sm:$0xf]
  %v65 = vld [vmem:[%s1 + $0x70] sm:$0xf]
  %v66 = vld [vmem:[%s1 + $0x74] sm:$0xf]
  %v67 = vld [vmem:[%s1 + $0x78] sm:$0xf]
  %v68 = vld [vmem:[%s1 + $0x7c] sm:$0xf]
  %v69 = vld [vmem:[%s1 + $0x80] sm:$0xf]
  %v70 = vld [vmem:[%s1 + $0x84] sm:$0xf]
  %v71 = vld [vmem:[%s1 + $0x88] sm:$0xf]
  %v72 = vld [vmem:[%s1 + $0x8c] sm:$0xf]
  %v73 = vld [vmem:[%s1 + $0x90] sm:$0xf]
  %v74 = vld [vmem:[%s1 + $0x94] sm:$0xf]
  %v75 = vld [vmem:[%s1 + $0x98] sm:$0xf]
  %v76 = vld [vmem:[%s1 + $0x9c] sm:$0xf]
  %v77 = vld [vmem:[%s1 + $0xa0] sm:$0xf]
  %v78 = vld [vmem:[%s1 + $0xa4] sm:$0xf]
  %v79 = vld [vmem:[%s1 + $0xa8] sm:$0xf]
  %v80 = vld [vmem:[%s1 + $0xac] sm:$0xf]
  %v81 = vld [vmem:[%s1 + $0xb0] sm:$0xf]
  %v82 = vld [vmem:[%s1 + $0xb4] sm:$0xf]
  %v83 = vld [vmem:[%s1 + $0xb8] sm:$0xf]
  %v84 = vld [vmem:[%s1 + $0xbc] sm:$0xf]
  %v85 = vld [vmem:[%s1 + $0xc0] sm:$0xf]
  %v86 = vld [vmem:[%s1 + $0xc4] sm:$0xf]
  %v87 = vld [vmem:[%s1 + $0xc8] sm:$0xf]
  %v88 = vld [vmem:[%s1 + $0xcc] sm:$0xf]
  %v89 = vld [vmem:[%s1 + $0xd0] sm:$0xf]
  %v90 = vld [vmem:[%s1 + $0xd4] sm:$0xf]
  %v91 = vld [vmem:[%s1 + $0xd8] sm:$0xf]
  %v92 = vld [vmem:[%s1 + $0xdc] sm:$0xf]
  %v93 = vld [vmem:[%s1 + $0xe0] sm:$0xf]
  %v94 = vld [vmem:[%s1 + $0xe4] sm:$0xf]
  %v95 = vld [vmem:[%s1 + $0xe8] sm:$0xf]
  %v96 = vld [vmem:[%s1 + $0xec] sm:$0xf]
  %v97 = vld [vmem:[%s1 + $0xf0] sm:$0xf]
  %v98 = vld [vmem:[%s1 + $0xf4] sm:$0xf]
  %v99 = vld [vmem:[%s1 + $0xf8] sm:$0xf]
  %v100 = vld [vmem:[%s1 + $0xfc] sm:$0xf]
  %v109 = vunpack.c.l.b16 %v29
  %v110 = vunpack.c.h.b16 %v29
  %v111 = vunpack.c.l.b16 %v30
  %v112 = vunpack.c.h.b16 %v30
  %v113 = vunpack.c.l.b16 %v31
  %v114 = vunpack.c.h.b16 %v31
  %v115 = vunpack.c.l.b16 %v32
  %v116 = vunpack.c.h.b16 %v32
  %v117 = vunpack.c.l.b16 %v33
  %v118 = vunpack.c.h.b16 %v33
  %v119 = vunpack.c.l.b16 %v34
  %v120 = vunpack.c.h.b16 %v34
  %v121 = vunpack.c.l.b16 %v35
  %v122 = vunpack.c.h.b16 %v35
  %v123 = vunpack.c.l.b16 %v36
  %v124 = vunpack.c.h.b16 %v36
  %v125 = vpack.c.b16 %v113, %v109
  %v126 = vpack.c.b16 %v114, %v110
  %v127 = vpack.c.b16 %v115, %v111
  %v128 = vpack.c.b16 %v116, %v112
  %v129 = vpack.c.b16 %v121, %v117
  %v130 = vpack.c.b16 %v122, %v118
  %v131 = vpack.c.b16 %v123, %v119
  %v132 = vpack.c.b16 %v124, %v120
  %v205 = vunpack.c.l.b16 %v37
  %v206 = vunpack.c.l.b16 %v38
  %v207 = vunpack.c.l.b16 %v39
  %v208 = vunpack.c.l.b16 %v40
  %v209 = vunpack.c.l.b16 %v41
  %v210 = vunpack.c.l.b16 %v42
  %v211 = vunpack.c.l.b16 %v43
  %v212 = vunpack.c.l.b16 %v44
  %v213 = vunpack.c.l.b16 %v45
  %v214 = vunpack.c.l.b16 %v46
  %v215 = vunpack.c.l.b16 %v47
  %v216 = vunpack.c.l.b16 %v48
  %v217 = vunpack.c.l.b16 %v49
  %v218 = vunpack.c.l.b16 %v50
  %v219 = vunpack.c.l.b16 %v51
  %v220 = vunpack.c.l.b16 %v52
  %v221 = vunpack.c.l.b16 %v53
  %v222 = vunpack.c.l.b16 %v54
  %v223 = vunpack.c.l.b16 %v55
  %v224 = vunpack.c.l.b16 %v56
  %v225 = vunpack.c.l.b16 %v57
  %v226 = vunpack.c.l.b16 %v58
  %v227 = vunpack.c.l.b16 %v59
  %v228 = vunpack.c.l.b16 %v60
  %v229 = vunpack.c.l.b16 %v61
  %v230 = vunpack.c.l.b16 %v62
  %v231 = vunpack.c.l.b16 %v63
  %v232 = vunpack.c.l.b16 %v64
  %v233 = vunpack.c.l.b16 %v65
  %v234 = vunpack.c.l.b16 %v66
  %v235 = vunpack.c.l.b16 %v67
  %v236 = vunpack.c.l.b16 %v68
  %v237 = vunpack.c.l.b16 %v69
  %v238 = vunpack.c.l.b16 %v70
  %v239 = vunpack.c.l.b16 %v71
  %v240 = vunpack.c.l.b16 %v72
  %v241 = vunpack.c.l.b16 %v73
  %v242 = vunpack.c.l.b16 %v74
  %v243 = vunpack.c.l.b16 %v75
  %v244 = vunpack.c.l.b16 %v76
  %v245 = vunpack.c.l.b16 %v77
  %v246 = vunpack.c.l.b16 %v78
  %v247 = vunpack.c.l.b16 %v79
  %v248 = vunpack.c.l.b16 %v80
  %v249 = vunpack.c.l.b16 %v81
  %v250 = vunpack.c.l.b16 %v82
  %v251 = vunpack.c.l.b16 %v83
  %v252 = vunpack.c.l.b16 %v84
  %v253 = vunpack.c.l.b16 %v85
  %v254 = vunpack.c.l.b16 %v86
  %v255 = vunpack.c.l.b16 %v87
  %v256 = vunpack.c.l.b16 %v88
  %v257 = vunpack.c.l.b16 %v89
  %v258 = vunpack.c.l.b16 %v90
  %v259 = vunpack.c.l.b16 %v91
  %v260 = vunpack.c.l.b16 %v92
  %v261 = vunpack.c.l.b16 %v93
  %v262 = vunpack.c.l.b16 %v94
  %v263 = vunpack.c.l.b16 %v95
  %v264 = vunpack.c.l.b16 %v96
  %v265 = vunpack.c.l.b16 %v97
  %v266 = vunpack.c.l.b16 %v98
  %v267 = vunpack.c.l.b16 %v99
  %v268 = vunpack.c.l.b16 %v100
  %v269 = vpack.c.b16 %v206, %v205
  %v270 = vpack.c.b16 %v208, %v207
  %v271 = vpack.c.b16 %v210, %v209
  %v272 = vpack.c.b16 %v212, %v211
  %v273 = vpack.c.b16 %v214, %v213
  %v274 = vpack.c.b16 %v216, %v215
  %v275 = vpack.c.b16 %v218, %v217
  %v276 = vpack.c.b16 %v220, %v219
  %v277 = vpack.c.b16 %v222, %v221
  %v278 = vpack.c.b16 %v224, %v223
  %v279 = vpack.c.b16 %v226, %v225
  %v280 = vpack.c.b16 %v228, %v227
  %v281 = vpack.c.b16 %v230, %v229
  %v282 = vpack.c.b16 %v232, %v231
  %v283 = vpack.c.b16 %v234, %v233
  %v284 = vpack.c.b16 %v236, %v235
  %v285 = vpack.c.b16 %v238, %v237
  %v286 = vpack.c.b16 %v240, %v239
  %v287 = vpack.c.b16 %v242, %v241
  %v288 = vpack.c.b16 %v244, %v243
  %v289 = vpack.c.b16 %v246, %v245
  %v290 = vpack.c.b16 %v248, %v247
  %v291 = vpack.c.b16 %v250, %v249
  %v292 = vpack.c.b16 %v252, %v251
  %v293 = vpack.c.b16 %v254, %v253
  %v294 = vpack.c.b16 %v256, %v255
  %v295 = vpack.c.b16 %v258, %v257
  %v296 = vpack.c.b16 %v260, %v259
  %v297 = vpack.c.b16 %v262, %v261
  %v298 = vpack.c.b16 %v264, %v263
  %v299 = vpack.c.b16 %v266, %v265
  %v300 = vpack.c.b16 %v268, %v267
  %333 = vmatprep.subr.bf16.mxu0 0
  %334 = vmatpush1.bf16.msra.mxu0 %v276
  %335 = vmatprep.subr.bf16.mxu0 0
  %336 = vmatpush1.bf16.msra.mxu0 %v275
  %337 = vmatprep.subr.bf16.mxu0 0
  %338 = vmatpush1.bf16.msra.mxu0 %v274
  %339 = vmatprep.subr.bf16.mxu0 0
  %340 = vmatpush1.bf16.msra.mxu0 %v273
  %341 = vmatprep.subr.bf16.mxu0 0
  %342 = vmatpush1.bf16.msra.mxu0 %v272
  %343 = vmatprep.subr.bf16.mxu0 0
  %344 = vmatpush1.bf16.msra.mxu0 %v271
  %345 = vmatprep.subr.bf16.mxu0 0
  %346 = vmatpush1.bf16.msra.mxu0 %v270
  %347 = vmatprep.subr.bf16.mxu0 0
  %348 = vmatpush1.bf16.msra.mxu0 %v269
  %349 = vmatprep.subr.bf16.mxu0 0
  %350 = vmatpush2.bf16.msra.mxu0 %v284
  %351 = vmatprep.subr.bf16.mxu0 0
  %352 = vmatpush2.bf16.msra.mxu0 %v283
  %353 = vmatprep.subr.bf16.mxu0 0
  %354 = vmatpush2.bf16.msra.mxu0 %v282
  %355 = vmatprep.subr.bf16.mxu0 0
  %356 = vmatpush2.bf16.msra.mxu0 %v281
  %357 = vmatprep.subr.bf16.mxu0 0
  %358 = vmatpush2.bf16.msra.mxu0 %v280
  %359 = vmatprep.subr.bf16.mxu0 0
  %360 = vmatpush2.bf16.msra.mxu0 %v279
  %361 = vmatprep.subr.bf16.mxu0 0
  %362 = vmatpush2.bf16.msra.mxu0 %v278
  %363 = vmatprep.subr.bf16.mxu0 0
  %364 = vmatpush2.bf16.msra.mxu0 %v277
  %365 = vmatprep.mubr.bf16.mxu0 %v126
  %366 = vmatmul.mubr.bf16.gmra.mxu0 %v125
  %v367 = vpop.f32.mrf.mxu0
  %v368 = vadd.f32 0.0, %v367
  %v369 = vpop.f32.mrf.mxu0
  %v370 = vpop.f32.mrf.mxu0
  %v371 = vadd.f32 0.0, %v370
  %v372 = vpop.f32.mrf.mxu0
  %373 = vmatprep.mubr.bf16.mxu0 %v130
  %374 = vmatmul.mubr.bf16.gmra.mxu0 %v129
  %v375 = vpop.f32.mrf.mxu0
  %v376 = vadd.f32 0.0, %v375
  %v377 = vpop.f32.mrf.mxu0
  %v378 = vpop.f32.mrf.mxu0
  %v379 = vadd.f32 0.0, %v378
  %v380 = vpop.f32.mrf.mxu0
  %381 = vdwg.mxu0
  %382 = vmatprep.subr.bf16.mxu0 0
  %383 = vmatpush1.bf16.msra.mxu0 %v292
  %384 = vmatprep.subr.bf16.mxu0 0
  %385 = vmatpush1.bf16.msra.mxu0 %v291
  %386 = vmatprep.subr.bf16.mxu0 0
  %387 = vmatpush1.bf16.msra.mxu0 %v290
  %388 = vmatprep.subr.bf16.mxu0 0
  %389 = vmatpush1.bf16.msra.mxu0 %v289
  %390 = vmatprep.subr.bf16.mxu0 0
  %391 = vmatpush1.bf16.msra.mxu0 %v288
  %392 = vmatprep.subr.bf16.mxu0 0
  %393 = vmatpush1.bf16.msra.mxu0 %v287
  %394 = vmatprep.subr.bf16.mxu0 0
  %395 = vmatpush1.bf16.msra.mxu0 %v286
  %396 = vmatprep.subr.bf16.mxu0 0
  %397 = vmatpush1.bf16.msra.mxu0 %v285
  %398 = vmatprep.subr.bf16.mxu0 0
  %399 = vmatpush2.bf16.msra.mxu0 %v300
  %400 = vmatprep.subr.bf16.mxu0 0
  %401 = vmatpush2.bf16.msra.mxu0 %v299
  %402 = vmatprep.subr.bf16.mxu0 0
  %403 = vmatpush2.bf16.msra.mxu0 %v298
  %404 = vmatprep.subr.bf16.mxu0 0
  %405 = vmatpush2.bf16.msra.mxu0 %v297
  %406 = vmatprep.subr.bf16.mxu0 0
  %407 = vmatpush2.bf16.msra.mxu0 %v296
  %408 = vmatprep.subr.bf16.mxu0 0
  %409 = vmatpush2.bf16.msra.mxu0 %v295
  %410 = vmatprep.subr.bf16.mxu0 0
  %411 = vmatpush2.bf16.msra.mxu0 %v294
  %412 = vmatprep.subr.bf16.mxu0 0
  %413 = vmatpush2.bf16.msra.mxu0 %v293
  %414 = vmatprep.mubr.bf16.mxu0 %v128
  %415 = vmatmul.mubr.bf16.gmra.mxu0 %v127
  %v416 = vpop.f32.mrf.mxu0
  %v417 = vadd.f32 %v368, %v416
  %v418 = vpop.f32.mrf.mxu0
  %v419 = vpop.f32.mrf.mxu0
  %v420 = vadd.f32 %v371, %v419
  %v421 = vpop.f32.mrf.mxu0
  %422 = vmatprep.mubr.bf16.mxu0 %v132
  %423 = vmatmul.mubr.bf16.gmra.mxu0 %v131
  %v424 = vpop.f32.mrf.mxu0
  %v425 = vadd.f32 %v376, %v424
  %v426 = vpop.f32.mrf.mxu0
  %v427 = vpop.f32.mrf.mxu0
  %v428 = vadd.f32 %v379, %v427
  %v429 = vpop.f32.mrf.mxu0
  %430 = vdwg.mxu0
  %v431 = vadd.f32 %v25, %v417
  %v432 = vadd.f32 %v26, %v420
  %v433 = vadd.f32 %v27, %v425
  %v434 = vadd.f32 %v28, %v428
  %435 = vst [vmem:[#allocation2] sm:$0xff] %v431
  %436 = vst [vmem:[#allocation2 + $0x8] sm:$0xff] %v432
  %437 = vst [vmem:[#allocation2 + $0x10] sm:$0xff] %v433
  %438 = vst [vmem:[#allocation2 + $0x18] sm:$0xff] %v434
  // Predicated region
  $region18: #{discriminator_forward.13} parent=0 // pred_check
    %p439 = pneg %p17
  $region19: #{discriminator_forward.13} parent=0 // pred_check_branch
    %441 = sbr.rel (%p439) target = $region21
  $region20: #{discriminator_forward.13} parent=0 // pred_region
    %v442 = vld [vmem:[#allocation2] sm:$0xff]
    %v443 = vld [vmem:[#allocation2 + $0x8] sm:$0xff]
    %v444 = vld [vmem:[#allocation2 + $0x10] sm:$0xff]
    %v445 = vld [vmem:[#allocation2 + $0x18] sm:$0xff]
    %v446 = vld [vmem:[%s2] sm:$0x1]
    %v448 = vlaneseq
    %v449 = vshrl.u32 %v448, 7
    %v450 = vsub.s32 0, %v449
    %v451 = vrot.slane %v446, %v450
    %v453 = vadd.f32 %v442, %v451
    %v454 = vadd.f32 %v443, %v451
    %v455 = vadd.f32 %v444, %v451
    %v456 = vadd.f32 %v445, %v451
    %v457 = vadd.f32 %v453, %v454
    %v458 = vadd.f32 %v457, %v455
    %v459 = vadd.f32 %v458, %v456
    %v460 = vrot.slane %v459, 4
    %v461 = vadd.f32 %v459, %v460
    %v462 = vrot.slane %v461, 2
    %v463 = vadd.f32 %v461, %v462
    %v464 = vrot.slane %v463, 1
    %v465 = vadd.f32 %v463, %v464
    %v466 = vmul.f32 %v453, %v453
    %v467 = vmul.f32 %v454, %v454
    %v468 = vmul.f32 %v455, %v455
    %v469 = vmul.f32 %v456, %v456
    %v470 = vadd.f32 %v466, %v467
    %v471 = vadd.f32 %v470, %v468
    %v472 = vadd.f32 %v471, %v469
    %v473 = vrot.slane %v472, 4
    %v474 = vadd.f32 %v472, %v473
    %v475 = vrot.slane %v474, 2
    %v476 = vadd.f32 %v474, %v475
    %v477 = vrot.slane %v476, 1
    %v478 = vadd.f32 %v476, %v477
    %vm479 = vcmask 1040384
    %v480 = vsel %vm479, %v465, %v478
    %481 = vst [vmem:[%s4] sm:$0x3] %v480
    %482 = vst [vmem:[%s3] sm:$0xff] %v453
    %483 = vst [vmem:[%s3 + $0x8] sm:$0xff] %v454
    %484 = vst [vmem:[%s3 + $0x10] sm:$0xff] %v455
    %485 = vst [vmem:[%s3 + $0x18] sm:$0xff] %v456
  $region21: #{discriminator_forward.13} parent=0 // pred_fallthru
    _
  // Predicated region
  $region22: #{discriminator_forward.13} parent=0 // pred_check
    _
  $region23: #{discriminator_forward.13} parent=0 // pred_check_branch
    %487 = sbr.rel (0) target = $region25
  $region24: #{discriminator_forward.13} parent=0 // pred_region
    _
  $region25: #{discriminator_forward.13} parent=0 // pred_fallthru
    _
  // Predicated region
  $region26: #{discriminator_forward.13} parent=0 // pred_check
    _
  $region27: #{discriminator_forward.13} parent=0 // pred_check_branch
    %489 = sbr.rel (0) target = $region29
  $region28: #{discriminator_forward.13} parent=0 // pred_region
    _
  $region29: #{discriminator_forward.13} parent=0 // pred_fallthru
    _
  // Predicated region
  $region30: #{discriminator_forward.13} parent=0 // pred_check
    _
  $region31: #{discriminator_forward.13} parent=0 // pred_check_branch
    %491 = sbr.rel (0) target = $region33
  $region32: #{discriminator_forward.13} parent=0 // pred_region
    _
  $region33: #{discriminator_forward.13} parent=0 // pred_fallthru
    _
  // Predicated region
  $region34: #{discriminator_forward.13} parent=0 // pred_check
    _
  $region35: #{discriminator_forward.13} parent=0 // pred_check_branch
    %493 = sbr.rel (0) target = $region37
  $region36: #{discriminator_forward.13} parent=0 // pred_region
    _
  $region37: #{discriminator_forward.13} parent=0 // pred_fallthru
    _

// kernel: discriminator_forward.15
$region0: #{discriminator_forward.15}
  #allocation0 [shape = 'u32[]', space=smem, size = 0x4, offset = 0x4, fixed_abs, tag = 'smem constant byte address 0x4 - core index']
  #allocation1 [shape = 'u32[144,128]{1,0:T(1,128)}', space=vmem, size = 0x12000, scoped, tag = 'internal scratch']
  #allocation2 [shape = 'f32[8,128]{1,0:T(8,128)}', space=vmem, size = 0x1000, scoped, tag = 'scratch operand']
  %s0 = inlined_call_operand.vmem [shape: bf16[8,1024], index: 0, kind: input, shape index: {}]
  %s1 = inlined_call_operand.vmem [shape: bf16[1024,128], index: 1, kind: input, shape index: {}]
  %s2 = inlined_call_operand.vmem [shape: f32[1,128], index: 2, kind: input, shape index: {}]
  %s3 = inlined_call_operand.vmem [shape: f32[8,128], index: 3, kind: output, shape index: {}]
  %s4 = sld [smem:[#allocation0]]
  $region30: #{discriminator_forward.15} parent=0
    _
  %s6 = ssub.s32 1, %s4
  %s7 = scalar_select 0, %s6, %s4
  // Predicated region
  $region2: #{discriminator_forward.15} parent=0 // pred_check
    _
  $region3: #{discriminator_forward.15} parent=0 // pred_check_branch
    %9 = sbr.rel (0) target = $region5
  $region4: #{discriminator_forward.15} parent=0 // pred_region
    _
  $region5: #{discriminator_forward.15} parent=0 // pred_fallthru
    _
  // Predicated region
  $region6: #{discriminator_forward.15} parent=0 // pred_check
    _
  $region7: #{discriminator_forward.15} parent=0 // pred_check_branch
    %11 = sbr.rel (0) target = $region9
  $region8: #{discriminator_forward.15} parent=0 // pred_region
    _
  $region9: #{discriminator_forward.15} parent=0 // pred_fallthru
    _
  // Predicated region
  $region10: #{discriminator_forward.15} parent=0 // pred_check
    _
  $region11: #{discriminator_forward.15} parent=0 // pred_check_branch
    %13 = sbr.rel (0) target = $region13
  $region12: #{discriminator_forward.15} parent=0 // pred_region
    _
  $region13: #{discriminator_forward.15} parent=0 // pred_fallthru
    _
  %p15 = scmp.eq.s32.totalorder 0, 0
  // Predicated region
  $region14: #{discriminator_forward.15} parent=0 // pred_check
    %p16 = pneg %p15
  $region15: #{discriminator_forward.15} parent=0 // pred_check_branch
    %18 = sbr.rel (%p16) target = $region17
  $region16: #{discriminator_forward.15} parent=0 // pred_region
    %19 = vst [vmem:[#allocation2] sm:$0xff] 0.0
  $region17: #{discriminator_forward.15} parent=0 // pred_fallthru
    _
  %v20 = vld [vmem:[#allocation2] sm:$0xff]
  %v21 = vld [vmem:[%s0] sm:$0xff]
  %v22 = vld [vmem:[%s0 + $0x8] sm:$0xff]
  %v23 = vld [vmem:[%s0 + $0x10] sm:$0xff]
  %v24 = vld [vmem:[%s0 + $0x18] sm:$0xff]
  %v25 = vld [vmem:[%s1] sm:$0xf]
  %v26 = vld [vmem:[%s1 + $0x4] sm:$0xf]
  %v27 = vld [vmem:[%s1 + $0x8] sm:$0xf]
  %v28 = vld [vmem:[%s1 + $0xc] sm:$0xf]
  %v29 = vld [vmem:[%s1 + $0x10] sm:$0xf]
  %v30 = vld [vmem:[%s1 + $0x14] sm:$0xf]
  %v31 = vld [vmem:[%s1 + $0x18] sm:$0xf]
  %v32 = vld [vmem:[%s1 + $0x1c] sm:$0xf]
  %v33 = vld [vmem:[%s1 + $0x20] sm:$0xf]
  %v34 = vld [vmem:[%s1 + $0x24] sm:$0xf]
  %v35 = vld [vmem:[%s1 + $0x28] sm:$0xf]
  %v36 = vld [vmem:[%s1 + $0x2c] sm:$0xf]
  %v37 = vld [vmem:[%s1 + $0x30] sm:$0xf]
  %v38 = vld [vmem:[%s1 + $0x34] sm:$0xf]
  %v39 = vld [vmem:[%s1 + $0x38] sm:$0xf]
  %v40 = vld [vmem:[%s1 + $0x3c] sm:$0xf]
  %v41 = vld [vmem:[%s1 + $0x40] sm:$0xf]
  %v42 = vld [vmem:[%s1 + $0x44] sm:$0xf]
  %v43 = vld [vmem:[%s1 + $0x48] sm:$0xf]
  %v44 = vld [vmem:[%s1 + $0x4c] sm:$0xf]
  %v45 = vld [vmem:[%s1 + $0x50] sm:$0xf]
  %v46 = vld [vmem:[%s1 + $0x54] sm:$0xf]
  %v47 = vld [vmem:[%s1 + $0x58] sm:$0xf]
  %v48 = vld [vmem:[%s1 + $0x5c] sm:$0xf]
  %v49 = vld [vmem:[%s1 + $0x60] sm:$0xf]
  %v50 = vld [vmem:[%s1 + $0x64] sm:$0xf]
  %v51 = vld [vmem:[%s1 + $0x68] sm:$0xf]
  %v52 = vld [vmem:[%s1 + $0x6c] sm:$0xf]
  %v53 = vld [vmem:[%s1 + $0x70] sm:$0xf]
  %v54 = vld [vmem:[%s1 + $0x74] sm:$0xf]
  %v55 = vld [vmem:[%s1 + $0x78] sm:$0xf]
  %v56 = vld [vmem:[%s1 + $0x7c] sm:$0xf]
  %v57 = vld [vmem:[%s1 + $0x80] sm:$0xf]
  %v58 = vld [vmem:[%s1 + $0x84] sm:$0xf]
  %v59 = vld [vmem:[%s1 + $0x88] sm:$0xf]
  %v60 = vld [vmem:[%s1 + $0x8c] sm:$0xf]
  %v61 = vld [vmem:[%s1 + $0x90] sm:$0xf]
  %v62 = vld [vmem:[%s1 + $0x94] sm:$0xf]
  %v63 = vld [vmem:[%s1 + $0x98] sm:$0xf]
  %v64 = vld [vmem:[%s1 + $0x9c] sm:$0xf]
  %v65 = vld [vmem:[%s1 + $0xa0] sm:$0xf]
  %v66 = vld [vmem:[%s1 + $0xa4] sm:$0xf]
  %v67 = vld [vmem:[%s1 + $0xa8] sm:$0xf]
  %v68 = vld [vmem:[%s1 + $0xac] sm:$0xf]
  %v69 = vld [vmem:[%s1 + $0xb0] sm:$0xf]
  %v70 = vld [vmem:[%s1 + $0xb4] sm:$0xf]
  %v71 = vld [vmem:[%s1 + $0xb8] sm:$0xf]
  %v72 = vld [vmem:[%s1 + $0xbc] sm:$0xf]
  %v73 = vld [vmem:[%s1 + $0xc0] sm:$0xf]
  %v74 = vld [vmem:[%s1 + $0xc4] sm:$0xf]
  %v75 = vld [vmem:[%s1 + $0xc8] sm:$0xf]
  %v76 = vld [vmem:[%s1 + $0xcc] sm:$0xf]
  %v77 = vld [vmem:[%s1 + $0xd0] sm:$0xf]
  %v78 = vld [vmem:[%s1 + $0xd4] sm:$0xf]
  %v79 = vld [vmem:[%s1 + $0xd8] sm:$0xf]
  %v80 = vld [vmem:[%s1 + $0xdc] sm:$0xf]
  %v81 = vld [vmem:[%s1 + $0xe0] sm:$0xf]
  %v82 = vld [vmem:[%s1 + $0xe4] sm:$0xf]
  %v83 = vld [vmem:[%s1 + $0xe8] sm:$0xf]
  %v84 = vld [vmem:[%s1 + $0xec] sm:$0xf]
  %v85 = vld [vmem:[%s1 + $0xf0] sm:$0xf]
  %v86 = vld [vmem:[%s1 + $0xf4] sm:$0xf]
  %v87 = vld [vmem:[%s1 + $0xf8] sm:$0xf]
  %v88 = vld [vmem:[%s1 + $0xfc] sm:$0xf]
  %v89 = vld [vmem:[%s1 + $0x100] sm:$0xf]
  %v90 = vld [vmem:[%s1 + $0x104] sm:$0xf]
  %v91 = vld [vmem:[%s1 + $0x108] sm:$0xf]
  %v92 = vld [vmem:[%s1 + $0x10c] sm:$0xf]
  %v93 = vld [vmem:[%s1 + $0x110] sm:$0xf]
  %v94 = vld [vmem:[%s1 + $0x114] sm:$0xf]
  %v95 = vld [vmem:[%s1 + $0x118] sm:$0xf]
  %v96 = vld [vmem:[%s1 + $0x11c] sm:$0xf]
  %v97 = vld [vmem:[%s1 + $0x120] sm:$0xf]
  %v98 = vld [vmem:[%s1 + $0x124] sm:$0xf]
  %v99 = vld [vmem:[%s1 + $0x128] sm:$0xf]
  %v100 = vld [vmem:[%s1 + $0x12c] sm:$0xf]
  %v101 = vld [vmem:[%s1 + $0x130] sm:$0xf]
  %v102 = vld [vmem:[%s1 + $0x134] sm:$0xf]
  %v103 = vld [vmem:[%s1 + $0x138] sm:$0xf]
  %v104 = vld [vmem:[%s1 + $0x13c] sm:$0xf]
  %v105 = vld [vmem:[%s1 + $0x140] sm:$0xf]
  %v106 = vld [vmem:[%s1 + $0x144] sm:$0xf]
  %v107 = vld [vmem:[%s1 + $0x148] sm:$0xf]
  %v108 = vld [vmem:[%s1 + $0x14c] sm:$0xf]
  %v109 = vld [vmem:[%s1 + $0x150] sm:$0xf]
  %v110 = vld [vmem:[%s1 + $0x154] sm:$0xf]
  %v111 = vld [vmem:[%s1 + $0x158] sm:$0xf]
  %v112 = vld [vmem:[%s1 + $0x15c] sm:$0xf]
  %v113 = vld [vmem:[%s1 + $0x160] sm:$0xf]
  %v114 = vld [vmem:[%s1 + $0x164] sm:$0xf]
  %v115 = vld [vmem:[%s1 + $0x168] sm:$0xf]
  %v116 = vld [vmem:[%s1 + $0x16c] sm:$0xf]
  %v117 = vld [vmem:[%s1 + $0x170] sm:$0xf]
  %v118 = vld [vmem:[%s1 + $0x174] sm:$0xf]
  %v119 = vld [vmem:[%s1 + $0x178] sm:$0xf]
  %v120 = vld [vmem:[%s1 + $0x17c] sm:$0xf]
  %v121 = vld [vmem:[%s1 + $0x180] sm:$0xf]
  %v122 = vld [vmem:[%s1 + $0x184] sm:$0xf]
  %v123 = vld [vmem:[%s1 + $0x188] sm:$0xf]
  %v124 = vld [vmem:[%s1 + $0x18c] sm:$0xf]
  %v125 = vld [vmem:[%s1 + $0x190] sm:$0xf]
  %v126 = vld [vmem:[%s1 + $0x194] sm:$0xf]
  %v127 = vld [vmem:[%s1 + $0x198] sm:$0xf]
  %v128 = vld [vmem:[%s1 + $0x19c] sm:$0xf]
  %v129 = vld [vmem:[%s1 + $0x1a0] sm:$0xf]
  %v130 = vld [vmem:[%s1 + $0x1a4] sm:$0xf]
  %v131 = vld [vmem:[%s1 + $0x1a8] sm:$0xf]
  %v132 = vld [vmem:[%s1 + $0x1ac] sm:$0xf]
  %v133 = vld [vmem:[%s1 + $0x1b0] sm:$0xf]
  %v134 = vld [vmem:[%s1 + $0x1b4] sm:$0xf]
  %v135 = vld [vmem:[%s1 + $0x1b8] sm:$0xf]
  %v136 = vld [vmem:[%s1 + $0x1bc] sm:$0xf]
  %v137 = vld [vmem:[%s1 + $0x1c0] sm:$0xf]
  %v138 = vld [vmem:[%s1 + $0x1c4] sm:$0xf]
  %v139 = vld [vmem:[%s1 + $0x1c8] sm:$0xf]
  %v140 = vld [vmem:[%s1 + $0x1cc] sm:$0xf]
  %v141 = vld [vmem:[%s1 + $0x1d0] sm:$0xf]
  %v142 = vld [vmem:[%s1 + $0x1d4] sm:$0xf]
  %v143 = vld [vmem:[%s1 + $0x1d8] sm:$0xf]
  %v144 = vld [vmem:[%s1 + $0x1dc] sm:$0xf]
  %v145 = vld [vmem:[%s1 + $0x1e0] sm:$0xf]
  %v146 = vld [vmem:[%s1 + $0x1e4] sm:$0xf]
  %v147 = vld [vmem:[%s1 + $0x1e8] sm:$0xf]
  %v148 = vld [vmem:[%s1 + $0x1ec] sm:$0xf]
  %v149 = vld [vmem:[%s1 + $0x1f0] sm:$0xf]
  %v150 = vld [vmem:[%s1 + $0x1f4] sm:$0xf]
  %v151 = vld [vmem:[%s1 + $0x1f8] sm:$0xf]
  %v152 = vld [vmem:[%s1 + $0x1fc] sm:$0xf]
  %v157 = vunpack.c.l.b16 %v21
  %v158 = vunpack.c.h.b16 %v21
  %v159 = vunpack.c.l.b16 %v22
  %v160 = vunpack.c.h.b16 %v22
  %v161 = vunpack.c.l.b16 %v23
  %v162 = vunpack.c.h.b16 %v23
  %v163 = vunpack.c.l.b16 %v24
  %v164 = vunpack.c.h.b16 %v24
  %v165 = vpack.c.b16 %v157, %v157
  %v166 = vpack.c.b16 %v158, %v158
  %v167 = vpack.c.b16 %v159, %v159
  %v168 = vpack.c.b16 %v160, %v160
  %v169 = vpack.c.b16 %v161, %v161
  %v170 = vpack.c.b16 %v162, %v162
  %v171 = vpack.c.b16 %v163, %v163
  %v172 = vpack.c.b16 %v164, %v164
  %v309 = vunpack.c.l.b16 %v25
  %v310 = vunpack.c.l.b16 %v26
  %v311 = vunpack.c.l.b16 %v27
  %v312 = vunpack.c.l.b16 %v28
  %v313 = vunpack.c.l.b16 %v29
  %v314 = vunpack.c.l.b16 %v30
  %v315 = vunpack.c.l.b16 %v31
  %v316 = vunpack.c.l.b16 %v32
  %v317 = vunpack.c.l.b16 %v33
  %v318 = vunpack.c.l.b16 %v34
  %v319 = vunpack.c.l.b16 %v35
  %v320 = vunpack.c.l.b16 %v36
  %v321 = vunpack.c.l.b16 %v37
  %v322 = vunpack.c.l.b16 %v38
  %v323 = vunpack.c.l.b16 %v39
  %v324 = vunpack.c.l.b16 %v40
  %v325 = vunpack.c.l.b16 %v41
  %v326 = vunpack.c.l.b16 %v42
  %v327 = vunpack.c.l.b16 %v43
  %v328 = vunpack.c.l.b16 %v44
  %v329 = vunpack.c.l.b16 %v45
  %v330 = vunpack.c.l.b16 %v46
  %v331 = vunpack.c.l.b16 %v47
  %v332 = vunpack.c.l.b16 %v48
  %v333 = vunpack.c.l.b16 %v49
  %v334 = vunpack.c.l.b16 %v50
  %v335 = vunpack.c.l.b16 %v51
  %v336 = vunpack.c.l.b16 %v52
  %v337 = vunpack.c.l.b16 %v53
  %v338 = vunpack.c.l.b16 %v54
  %v339 = vunpack.c.l.b16 %v55
  %v340 = vunpack.c.l.b16 %v56
  %v341 = vunpack.c.l.b16 %v57
  %v342 = vunpack.c.l.b16 %v58
  %v343 = vunpack.c.l.b16 %v59
  %v344 = vunpack.c.l.b16 %v60
  %v345 = vunpack.c.l.b16 %v61
  %v346 = vunpack.c.l.b16 %v62
  %v347 = vunpack.c.l.b16 %v63
  %v348 = vunpack.c.l.b16 %v64
  %v349 = vunpack.c.l.b16 %v65
  %v350 = vunpack.c.l.b16 %v66
  %v351 = vunpack.c.l.b16 %v67
  %v352 = vunpack.c.l.b16 %v68
  %v353 = vunpack.c.l.b16 %v69
  %v354 = vunpack.c.l.b16 %v70
  %v355 = vunpack.c.l.b16 %v71
  %v356 = vunpack.c.l.b16 %v72
  %v357 = vunpack.c.l.b16 %v73
  %v358 = vunpack.c.l.b16 %v74
  %v359 = vunpack.c.l.b16 %v75
  %v360 = vunpack.c.l.b16 %v76
  %v361 = vunpack.c.l.b16 %v77
  %v362 = vunpack.c.l.b16 %v78
  %v363 = vunpack.c.l.b16 %v79
  %v364 = vunpack.c.l.b16 %v80
  %v365 = vunpack.c.l.b16 %v81
  %v366 = vunpack.c.l.b16 %v82
  %v367 = vunpack.c.l.b16 %v83
  %v368 = vunpack.c.l.b16 %v84
  %v369 = vunpack.c.l.b16 %v85
  %v370 = vunpack.c.l.b16 %v86
  %v371 = vunpack.c.l.b16 %v87
  %v372 = vunpack.c.l.b16 %v88
  %v373 = vunpack.c.l.b16 %v89
  %v374 = vunpack.c.l.b16 %v90
  %v375 = vunpack.c.l.b16 %v91
  %v376 = vunpack.c.l.b16 %v92
  %v377 = vunpack.c.l.b16 %v93
  %v378 = vunpack.c.l.b16 %v94
  %v379 = vunpack.c.l.b16 %v95
  %v380 = vunpack.c.l.b16 %v96
  %v381 = vunpack.c.l.b16 %v97
  %v382 = vunpack.c.l.b16 %v98
  %v383 = vunpack.c.l.b16 %v99
  %v384 = vunpack.c.l.b16 %v100
  %v385 = vunpack.c.l.b16 %v101
  %v386 = vunpack.c.l.b16 %v102
  %v387 = vunpack.c.l.b16 %v103
  %v388 = vunpack.c.l.b16 %v104
  %v389 = vunpack.c.l.b16 %v105
  %v390 = vunpack.c.l.b16 %v106
  %v391 = vunpack.c.l.b16 %v107
  %v392 = vunpack.c.l.b16 %v108
  %v393 = vunpack.c.l.b16 %v109
  %v394 = vunpack.c.l.b16 %v110
  %v395 = vunpack.c.l.b16 %v111
  %v396 = vunpack.c.l.b16 %v112
  %v397 = vunpack.c.l.b16 %v113
  %v398 = vunpack.c.l.b16 %v114
  %v399 = vunpack.c.l.b16 %v115
  %v400 = vunpack.c.l.b16 %v116
  %v401 = vunpack.c.l.b16 %v117
  %v402 = vunpack.c.l.b16 %v118
  %v403 = vunpack.c.l.b16 %v119
  %v404 = vunpack.c.l.b16 %v120
  %v405 = vunpack.c.l.b16 %v121
  %v406 = vunpack.c.l.b16 %v122
  %v407 = vunpack.c.l.b16 %v123
  %v408 = vunpack.c.l.b16 %v124
  %v409 = vunpack.c.l.b16 %v125
  %v410 = vunpack.c.l.b16 %v126
  %v411 = vunpack.c.l.b16 %v127
  %v412 = vunpack.c.l.b16 %v128
  %v413 = vunpack.c.l.b16 %v129
  %v414 = vunpack.c.l.b16 %v130
  %v415 = vunpack.c.l.b16 %v131
  %v416 = vunpack.c.l.b16 %v132
  %v417 = vunpack.c.l.b16 %v133
  %v418 = vunpack.c.l.b16 %v134
  %v419 = vunpack.c.l.b16 %v135
  %v420 = vunpack.c.l.b16 %v136
  %v421 = vunpack.c.l.b16 %v137
  %v422 = vunpack.c.l.b16 %v138
  %v423 = vunpack.c.l.b16 %v139
  %v424 = vunpack.c.l.b16 %v140
  %v425 = vunpack.c.l.b16 %v141
  %v426 = vunpack.c.l.b16 %v142
  %v427 = vunpack.c.l.b16 %v143
  %v428 = vunpack.c.l.b16 %v144
  %v429 = vunpack.c.l.b16 %v145
  %v430 = vunpack.c.l.b16 %v146
  %v431 = vunpack.c.l.b16 %v147
  %v432 = vunpack.c.l.b16 %v148
  %v433 = vunpack.c.l.b16 %v149
  %v434 = vunpack.c.l.b16 %v150
  %v435 = vunpack.c.l.b16 %v151
  %v436 = vunpack.c.l.b16 %v152
  %v437 = vpack.c.b16 %v310, %v309
  %v438 = vpack.c.b16 %v312, %v311
  %v439 = vpack.c.b16 %v314, %v313
  %v440 = vpack.c.b16 %v316, %v315
  %v441 = vpack.c.b16 %v318, %v317
  %v442 = vpack.c.b16 %v320, %v319
  %v443 = vpack.c.b16 %v322, %v321
  %v444 = vpack.c.b16 %v324, %v323
  %v445 = vpack.c.b16 %v326, %v325
  %v446 = vpack.c.b16 %v328, %v327
  %v447 = vpack.c.b16 %v330, %v329
  %v448 = vpack.c.b16 %v332, %v331
  %v449 = vpack.c.b16 %v334, %v333
  %v450 = vpack.c.b16 %v336, %v335
  %v451 = vpack.c.b16 %v338, %v337
  %v452 = vpack.c.b16 %v340, %v339
  %v453 = vpack.c.b16 %v342, %v341
  %v454 = vpack.c.b16 %v344, %v343
  %v455 = vpack.c.b16 %v346, %v345
  %v456 = vpack.c.b16 %v348, %v347
  %v457 = vpack.c.b16 %v350, %v349
  %v458 = vpack.c.b16 %v352, %v351
  %v459 = vpack.c.b16 %v354, %v353
  %v460 = vpack.c.b16 %v356, %v355
  %v461 = vpack.c.b16 %v358, %v357
  %v462 = vpack.c.b16 %v360, %v359
  %v463 = vpack.c.b16 %v362, %v361
  %v464 = vpack.c.b16 %v364, %v363
  %v465 = vpack.c.b16 %v366, %v365
  %v466 = vpack.c.b16 %v368, %v367
  %v467 = vpack.c.b16 %v370, %v369
  %v468 = vpack.c.b16 %v372, %v371
  %v469 = vpack.c.b16 %v374, %v373
  %v470 = vpack.c.b16 %v376, %v375
  %v471 = vpack.c.b16 %v378, %v377
  %v472 = vpack.c.b16 %v380, %v379
  %v473 = vpack.c.b16 %v382, %v381
  %v474 = vpack.c.b16 %v384, %v383
  %v475 = vpack.c.b16 %v386, %v385
  %v476 = vpack.c.b16 %v388, %v387
  %v477 = vpack.c.b16 %v390, %v389
  %v478 = vpack.c.b16 %v392, %v391
  %v479 = vpack.c.b16 %v394, %v393
  %v480 = vpack.c.b16 %v396, %v395
  %v481 = vpack.c.b16 %v398, %v397
  %v482 = vpack.c.b16 %v400, %v399
  %v483 = vpack.c.b16 %v402, %v401
  %v484 = vpack.c.b16 %v404, %v403
  %v485 = vpack.c.b16 %v406, %v405
  %v486 = vpack.c.b16 %v408, %v407
  %v487 = vpack.c.b16 %v410, %v409
  %v488 = vpack.c.b16 %v412, %v411
  %v489 = vpack.c.b16 %v414, %v413
  %v490 = vpack.c.b16 %v416, %v415
  %v491 = vpack.c.b16 %v418, %v417
  %v492 = vpack.c.b16 %v420, %v419
  %v493 = vpack.c.b16 %v422, %v421
  %v494 = vpack.c.b16 %v424, %v423
  %v495 = vpack.c.b16 %v426, %v425
  %v496 = vpack.c.b16 %v428, %v427
  %v497 = vpack.c.b16 %v430, %v429
  %v498 = vpack.c.b16 %v432, %v431
  %v499 = vpack.c.b16 %v434, %v433
  %v500 = vpack.c.b16 %v436, %v435
  %565 = vmatprep.subr.bf16.mxu0 0
  %566 = vmatpush1.bf16.msra.mxu0 %v444
  %567 = vmatprep.subr.bf16.mxu0 0
  %568 = vmatpush1.bf16.msra.mxu0 %v443
  %569 = vmatprep.subr.bf16.mxu0 0
  %570 = vmatpush1.bf16.msra.mxu0 %v442
  %571 = vmatprep.subr.bf16.mxu0 0
  %572 = vmatpush1.bf16.msra.mxu0 %v441
  %573 = vmatprep.subr.bf16.mxu0 0
  %574 = vmatpush1.bf16.msra.mxu0 %v440
  %575 = vmatprep.subr.bf16.mxu0 0
  %576 = vmatpush1.bf16.msra.mxu0 %v439
  %577 = vmatprep.subr.bf16.mxu0 0
  %578 = vmatpush1.bf16.msra.mxu0 %v438
  %579 = vmatprep.subr.bf16.mxu0 0
  %580 = vmatpush1.bf16.msra.mxu0 %v437
  %581 = vmatprep.subr.bf16.mxu0 0
  %582 = vmatpush2.bf16.msra.mxu0 %v452
  %583 = vmatprep.subr.bf16.mxu0 0
  %584 = vmatpush2.bf16.msra.mxu0 %v451
  %585 = vmatprep.subr.bf16.mxu0 0
  %586 = vmatpush2.bf16.msra.mxu0 %v450
  %587 = vmatprep.subr.bf16.mxu0 0
  %588 = vmatpush2.bf16.msra.mxu0 %v449
  %589 = vmatprep.subr.bf16.mxu0 0
  %590 = vmatpush2.bf16.msra.mxu0 %v448
  %591 = vmatprep.subr.bf16.mxu0 0
  %592 = vmatpush2.bf16.msra.mxu0 %v447
  %593 = vmatprep.subr.bf16.mxu0 0
  %594 = vmatpush2.bf16.msra.mxu0 %v446
  %595 = vmatprep.subr.bf16.mxu0 0
  %596 = vmatpush2.bf16.msra.mxu0 %v445
  %597 = vmatprep.mubr.bf16.mxu0 %v166
  %598 = vmatmul.mubr.bf16.gmra.mxu0 %v165
  %v599 = vpop.f32.mrf.mxu0
  %v600 = vadd.f32 0.0, %v599
  %v601 = vpop.f32.mrf.mxu0
  %v602 = vpop.f32.mrf.mxu0
  %v603 = vpop.f32.mrf.mxu0
  %604 = vdwg.mxu0
  %605 = vmatprep.subr.bf16.mxu0 0
  %606 = vmatpush1.bf16.msra.mxu0 %v460
  %607 = vmatprep.subr.bf16.mxu0 0
  %608 = vmatpush1.bf16.msra.mxu0 %v459
  %609 = vmatprep.subr.bf16.mxu0 0
  %610 = vmatpush1.bf16.msra.mxu0 %v458
  %611 = vmatprep.subr.bf16.mxu0 0
  %612 = vmatpush1.bf16.msra.mxu0 %v457
  %613 = vmatprep.subr.bf16.mxu0 0
  %614 = vmatpush1.bf16.msra.mxu0 %v456
  %615 = vmatprep.subr.bf16.mxu0 0
  %616 = vmatpush1.bf16.msra.mxu0 %v455
  %617 = vmatprep.subr.bf16.mxu0 0
  %618 = vmatpush1.bf16.msra.mxu0 %v454
  %619 = vmatprep.subr.bf16.mxu0 0
  %620 = vmatpush1.bf16.msra.mxu0 %v453
  %621 = vmatprep.subr.bf16.mxu0 0
  %622 = vmatpush2.bf16.msra.mxu0 %v468
  %623 = vmatprep.subr.bf16.mxu0 0
  %624 = vmatpush2.bf16.msra.mxu0 %v467
  %625 = vmatprep.subr.bf16.mxu0 0
  %626 = vmatpush2.bf16.msra.mxu0 %v466
  %627 = vmatprep.subr.bf16.mxu0 0
  %628 = vmatpush2.bf16.msra.mxu0 %v465
  %629 = vmatprep.subr.bf16.mxu0 0
  %630 = vmatpush2.bf16.msra.mxu0 %v464
  %631 = vmatprep.subr.bf16.mxu0 0
  %632 = vmatpush2.bf16.msra.mxu0 %v463
  %633 = vmatprep.subr.bf16.mxu0 0
  %634 = vmatpush2.bf16.msra.mxu0 %v462
  %635 = vmatprep.subr.bf16.mxu0 0
  %636 = vmatpush2.bf16.msra.mxu0 %v461
  %637 = vmatprep.mubr.bf16.mxu0 %v168
  %638 = vmatmul.mubr.bf16.gmra.mxu0 %v167
  %v639 = vpop.f32.mrf.mxu0
  %v640 = vadd.f32 %v600, %v639
  %v641 = vpop.f32.mrf.mxu0
  %v642 = vpop.f32.mrf.mxu0
  %v643 = vpop.f32.mrf.mxu0
  %644 = vdwg.mxu0
  %645 = vmatprep.subr.bf16.mxu0 0
  %646 = vmatpush1.bf16.msra.mxu0 %v476
  %647 = vmatprep.subr.bf16.mxu0 0
  %648 = vmatpush1.bf16.msra.mxu0 %v475
  %649 = vmatprep.subr.bf16.mxu0 0
  %650 = vmatpush1.bf16.msra.mxu0 %v474
  %651 = vmatprep.subr.bf16.mxu0 0
  %652 = vmatpush1.bf16.msra.mxu0 %v473
  %653 = vmatprep.subr.bf16.mxu0 0
  %654 = vmatpush1.bf16.msra.mxu0 %v472
  %655 = vmatprep.subr.bf16.mxu0 0
  %656 = vmatpush1.bf16.msra.mxu0 %v471
  %657 = vmatprep.subr.bf16.mxu0 0
  %658 = vmatpush1.bf16.msra.mxu0 %v470
  %659 = vmatprep.subr.bf16.mxu0 0
  %660 = vmatpush1.bf16.msra.mxu0 %v469
  %661 = vmatprep.subr.bf16.mxu0 0
  %662 = vmatpush2.bf16.msra.mxu0 %v484
  %663 = vmatprep.subr.bf16.mxu0 0
  %664 = vmatpush2.bf16.msra.mxu0 %v483
  %665 = vmatprep.subr.bf16.mxu0 0
  %666 = vmatpush2.bf16.msra.mxu0 %v482
  %667 = vmatprep.subr.bf16.mxu0 0
  %668 = vmatpush2.bf16.msra.mxu0 %v481
  %669 = vmatprep.subr.bf16.mxu0 0
  %670 = vmatpush2.bf16.msra.mxu0 %v480
  %671 = vmatprep.subr.bf16.mxu0 0
  %672 = vmatpush2.bf16.msra.mxu0 %v479
  %673 = vmatprep.subr.bf16.mxu0 0
  %674 = vmatpush2.bf16.msra.mxu0 %v478
  %675 = vmatprep.subr.bf16.mxu0 0
  %676 = vmatpush2.bf16.msra.mxu0 %v477
  %677 = vmatprep.mubr.bf16.mxu0 %v170
  %678 = vmatmul.mubr.bf16.gmra.mxu0 %v169
  %v679 = vpop.f32.mrf.mxu0
  %v680 = vadd.f32 %v640, %v679
  %v681 = vpop.f32.mrf.mxu0
  %v682 = vpop.f32.mrf.mxu0
  %v683 = vpop.f32.mrf.mxu0
  %684 = vdwg.mxu0
  %685 = vmatprep.subr.bf16.mxu0 0
  %686 = vmatpush1.bf16.msra.mxu0 %v492
  %687 = vmatprep.subr.bf16.mxu0 0
  %688 = vmatpush1.bf16.msra.mxu0 %v491
  %689 = vmatprep.subr.bf16.mxu0 0
  %690 = vmatpush1.bf16.msra.mxu0 %v490
  %691 = vmatprep.subr.bf16.mxu0 0
  %692 = vmatpush1.bf16.msra.mxu0 %v489
  %693 = vmatprep.subr.bf16.mxu0 0
  %694 = vmatpush1.bf16.msra.mxu0 %v488
  %695 = vmatprep.subr.bf16.mxu0 0
  %696 = vmatpush1.bf16.msra.mxu0 %v487
  %697 = vmatprep.subr.bf16.mxu0 0
  %698 = vmatpush1.bf16.msra.mxu0 %v486
  %699 = vmatprep.subr.bf16.mxu0 0
  %700 = vmatpush1.bf16.msra.mxu0 %v485
  %701 = vmatprep.subr.bf16.mxu0 0
  %702 = vmatpush2.bf16.msra.mxu0 %v500
  %703 = vmatprep.subr.bf16.mxu0 0
  %704 = vmatpush2.bf16.msra.mxu0 %v499
  %705 = vmatprep.subr.bf16.mxu0 0
  %706 = vmatpush2.bf16.msra.mxu0 %v498
  %707 = vmatprep.subr.bf16.mxu0 0
  %708 = vmatpush2.bf16.msra.mxu0 %v497
  %709 = vmatprep.subr.bf16.mxu0 0
  %710 = vmatpush2.bf16.msra.mxu0 %v496
  %711 = vmatprep.subr.bf16.mxu0 0
  %712 = vmatpush2.bf16.msra.mxu0 %v495
  %713 = vmatprep.subr.bf16.mxu0 0
  %714 = vmatpush2.bf16.msra.mxu0 %v494
  %715 = vmatprep.subr.bf16.mxu0 0
  %716 = vmatpush2.bf16.msra.mxu0 %v493
  %717 = vmatprep.mubr.bf16.mxu0 %v172
  %718 = vmatmul.mubr.bf16.gmra.mxu0 %v171
  %v719 = vpop.f32.mrf.mxu0
  %v720 = vadd.f32 %v680, %v719
  %v721 = vpop.f32.mrf.mxu0
  %v722 = vpop.f32.mrf.mxu0
  %v723 = vpop.f32.mrf.mxu0
  %724 = vdwg.mxu0
  %v725 = vadd.f32 %v20, %v720
  %726 = vst [vmem:[#allocation2] sm:$0xff] %v725
  // Predicated region
  $region18: #{discriminator_forward.15} parent=0 // pred_check
    %p727 = pneg %p15
  $region19: #{discriminator_forward.15} parent=0 // pred_check_branch
    %729 = sbr.rel (%p727) target = $region21
  $region20: #{discriminator_forward.15} parent=0 // pred_region
    %v730 = vld [vmem:[#allocation2] sm:$0xff]
    %v731 = vld [vmem:[%s2] sm:$0x1]
    %v733 = vlaneseq
    %v734 = vshrl.u32 %v733, 7
    %v735 = vsub.s32 0, %v734
    %v736 = vrot.slane %v731, %v735
    %v738 = vadd.f32 %v730, %v736
    %v739 = vsub.f32 0.0, %v738
    %v740 = vmul.f32 %v739, 1.442695
    %v741 = vpow.pop %v740
    %v742 = vadd.f32 %v741, 1.0
    %v743 = vrcp.pop %v742
    %744 = vst [vmem:[%s3] sm:$0xff] %v743
  $region21: #{discriminator_forward.15} parent=0 // pred_fallthru
    _
  // Predicated region
  $region22: #{discriminator_forward.15} parent=0 // pred_check
    _
  $region23: #{discriminator_forward.15} parent=0 // pred_check_branch
    %746 = sbr.rel (0) target = $region25
  $region24: #{discriminator_forward.15} parent=0 // pred_region
    _
  $region25: #{discriminator_forward.15} parent=0 // pred_fallthru
    _
  // Predicated region
  $region26: #{discriminator_forward.15} parent=0 // pred_check
    _
  $region27: #{discriminator_forward.15} parent=0 // pred_check_branch
    %748 = sbr.rel (0) target = $region29
  $region28: #{discriminator_forward.15} parent=0 // pred_region
    _
  $region29: #{discriminator_forward.15} parent=0 // pred_fallthru
    _

</llo_original>
